<compile_context>
chip_gen: v6e
topology: v6e:2x2x1
jax: 0.10.0
libtpu: 0.0.40
codegen_flags: <defaults>
</compile_context>

<pallas_src>
import functools
import math

import jax
import jax.numpy as jnp
from jax.experimental import pallas as pl
from jax.experimental.pallas import tpu as pltpu


CFG = dict(
    vocab_size=100,
    hidden=32,
    n_heads=2,
    n_layers=2,
    intermediate=64,
    max_position=16,
    type_vocab=2,
    n_classes=2,
)

# MXU feed dtype. float32 keeps v5e happy and matches the PyTorch reference
# most closely; set to jnp.bfloat16 on v6e/v7x for ~3x cheaper MXU passes
# (accumulation stays f32 via preferred_element_type).
MXU_DTYPE = jnp.float32


def _round_up(x, m):
    return (x + m - 1) // m * m


def _vec_entries(H, I, L):
    """Ordered (name, width) list for the bias/LayerNorm vector slab."""
    entries = [("emb_ln_g", H), ("emb_ln_b", H), ("pool_b", H), ("out_b", H)]
    for l in range(L):
        entries += [
            (f"bqkv{l}", 3 * H), (f"bo{l}", H),
            (f"ln1_g{l}", H), (f"ln1_b{l}", H),
            (f"b1{l}", I), (f"b2{l}", H),
            (f"ln2_g{l}", H), (f"ln2_b{l}", H),
        ]
    return entries


def _vec_layout(H, I, L):
    """name -> (row index in the vec slab, valid width)."""
    return {name: (row, w)
            for row, (name, w) in enumerate(_vec_entries(H, I, L))}


# ----------------------------- fused Pallas kernel --------------------------

def _make_fused_kernel(cfg, B, S, vpad, layout):
    H = cfg["hidden"]
    nH = cfg["n_heads"]
    D = H // nH
    L = cfg["n_layers"]
    I = cfg["intermediate"]
    C = cfg["n_classes"]
    T = B * S

    def layernorm(h, g, b):
        mu = jnp.mean(h, axis=-1, keepdims=True)
        var = jnp.mean((h - mu) ** 2, axis=-1, keepdims=True)
        return (h - mu) * jax.lax.rsqrt(var + 1e-12) * g + b

    def gelu(y):
        # tanh-approx GELU.
        # TODO(synk): HF BERT uses erf-GELU; tanh approx is close, not bit-exact.
        return 0.5 * y * (1.0 + jnp.tanh(0.7978845608028654 *
                                         (y + 0.044715 * y * y * y)))

    def mdot(a, b):
        return jnp.dot(a.astype(MXU_DTYPE), b.astype(MXU_DTYPE),
                       preferred_element_type=jnp.float32)

    def kernel(ids_ref, mask_ref, emb_ref, w_in_ref, w_out_ref, vec_ref,
               o_ref, x_scratch):

        def vec(name):
            row, w = layout[name]
            return vec_ref[row:row + 1, :w]          # (1, w), broadcasts

        # ---- in-kernel embedding gather (token ids are SMEM scalars) ----
        for i in range(T):                           # static unroll, T = 16
            tok = ids_ref[i]
            x_scratch[pl.ds(i, 1), :] = emb_ref[pl.ds(tok, 1), :]
        # position rows (token-type-0 embedding folded in offline), tiled.
        pos = emb_ref[vpad:vpad + S, :]                           # (S, H)
        x = x_scratch[...] + jnp.concatenate([pos] * B, axis=0)   # (T, H)
        x = layernorm(x, vec("emb_ln_g"), vec("emb_ln_b"))

        # ---- additive attention bias: built & broadcast ONCE ----
        maskf = mask_ref[...].astype(jnp.float32)                 # (B, S)
        bias = jnp.broadcast_to(
            ((1.0 - maskf) * (-10000.0)).reshape(B, 1, S), (B, S, S))

        for l in range(L):                           # static unroll (L = 2)
            wl = w_in_ref[l]                         # (H, 6H) = [Wqkv|Wo|W1]
            wqkv = wl[:, :3 * H]
            wo = wl[:, 3 * H:4 * H]
            w1 = wl[:, 4 * H:]
            w2 = w_out_ref[l * I:(l + 1) * I, :]     # (I, H)

            # fused QKV projection; softmax scale pre-folded into Q columns.
            qkv = mdot(x, wqkv) + vec(f"bqkv{l}")    # (T, 3H)

            ctx_heads = []
            for h in range(nH):                      # static unroll (nH = 2)
                qh = qkv[:, h * D:(h + 1) * D].reshape(B, S, D)
                kh = qkv[:, H + h * D:H + (h + 1) * D].reshape(B, S, D)
                vh = qkv[:, 2 * H + h * D:2 * H + (h + 1) * D].reshape(B, S, D)

                s = jnp.einsum("bqd,bkd->bqk",
                               qh.astype(MXU_DTYPE), kh.astype(MXU_DTYPE),
                               preferred_element_type=jnp.float32)
                s = s + bias
                s = s - jnp.max(s, axis=-1, keepdims=True)
                p = jnp.exp(s)
                p = p * pl.reciprocal(jnp.sum(p, axis=-1, keepdims=True),
                                      approx=True)
                ch = jnp.einsum("bqk,bkd->bqd",
                                p.astype(MXU_DTYPE), vh.astype(MXU_DTYPE),
                                preferred_element_type=jnp.float32)
                ctx_heads.append(ch.reshape(T, D))

            # all heads hit Wo with ONE matmul (contraction depth H).
            ctx = jnp.concatenate(ctx_heads, axis=-1)             # (T, H)
            attn = mdot(ctx, wo) + vec(f"bo{l}")
            x = layernorm(x + attn, vec(f"ln1_g{l}"), vec(f"ln1_b{l}"))

            # ---- feed-forward ----
            hmid = gelu(mdot(x, w1) + vec(f"b1{l}"))
            ffn = mdot(hmid, w2) + vec(f"b2{l}")
            x = layernorm(x + ffn, vec(f"ln2_g{l}"), vec(f"ln2_b{l}"))

        # ---- BERT pooler on the [CLS] rows (row b*S of x) ----
        cls = jnp.concatenate([x[b * S:b * S + 1, :] for b in range(B)],
                              axis=0)                             # (B, H)
        pool_w = w_out_ref[L * I:L * I + H, :]                    # (H, H)
        out_w = w_out_ref[L * I + H:L * I + 2 * H, :]             # (H, H) zero-padded cols
        pooled = jnp.tanh(mdot(cls, pool_w) + vec("pool_b"))

        # Dropout(0.5): identity in eval mode.
        # TODO(synk): training-mode stochastic dropout not applied.
        logits = mdot(pooled, out_w) + vec("out_b")               # (B, H) padded
        o_ref[...] = logits[:, :C]

    return kernel


# ----------------------------- parameters -----------------------------------

def init_params(key, cfg):
    H = cfg["hidden"]
    I = cfg["intermediate"]
    L = cfg["n_layers"]
    C = cfg["n_classes"]

    def nrm(k, shape):
        return (0.02 * jax.random.normal(k, shape)).astype(jnp.float32)

    keys = iter(jax.random.split(key, 16))
    return {
        "word_emb": nrm(next(keys), (cfg["vocab_size"], H)),
        "pos_emb": nrm(next(keys), (cfg["max_position"], H)),
        "type_emb": nrm(next(keys), (cfg["type_vocab"], H)),
        "emb_ln_g": jnp.ones((H,), jnp.float32),
        "emb_ln_b": jnp.zeros((H,), jnp.float32),
        "wqkv": nrm(next(keys), (L, H, 3 * H)),
        "bqkv": jnp.zeros((L, 3 * H), jnp.float32),
        "wo": nrm(next(keys), (L, H, H)),
        "bo": jnp.zeros((L, H), jnp.float32),
        "ln1_g": jnp.ones((L, H), jnp.float32),
        "ln1_b": jnp.zeros((L, H), jnp.float32),
        "w1": nrm(next(keys), (L, H, I)),
        "b1": jnp.zeros((L, I), jnp.float32),
        "w2": nrm(next(keys), (L, I, H)),
        "b2": jnp.zeros((L, H), jnp.float32),
        "ln2_g": jnp.ones((L, H), jnp.float32),
        "ln2_b": jnp.zeros((L, H), jnp.float32),
        "pool_w": nrm(next(keys), (H, H)),
        "pool_b": jnp.zeros((H,), jnp.float32),
        "out_w": nrm(next(keys), (H, C)),
        "out_b": jnp.zeros((C,), jnp.float32),
    }


def pack_params(raw, cfg):
    """Offline constant transforms: slab packing, scale folding, type folding."""
    H = cfg["hidden"]
    I = cfg["intermediate"]
    L = cfg["n_layers"]
    C = cfg["n_classes"]
    nH = cfg["n_heads"]
    D = H // nH
    V = cfg["vocab_size"]
    vpad = _round_up(V, 8)
    scale = 1.0 / math.sqrt(D)

    # --- embedding slab: [word table padded to 8 rows ; pos (+type-0 folded)]
    word = jnp.concatenate(
        [raw["word_emb"], jnp.zeros((vpad - V, H), jnp.float32)], axis=0)
    pos = raw["pos_emb"] + raw["type_emb"][0:1, :]
    emb = jnp.concatenate([word, pos], axis=0)                 # (vpad+P, H)

    # --- input-side weights: per layer [Wqkv (Q cols scale-folded) | Wo | W1]
    wqkv = jnp.concatenate(
        [raw["wqkv"][:, :, :H] * scale, raw["wqkv"][:, :, H:]], axis=-1)
    w_in = jnp.concatenate([wqkv, raw["wo"], raw["w1"]], axis=-1)  # (L, H, 6H)

    # --- output-side weights: [W2 per layer ; pooler W ; head W zero-padded]
    out_w_pad = jnp.concatenate(
        [raw["out_w"], jnp.zeros((H, H - C), jnp.float32)], axis=-1)
    w_out = jnp.concatenate(
        [raw["w2"].reshape(L * I, H), raw["pool_w"], out_w_pad], axis=0)

    # --- vector slab: one row per bias / LN vector, padded to width 3H ---
    bqkv = jnp.concatenate(
        [raw["bqkv"][:, :H] * scale, raw["bqkv"][:, H:]], axis=-1)
    pieces = {
        "emb_ln_g": raw["emb_ln_g"],
        "emb_ln_b": raw["emb_ln_b"],
        "pool_b": raw["pool_b"],
        "out_b": jnp.concatenate(
            [raw["out_b"], jnp.zeros((H - C,), jnp.float32)]),
    }
    for l in range(L):
        pieces[f"bqkv{l}"] = bqkv[l]
        pieces[f"bo{l}"] = raw["bo"][l]
        pieces[f"ln1_g{l}"] = raw["ln1_g"][l]
        pieces[f"ln1_b{l}"] = raw["ln1_b"][l]
        pieces[f"b1{l}"] = raw["b1"][l]
        pieces[f"b2{l}"] = raw["b2"][l]
        pieces[f"ln2_g{l}"] = raw["ln2_g"][l]
        pieces[f"ln2_b{l}"] = raw["ln2_b"][l]
    width = 3 * H
    rows = [jnp.pad(pieces[name], (0, width - w))
            for name, w in _vec_entries(H, I, L)]
    vec = jnp.stack(rows, axis=0)                              # (20, 3H)

    return {"emb": emb, "w_in": w_in, "w_out": w_out, "vec": vec}


# ----------------------------- forward ---------------------------------------

def tweet_classifier_forward(packed, input_ids, attention_mask, cfg):
    """Mirrors: _, pooled = bert(ids, mask); out(drop(pooled))."""
    B, S = input_ids.shape
    H = cfg["hidden"]
    nH = cfg["n_heads"]
    D = H // nH
    L = cfg["n_layers"]
    I = cfg["intermediate"]
    C = cfg["n_classes"]
    T = B * S
    vpad = _round_up(cfg["vocab_size"], 8)
    layout = _vec_layout(H, I, L)

    kernel = _make_fused_kernel(cfg, B, S, vpad, layout)

    # Advisory cost estimate (helps XLA schedule around the single fused call).
    per_layer = (2 * T * H * 3 * H            # QKV projection
                 + 2 * B * nH * S * S * D * 2  # scores + PV
                 + 2 * T * H * H               # output projection
                 + 2 * T * H * I * 2)          # FFN
    flops = L * per_layer + 2 * B * H * H + 2 * B * H * C
    transcendentals = L * (B * nH * S * S + T * I) + B * H
    bytes_accessed = 4 * (T + B * S + packed["emb"].size + packed["w_in"].size
                          + packed["w_out"].size + packed["vec"].size + B * C)

    vmem_spec = pl.BlockSpec(memory_space=pltpu.MemorySpace.VMEM)
    logits = pl.pallas_call(
        kernel,
        out_shape=jax.ShapeDtypeStruct((B, C), jnp.float32),
        in_specs=[
            pl.BlockSpec(memory_space=pltpu.MemorySpace.SMEM),   # token ids
            vmem_spec,                                           # attention mask
            vmem_spec,                                           # embedding slab
            vmem_spec,                                           # [Wqkv|Wo|W1] slab
            vmem_spec,                                           # [W2;pool;head] slab
            vmem_spec,                                           # bias/LN slab
        ],
        out_specs=vmem_spec,
        scratch_shapes=[pltpu.VMEM((T, H), jnp.float32)],        # gathered embeddings
        compiler_params=pltpu.CompilerParams(vmem_limit_bytes=4 * 1024 * 1024),
        cost_estimate=pl.CostEstimate(flops=flops,
                                      transcendentals=transcendentals,
                                      bytes_accessed=bytes_accessed),
    )(input_ids.reshape(-1).astype(jnp.int32),
      attention_mask.astype(jnp.int32),
      packed["emb"], packed["w_in"], packed["w_out"], packed["vec"])
    return logits


# ----------------------------- driver ----------------------------------------

if __name__ == "__main__":
    key = jax.random.PRNGKey(0)
    k_param, k_ids = jax.random.split(key)

    raw_params = init_params(k_param, CFG)
    packed = pack_params(raw_params, CFG)

    B, S = 2, 8
    input_ids = jax.random.randint(k_ids, (B, S), 0, CFG["vocab_size"],
                                   dtype=jnp.int32)
    attention_mask = jnp.array(
        [[1, 1, 1, 1, 1, 1, 1, 1],
         [1, 1, 1, 1, 1, 0, 0, 0]], dtype=jnp.int32)

    fwd = functools.partial(tweet_classifier_forward, cfg=CFG)
    logits = jax.jit(lambda p, ids, m: fwd(p, ids, m))(packed, input_ids,
                                                       attention_mask)
    logits = jax.block_until_ready(logits)

    assert logits.shape == (B, CFG["n_classes"])
    assert bool(jnp.all(jnp.isfinite(logits)))
    print("KERNEL_OK")
</pallas_src>

<mosaic_0001>
module attributes {stable_mosaic.version = 11 : i64} {
  func.func @kernel(%arg0: memref<16xi32, #tpu.memory_space<smem>>, %arg1: memref<2x8xi32, #tpu.memory_space<vmem>>, %arg2: memref<120x32xf32, #tpu.memory_space<vmem>>, %arg3: memref<2x32x192xf32, #tpu.memory_space<vmem>>, %arg4: memref<192x32xf32, #tpu.memory_space<vmem>>, %arg5: memref<20x96xf32, #tpu.memory_space<vmem>>, %arg6: memref<2x2xf32, #tpu.memory_space<vmem>>, %arg7: memref<16x32xf32, #tpu.memory_space<vmem>>) attributes {dimension_semantics = [], scalar_prefetch = 0 : i64, scratch_operands = 1 : i64, tpu.core_type = #tpu.core_type<tc>} {
    %c0 = arith.constant 0 : index
    %0 = memref.load %arg0[%c0] : memref<16xi32, #tpu.memory_space<smem>>
    %1 = arith.index_cast %0 : i32 to index
    %c0_0 = arith.constant 0 : index
    %2 = vector.load %arg2[%1, %c0_0] : memref<120x32xf32, #tpu.memory_space<vmem>>, vector<1x32xf32>
    %c0_1 = arith.constant 0 : index
    %c0_2 = arith.constant 0 : index
    %3 = vector.load %arg7[%c0_1, %c0_2] : memref<16x32xf32, #tpu.memory_space<vmem>>, vector<1x32xf32>
    tpu.vector_store %arg7[%c0_1, %c0_2], %2 {strides = array<i32>} : memref<16x32xf32, #tpu.memory_space<vmem>>, vector<1x32xf32>,
    %c1 = arith.constant 1 : index
    %4 = memref.load %arg0[%c1] : memref<16xi32, #tpu.memory_space<smem>>
    %5 = arith.index_cast %4 : i32 to index
    %c0_3 = arith.constant 0 : index
    %6 = vector.load %arg2[%5, %c0_3] : memref<120x32xf32, #tpu.memory_space<vmem>>, vector<1x32xf32>
    %c1_4 = arith.constant 1 : index
    %c0_5 = arith.constant 0 : index
    %7 = vector.load %arg7[%c1_4, %c0_5] : memref<16x32xf32, #tpu.memory_space<vmem>>, vector<1x32xf32>
    tpu.vector_store %arg7[%c1_4, %c0_5], %6 {strides = array<i32>} : memref<16x32xf32, #tpu.memory_space<vmem>>, vector<1x32xf32>,
    %c2 = arith.constant 2 : index
    %8 = memref.load %arg0[%c2] : memref<16xi32, #tpu.memory_space<smem>>
    %9 = arith.index_cast %8 : i32 to index
    %c0_6 = arith.constant 0 : index
    %10 = vector.load %arg2[%9, %c0_6] : memref<120x32xf32, #tpu.memory_space<vmem>>, vector<1x32xf32>
    %c2_7 = arith.constant 2 : index
    %c0_8 = arith.constant 0 : index
    %11 = vector.load %arg7[%c2_7, %c0_8] : memref<16x32xf32, #tpu.memory_space<vmem>>, vector<1x32xf32>
    tpu.vector_store %arg7[%c2_7, %c0_8], %10 {strides = array<i32>} : memref<16x32xf32, #tpu.memory_space<vmem>>, vector<1x32xf32>,
    %c3 = arith.constant 3 : index
    %12 = memref.load %arg0[%c3] : memref<16xi32, #tpu.memory_space<smem>>
    %13 = arith.index_cast %12 : i32 to index
    %c0_9 = arith.constant 0 : index
    %14 = vector.load %arg2[%13, %c0_9] : memref<120x32xf32, #tpu.memory_space<vmem>>, vector<1x32xf32>
    %c3_10 = arith.constant 3 : index
    %c0_11 = arith.constant 0 : index
    %15 = vector.load %arg7[%c3_10, %c0_11] : memref<16x32xf32, #tpu.memory_space<vmem>>, vector<1x32xf32>
    tpu.vector_store %arg7[%c3_10, %c0_11], %14 {strides = array<i32>} : memref<16x32xf32, #tpu.memory_space<vmem>>, vector<1x32xf32>,
    %c4 = arith.constant 4 : index
    %16 = memref.load %arg0[%c4] : memref<16xi32, #tpu.memory_space<smem>>
    %17 = arith.index_cast %16 : i32 to index
    %c0_12 = arith.constant 0 : index
    %18 = vector.load %arg2[%17, %c0_12] : memref<120x32xf32, #tpu.memory_space<vmem>>, vector<1x32xf32>
    %c4_13 = arith.constant 4 : index
    %c0_14 = arith.constant 0 : index
    %19 = vector.load %arg7[%c4_13, %c0_14] : memref<16x32xf32, #tpu.memory_space<vmem>>, vector<1x32xf32>
    tpu.vector_store %arg7[%c4_13, %c0_14], %18 {strides = array<i32>} : memref<16x32xf32, #tpu.memory_space<vmem>>, vector<1x32xf32>,
    %c5 = arith.constant 5 : index
    %20 = memref.load %arg0[%c5] : memref<16xi32, #tpu.memory_space<smem>>
    %21 = arith.index_cast %20 : i32 to index
    %c0_15 = arith.constant 0 : index
    %22 = vector.load %arg2[%21, %c0_15] : memref<120x32xf32, #tpu.memory_space<vmem>>, vector<1x32xf32>
    %c5_16 = arith.constant 5 : index
    %c0_17 = arith.constant 0 : index
    %23 = vector.load %arg7[%c5_16, %c0_17] : memref<16x32xf32, #tpu.memory_space<vmem>>, vector<1x32xf32>
    tpu.vector_store %arg7[%c5_16, %c0_17], %22 {strides = array<i32>} : memref<16x32xf32, #tpu.memory_space<vmem>>, vector<1x32xf32>,
    %c6 = arith.constant 6 : index
    %24 = memref.load %arg0[%c6] : memref<16xi32, #tpu.memory_space<smem>>
    %25 = arith.index_cast %24 : i32 to index
    %c0_18 = arith.constant 0 : index
    %26 = vector.load %arg2[%25, %c0_18] : memref<120x32xf32, #tpu.memory_space<vmem>>, vector<1x32xf32>
    %c6_19 = arith.constant 6 : index
    %c0_20 = arith.constant 0 : index
    %27 = vector.load %arg7[%c6_19, %c0_20] : memref<16x32xf32, #tpu.memory_space<vmem>>, vector<1x32xf32>
    tpu.vector_store %arg7[%c6_19, %c0_20], %26 {strides = array<i32>} : memref<16x32xf32, #tpu.memory_space<vmem>>, vector<1x32xf32>,
    %c7 = arith.constant 7 : index
    %28 = memref.load %arg0[%c7] : memref<16xi32, #tpu.memory_space<smem>>
    %29 = arith.index_cast %28 : i32 to index
    %c0_21 = arith.constant 0 : index
    %30 = vector.load %arg2[%29, %c0_21] : memref<120x32xf32, #tpu.memory_space<vmem>>, vector<1x32xf32>
    %c7_22 = arith.constant 7 : index
    %c0_23 = arith.constant 0 : index
    %31 = vector.load %arg7[%c7_22, %c0_23] : memref<16x32xf32, #tpu.memory_space<vmem>>, vector<1x32xf32>
    tpu.vector_store %arg7[%c7_22, %c0_23], %30 {strides = array<i32>} : memref<16x32xf32, #tpu.memory_space<vmem>>, vector<1x32xf32>,
    %c8 = arith.constant 8 : index
    %32 = memref.load %arg0[%c8] : memref<16xi32, #tpu.memory_space<smem>>
    %33 = arith.index_cast %32 : i32 to index
    %c0_24 = arith.constant 0 : index
    %34 = vector.load %arg2[%33, %c0_24] : memref<120x32xf32, #tpu.memory_space<vmem>>, vector<1x32xf32>
    %c8_25 = arith.constant 8 : index
    %c0_26 = arith.constant 0 : index
    %35 = vector.load %arg7[%c8_25, %c0_26] : memref<16x32xf32, #tpu.memory_space<vmem>>, vector<1x32xf32>
    tpu.vector_store %arg7[%c8_25, %c0_26], %34 {strides = array<i32>} : memref<16x32xf32, #tpu.memory_space<vmem>>, vector<1x32xf32>,
    %c9 = arith.constant 9 : index
    %36 = memref.load %arg0[%c9] : memref<16xi32, #tpu.memory_space<smem>>
    %37 = arith.index_cast %36 : i32 to index
    %c0_27 = arith.constant 0 : index
    %38 = vector.load %arg2[%37, %c0_27] : memref<120x32xf32, #tpu.memory_space<vmem>>, vector<1x32xf32>
    %c9_28 = arith.constant 9 : index
    %c0_29 = arith.constant 0 : index
    %39 = vector.load %arg7[%c9_28, %c0_29] : memref<16x32xf32, #tpu.memory_space<vmem>>, vector<1x32xf32>
    tpu.vector_store %arg7[%c9_28, %c0_29], %38 {strides = array<i32>} : memref<16x32xf32, #tpu.memory_space<vmem>>, vector<1x32xf32>,
    %c10 = arith.constant 10 : index
    %40 = memref.load %arg0[%c10] : memref<16xi32, #tpu.memory_space<smem>>
    %41 = arith.index_cast %40 : i32 to index
    %c0_30 = arith.constant 0 : index
    %42 = vector.load %arg2[%41, %c0_30] : memref<120x32xf32, #tpu.memory_space<vmem>>, vector<1x32xf32>
    %c10_31 = arith.constant 10 : index
    %c0_32 = arith.constant 0 : index
    %43 = vector.load %arg7[%c10_31, %c0_32] : memref<16x32xf32, #tpu.memory_space<vmem>>, vector<1x32xf32>
    tpu.vector_store %arg7[%c10_31, %c0_32], %42 {strides = array<i32>} : memref<16x32xf32, #tpu.memory_space<vmem>>, vector<1x32xf32>,
    %c11 = arith.constant 11 : index
    %44 = memref.load %arg0[%c11] : memref<16xi32, #tpu.memory_space<smem>>
    %45 = arith.index_cast %44 : i32 to index
    %c0_33 = arith.constant 0 : index
    %46 = vector.load %arg2[%45, %c0_33] : memref<120x32xf32, #tpu.memory_space<vmem>>, vector<1x32xf32>
    %c11_34 = arith.constant 11 : index
    %c0_35 = arith.constant 0 : index
    %47 = vector.load %arg7[%c11_34, %c0_35] : memref<16x32xf32, #tpu.memory_space<vmem>>, vector<1x32xf32>
    tpu.vector_store %arg7[%c11_34, %c0_35], %46 {strides = array<i32>} : memref<16x32xf32, #tpu.memory_space<vmem>>, vector<1x32xf32>,
    %c12 = arith.constant 12 : index
    %48 = memref.load %arg0[%c12] : memref<16xi32, #tpu.memory_space<smem>>
    %49 = arith.index_cast %48 : i32 to index
    %c0_36 = arith.constant 0 : index
    %50 = vector.load %arg2[%49, %c0_36] : memref<120x32xf32, #tpu.memory_space<vmem>>, vector<1x32xf32>
    %c12_37 = arith.constant 12 : index
    %c0_38 = arith.constant 0 : index
    %51 = vector.load %arg7[%c12_37, %c0_38] : memref<16x32xf32, #tpu.memory_space<vmem>>, vector<1x32xf32>
    tpu.vector_store %arg7[%c12_37, %c0_38], %50 {strides = array<i32>} : memref<16x32xf32, #tpu.memory_space<vmem>>, vector<1x32xf32>,
    %c13 = arith.constant 13 : index
    %52 = memref.load %arg0[%c13] : memref<16xi32, #tpu.memory_space<smem>>
    %53 = arith.index_cast %52 : i32 to index
    %c0_39 = arith.constant 0 : index
    %54 = vector.load %arg2[%53, %c0_39] : memref<120x32xf32, #tpu.memory_space<vmem>>, vector<1x32xf32>
    %c13_40 = arith.constant 13 : index
    %c0_41 = arith.constant 0 : index
    %55 = vector.load %arg7[%c13_40, %c0_41] : memref<16x32xf32, #tpu.memory_space<vmem>>, vector<1x32xf32>
    tpu.vector_store %arg7[%c13_40, %c0_41], %54 {strides = array<i32>} : memref<16x32xf32, #tpu.memory_space<vmem>>, vector<1x32xf32>,
    %c14 = arith.constant 14 : index
    %56 = memref.load %arg0[%c14] : memref<16xi32, #tpu.memory_space<smem>>
    %57 = arith.index_cast %56 : i32 to index
    %c0_42 = arith.constant 0 : index
    %58 = vector.load %arg2[%57, %c0_42] : memref<120x32xf32, #tpu.memory_space<vmem>>, vector<1x32xf32>
    %c14_43 = arith.constant 14 : index
    %c0_44 = arith.constant 0 : index
    %59 = vector.load %arg7[%c14_43, %c0_44] : memref<16x32xf32, #tpu.memory_space<vmem>>, vector<1x32xf32>
    tpu.vector_store %arg7[%c14_43, %c0_44], %58 {strides = array<i32>} : memref<16x32xf32, #tpu.memory_space<vmem>>, vector<1x32xf32>,
    %c15 = arith.constant 15 : index
    %60 = memref.load %arg0[%c15] : memref<16xi32, #tpu.memory_space<smem>>
    %61 = arith.index_cast %60 : i32 to index
    %c0_45 = arith.constant 0 : index
    %62 = vector.load %arg2[%61, %c0_45] : memref<120x32xf32, #tpu.memory_space<vmem>>, vector<1x32xf32>
    %c15_46 = arith.constant 15 : index
    %c0_47 = arith.constant 0 : index
    %63 = vector.load %arg7[%c15_46, %c0_47] : memref<16x32xf32, #tpu.memory_space<vmem>>, vector<1x32xf32>
    tpu.vector_store %arg7[%c15_46, %c0_47], %62 {strides = array<i32>} : memref<16x32xf32, #tpu.memory_space<vmem>>, vector<1x32xf32>,
    %c104 = arith.constant 104 : index
    %c0_48 = arith.constant 0 : index
    %64 = vector.load %arg2[%c104, %c0_48] : memref<120x32xf32, #tpu.memory_space<vmem>>, vector<8x32xf32>
    %c0_49 = arith.constant 0 : index
    %c0_50 = arith.constant 0 : index
    %65 = vector.load %arg7[%c0_49, %c0_50] : memref<16x32xf32, #tpu.memory_space<vmem>>, vector<16x32xf32>
    %66 = tpu.concatenate %64, %64 in 0 : vector<8x32xf32>, vector<8x32xf32> -> vector<16x32xf32>
    %67 = arith.addf %65, %66 : vector<16x32xf32>
    %c0_51 = arith.constant 0 : index
    %c0_52 = arith.constant 0 : index
    %68 = vector.load %arg5[%c0_51, %c0_52] : memref<20x96xf32, #tpu.memory_space<vmem>>, vector<1x32xf32>
    %c1_53 = arith.constant 1 : index
    %c0_54 = arith.constant 0 : index
    %69 = vector.load %arg5[%c1_53, %c0_54] : memref<20x96xf32, #tpu.memory_space<vmem>>, vector<1x32xf32>
    %cst = arith.constant dense<0.000000e+00> : vector<16xf32>
    %70 = vector.multi_reduction <add>, %67, %cst [1] : vector<16x32xf32> to vector<16xf32>
    %71 = vector.shape_cast %70 : vector<16xf32> to vector<16x1xf32>
    %cst_55 = arith.constant 3.200000e+01 : f32
    %72 = vector.broadcast %cst_55 : f32 to vector<16x1xf32>
    %73 = arith.divf %71, %72 : vector<16x1xf32>
    %74 = vector.broadcast %73 : vector<16x1xf32> to vector<16x32xf32>
    %75 = arith.subf %67, %74 : vector<16x32xf32>
    %76 = arith.mulf %75, %75 : vector<16x32xf32>
    %cst_56 = arith.constant dense<0.000000e+00> : vector<16xf32>
    %77 = vector.multi_reduction <add>, %76, %cst_56 [1] : vector<16x32xf32> to vector<16xf32>
    %78 = vector.shape_cast %77 : vector<16xf32> to vector<16x1xf32>
    %cst_57 = arith.constant 3.200000e+01 : f32
    %79 = vector.broadcast %cst_57 : f32 to vector<16x1xf32>
    %80 = arith.divf %78, %79 : vector<16x1xf32>
    %81 = vector.broadcast %73 : vector<16x1xf32> to vector<16x32xf32>
    %82 = arith.subf %67, %81 : vector<16x32xf32>
    %cst_58 = arith.constant 9.99999996E-13 : f32
    %83 = vector.broadcast %cst_58 : f32 to vector<16x1xf32>
    %84 = arith.addf %80, %83 : vector<16x1xf32>
    %85 = math.rsqrt %84 : vector<16x1xf32>
    %86 = vector.broadcast %85 : vector<16x1xf32> to vector<16x32xf32>
    %87 = arith.mulf %82, %86 : vector<16x32xf32>
    %88 = vector.broadcast %68 : vector<1x32xf32> to vector<16x32xf32>
    %89 = arith.mulf %87, %88 : vector<16x32xf32>
    %90 = vector.broadcast %69 : vector<1x32xf32> to vector<16x32xf32>
    %91 = arith.addf %89, %90 : vector<16x32xf32>
    %c0_59 = arith.constant 0 : index
    %c0_60 = arith.constant 0 : index
    %92 = vector.load %arg1[%c0_59, %c0_60] : memref<2x8xi32, #tpu.memory_space<vmem>>, vector<2x8xi32>
    %93 = arith.sitofp %92 : vector<2x8xi32> to vector<2x8xf32>
    %cst_61 = arith.constant 1.000000e+00 : f32
    %94 = vector.broadcast %cst_61 : f32 to vector<2x8xf32>
    %95 = arith.subf %94, %93 : vector<2x8xf32>
    %cst_62 = arith.constant -1.000000e+04 : f32
    %96 = vector.broadcast %cst_62 : f32 to vector<2x8xf32>
    %97 = arith.mulf %95, %96 : vector<2x8xf32>
    %98 = vector.shape_cast %97 : vector<2x8xf32> to vector<2x1x8xf32>
    %99 = vector.shape_cast %98 : vector<2x1x8xf32> to vector<2x1x8xf32>
    %100 = vector.broadcast %99 : vector<2x1x8xf32> to vector<2x8x8xf32>
    %c0_63 = arith.constant 0 : index
    %c0_64 = arith.constant 0 : index
    %c0_65 = arith.constant 0 : index
    %101 = vector.load %arg3[%c0_63, %c0_64, %c0_65] : memref<2x32x192xf32, #tpu.memory_space<vmem>>, vector<1x32x192xf32>
    %102 = vector.shape_cast %101 : vector<1x32x192xf32> to vector<32x192xf32>
    %103 = vector.extract_strided_slice %102 {offsets = [0, 0], sizes = [32, 96], strides = [1, 1]} : vector<32x192xf32> to vector<32x96xf32>
    %104 = vector.extract_strided_slice %102 {offsets = [0, 96], sizes = [32, 32], strides = [1, 1]} : vector<32x192xf32> to vector<32x32xf32>
    %105 = vector.extract_strided_slice %102 {offsets = [0, 128], sizes = [32, 64], strides = [1, 1]} : vector<32x192xf32> to vector<32x64xf32>
    %c0_66 = arith.constant 0 : index
    %c0_67 = arith.constant 0 : index
    %106 = vector.load %arg4[%c0_66, %c0_67] : memref<192x32xf32, #tpu.memory_space<vmem>>, vector<64x32xf32>
    %cst_68 = arith.constant dense<0.000000e+00> : vector<16x96xf32>
    %107 = tpu.matmul %91, %103, %cst_68 {dimension_numbers = #tpu.dot_dimension_numbers<[1], [0], [0], [1], [0, 0, 1, 1], [], []>} : vector<16x32xf32>, vector<32x96xf32>, vector<16x96xf32> -> vector<16x96xf32>
    %c4_69 = arith.constant 4 : index
    %c0_70 = arith.constant 0 : index
    %108 = vector.load %arg5[%c4_69, %c0_70] : memref<20x96xf32, #tpu.memory_space<vmem>>, vector<1x96xf32>
    %109 = vector.broadcast %108 : vector<1x96xf32> to vector<16x96xf32>
    %110 = arith.addf %107, %109 : vector<16x96xf32>
    %111 = vector.extract_strided_slice %110 {offsets = [0, 0], sizes = [16, 16], strides = [1, 1]} : vector<16x96xf32> to vector<16x16xf32>
    %112 = vector.shape_cast %111 : vector<16x16xf32> to vector<2x8x16xf32>
    %113 = vector.extract_strided_slice %110 {offsets = [0, 32], sizes = [16, 16], strides = [1, 1]} : vector<16x96xf32> to vector<16x16xf32>
    %114 = vector.shape_cast %113 : vector<16x16xf32> to vector<2x8x16xf32>
    %115 = vector.extract_strided_slice %110 {offsets = [0, 64], sizes = [16, 16], strides = [1, 1]} : vector<16x96xf32> to vector<16x16xf32>
    %116 = vector.shape_cast %115 : vector<16x16xf32> to vector<2x8x16xf32>
    "tpu.trace_start"() <{level = 10 : i32, message = "bqd,bkd->bqk"}> : () -> ()
    %cst_71 = arith.constant dense<0.000000e+00> : vector<2x8x8xf32>
    %117 = tpu.matmul %112, %114, %cst_71 {dimension_numbers = #tpu.dot_dimension_numbers<[2], [2], [1], [1], [0, 0, 0, 1, 1, 1], [0], [0]>} : vector<2x8x16xf32>, vector<2x8x16xf32>, vector<2x8x8xf32> -> vector<2x8x8xf32>
    "tpu.trace_stop"() : () -> ()
    %118 = arith.addf %117, %100 : vector<2x8x8xf32>
    %cst_72 = arith.constant dense<0xFF800000> : vector<2x8xf32>
    %119 = vector.multi_reduction <maximumf>, %118, %cst_72 [2] : vector<2x8x8xf32> to vector<2x8xf32>
    %120 = vector.shape_cast %119 : vector<2x8xf32> to vector<2x8x1xf32>
    %121 = vector.broadcast %120 : vector<2x8x1xf32> to vector<2x8x8xf32>
    %122 = arith.subf %118, %121 : vector<2x8x8xf32>
    %123 = math.exp %122 : vector<2x8x8xf32>
    %cst_73 = arith.constant dense<0.000000e+00> : vector<2x8xf32>
    %124 = vector.multi_reduction <add>, %123, %cst_73 [2] : vector<2x8x8xf32> to vector<2x8xf32>
    %125 = vector.shape_cast %124 : vector<2x8xf32> to vector<2x8x1xf32>
    %126 = tpu.reciprocal %125 {approx = true} : vector<2x8x1xf32> -> vector<2x8x1xf32>
    %127 = vector.broadcast %126 : vector<2x8x1xf32> to vector<2x8x8xf32>
    %128 = arith.mulf %123, %127 : vector<2x8x8xf32>
    "tpu.trace_start"() <{level = 10 : i32, message = "bqk,bkd->bqd"}> : () -> ()
    %cst_74 = arith.constant dense<0.000000e+00> : vector<2x8x16xf32>
    %129 = tpu.matmul %128, %116, %cst_74 {dimension_numbers = #tpu.dot_dimension_numbers<[2], [1], [1], [2], [0, 0, 0, 1, 1, 2], [0], [0]>} : vector<2x8x8xf32>, vector<2x8x16xf32>, vector<2x8x16xf32> -> vector<2x8x16xf32>
    "tpu.trace_stop"() : () -> ()
    %130 = vector.shape_cast %129 : vector<2x8x16xf32> to vector<16x16xf32>
    %131 = vector.extract_strided_slice %110 {offsets = [0, 16], sizes = [16, 16], strides = [1, 1]} : vector<16x96xf32> to vector<16x16xf32>
    %132 = vector.shape_cast %131 : vector<16x16xf32> to vector<2x8x16xf32>
    %133 = vector.extract_strided_slice %110 {offsets = [0, 48], sizes = [16, 16], strides = [1, 1]} : vector<16x96xf32> to vector<16x16xf32>
    %134 = vector.shape_cast %133 : vector<16x16xf32> to vector<2x8x16xf32>
    %135 = vector.extract_strided_slice %110 {offsets = [0, 80], sizes = [16, 16], strides = [1, 1]} : vector<16x96xf32> to vector<16x16xf32>
    %136 = vector.shape_cast %135 : vector<16x16xf32> to vector<2x8x16xf32>
    "tpu.trace_start"() <{level = 10 : i32, message = "bqd,bkd->bqk"}> : () -> ()
    %cst_75 = arith.constant dense<0.000000e+00> : vector<2x8x8xf32>
    %137 = tpu.matmul %132, %134, %cst_75 {dimension_numbers = #tpu.dot_dimension_numbers<[2], [2], [1], [1], [0, 0, 0, 1, 1, 1], [0], [0]>} : vector<2x8x16xf32>, vector<2x8x16xf32>, vector<2x8x8xf32> -> vector<2x8x8xf32>
    "tpu.trace_stop"() : () -> ()
    %138 = arith.addf %137, %100 : vector<2x8x8xf32>
    %cst_76 = arith.constant dense<0xFF800000> : vector<2x8xf32>
    %139 = vector.multi_reduction <maximumf>, %138, %cst_76 [2] : vector<2x8x8xf32> to vector<2x8xf32>
    %140 = vector.shape_cast %139 : vector<2x8xf32> to vector<2x8x1xf32>
    %141 = vector.broadcast %140 : vector<2x8x1xf32> to vector<2x8x8xf32>
    %142 = arith.subf %138, %141 : vector<2x8x8xf32>
    %143 = math.exp %142 : vector<2x8x8xf32>
    %cst_77 = arith.constant dense<0.000000e+00> : vector<2x8xf32>
    %144 = vector.multi_reduction <add>, %143, %cst_77 [2] : vector<2x8x8xf32> to vector<2x8xf32>
    %145 = vector.shape_cast %144 : vector<2x8xf32> to vector<2x8x1xf32>
    %146 = tpu.reciprocal %145 {approx = true} : vector<2x8x1xf32> -> vector<2x8x1xf32>
    %147 = vector.broadcast %146 : vector<2x8x1xf32> to vector<2x8x8xf32>
    %148 = arith.mulf %143, %147 : vector<2x8x8xf32>
    "tpu.trace_start"() <{level = 10 : i32, message = "bqk,bkd->bqd"}> : () -> ()
    %cst_78 = arith.constant dense<0.000000e+00> : vector<2x8x16xf32>
    %149 = tpu.matmul %148, %136, %cst_78 {dimension_numbers = #tpu.dot_dimension_numbers<[2], [1], [1], [2], [0, 0, 0, 1, 1, 2], [0], [0]>} : vector<2x8x8xf32>, vector<2x8x16xf32>, vector<2x8x16xf32> -> vector<2x8x16xf32>
    "tpu.trace_stop"() : () -> ()
    %150 = vector.shape_cast %149 : vector<2x8x16xf32> to vector<16x16xf32>
    %151 = tpu.concatenate %130, %150 in 1 : vector<16x16xf32>, vector<16x16xf32> -> vector<16x32xf32>
    %cst_79 = arith.constant dense<0.000000e+00> : vector<16x32xf32>
    %152 = tpu.matmul %151, %104, %cst_79 {dimension_numbers = #tpu.dot_dimension_numbers<[1], [0], [0], [1], [0, 0, 1, 1], [], []>} : vector<16x32xf32>, vector<32x32xf32>, vector<16x32xf32> -> vector<16x32xf32>
    %c5_80 = arith.constant 5 : index
    %c0_81 = arith.constant 0 : index
    %153 = vector.load %arg5[%c5_80, %c0_81] : memref<20x96xf32, #tpu.memory_space<vmem>>, vector<1x32xf32>
    %154 = vector.broadcast %153 : vector<1x32xf32> to vector<16x32xf32>
    %155 = arith.addf %152, %154 : vector<16x32xf32>
    %156 = arith.addf %91, %155 : vector<16x32xf32>
    %c6_82 = arith.constant 6 : index
    %c0_83 = arith.constant 0 : index
    %157 = vector.load %arg5[%c6_82, %c0_83] : memref<20x96xf32, #tpu.memory_space<vmem>>, vector<1x32xf32>
    %c7_84 = arith.constant 7 : index
    %c0_85 = arith.constant 0 : index
    %158 = vector.load %arg5[%c7_84, %c0_85] : memref<20x96xf32, #tpu.memory_space<vmem>>, vector<1x32xf32>
    %cst_86 = arith.constant dense<0.000000e+00> : vector<16xf32>
    %159 = vector.multi_reduction <add>, %156, %cst_86 [1] : vector<16x32xf32> to vector<16xf32>
    %160 = vector.shape_cast %159 : vector<16xf32> to vector<16x1xf32>
    %cst_87 = arith.constant 3.200000e+01 : f32
    %161 = vector.broadcast %cst_87 : f32 to vector<16x1xf32>
    %162 = arith.divf %160, %161 : vector<16x1xf32>
    %163 = vector.broadcast %162 : vector<16x1xf32> to vector<16x32xf32>
    %164 = arith.subf %156, %163 : vector<16x32xf32>
    %165 = arith.mulf %164, %164 : vector<16x32xf32>
    %cst_88 = arith.constant dense<0.000000e+00> : vector<16xf32>
    %166 = vector.multi_reduction <add>, %165, %cst_88 [1] : vector<16x32xf32> to vector<16xf32>
    %167 = vector.shape_cast %166 : vector<16xf32> to vector<16x1xf32>
    %cst_89 = arith.constant 3.200000e+01 : f32
    %168 = vector.broadcast %cst_89 : f32 to vector<16x1xf32>
    %169 = arith.divf %167, %168 : vector<16x1xf32>
    %170 = vector.broadcast %162 : vector<16x1xf32> to vector<16x32xf32>
    %171 = arith.subf %156, %170 : vector<16x32xf32>
    %cst_90 = arith.constant 9.99999996E-13 : f32
    %172 = vector.broadcast %cst_90 : f32 to vector<16x1xf32>
    %173 = arith.addf %169, %172 : vector<16x1xf32>
    %174 = math.rsqrt %173 : vector<16x1xf32>
    %175 = vector.broadcast %174 : vector<16x1xf32> to vector<16x32xf32>
    %176 = arith.mulf %171, %175 : vector<16x32xf32>
    %177 = vector.broadcast %157 : vector<1x32xf32> to vector<16x32xf32>
    %178 = arith.mulf %176, %177 : vector<16x32xf32>
    %179 = vector.broadcast %158 : vector<1x32xf32> to vector<16x32xf32>
    %180 = arith.addf %178, %179 : vector<16x32xf32>
    %cst_91 = arith.constant dense<0.000000e+00> : vector<16x64xf32>
    %181 = tpu.matmul %180, %105, %cst_91 {dimension_numbers = #tpu.dot_dimension_numbers<[1], [0], [0], [1], [0, 0, 1, 1], [], []>} : vector<16x32xf32>, vector<32x64xf32>, vector<16x64xf32> -> vector<16x64xf32>
    %c8_92 = arith.constant 8 : index
    %c0_93 = arith.constant 0 : index
    %182 = vector.load %arg5[%c8_92, %c0_93] : memref<20x96xf32, #tpu.memory_space<vmem>>, vector<1x64xf32>
    %183 = vector.broadcast %182 : vector<1x64xf32> to vector<16x64xf32>
    %184 = arith.addf %181, %183 : vector<16x64xf32>
    %cst_94 = arith.constant 5.000000e-01 : f32
    %185 = vector.broadcast %cst_94 : f32 to vector<16x64xf32>
    %186 = arith.mulf %185, %184 : vector<16x64xf32>
    %cst_95 = arith.constant 4.471500e-02 : f32
    %187 = vector.broadcast %cst_95 : f32 to vector<16x64xf32>
    %188 = arith.mulf %187, %184 : vector<16x64xf32>
    %189 = arith.mulf %188, %184 : vector<16x64xf32>
    %190 = arith.mulf %189, %184 : vector<16x64xf32>
    %191 = arith.addf %184, %190 : vector<16x64xf32>
    %cst_96 = arith.constant 0.797884583 : f32
    %192 = vector.broadcast %cst_96 : f32 to vector<16x64xf32>
    %193 = arith.mulf %192, %191 : vector<16x64xf32>
    %194 = math.tanh %193 : vector<16x64xf32>
    %cst_97 = arith.constant 1.000000e+00 : f32
    %195 = vector.broadcast %cst_97 : f32 to vector<16x64xf32>
    %196 = arith.addf %195, %194 : vector<16x64xf32>
    %197 = arith.mulf %186, %196 : vector<16x64xf32>
    %cst_98 = arith.constant dense<0.000000e+00> : vector<16x32xf32>
    %198 = tpu.matmul %197, %106, %cst_98 {dimension_numbers = #tpu.dot_dimension_numbers<[1], [0], [0], [1], [0, 0, 1, 1], [], []>} : vector<16x64xf32>, vector<64x32xf32>, vector<16x32xf32> -> vector<16x32xf32>
    %c9_99 = arith.constant 9 : index
    %c0_100 = arith.constant 0 : index
    %199 = vector.load %arg5[%c9_99, %c0_100] : memref<20x96xf32, #tpu.memory_space<vmem>>, vector<1x32xf32>
    %200 = vector.broadcast %199 : vector<1x32xf32> to vector<16x32xf32>
    %201 = arith.addf %198, %200 : vector<16x32xf32>
    %202 = arith.addf %180, %201 : vector<16x32xf32>
    %c10_101 = arith.constant 10 : index
    %c0_102 = arith.constant 0 : index
    %203 = vector.load %arg5[%c10_101, %c0_102] : memref<20x96xf32, #tpu.memory_space<vmem>>, vector<1x32xf32>
    %c11_103 = arith.constant 11 : index
    %c0_104 = arith.constant 0 : index
    %204 = vector.load %arg5[%c11_103, %c0_104] : memref<20x96xf32, #tpu.memory_space<vmem>>, vector<1x32xf32>
    %cst_105 = arith.constant dense<0.000000e+00> : vector<16xf32>
    %205 = vector.multi_reduction <add>, %202, %cst_105 [1] : vector<16x32xf32> to vector<16xf32>
    %206 = vector.shape_cast %205 : vector<16xf32> to vector<16x1xf32>
    %cst_106 = arith.constant 3.200000e+01 : f32
    %207 = vector.broadcast %cst_106 : f32 to vector<16x1xf32>
    %208 = arith.divf %206, %207 : vector<16x1xf32>
    %209 = vector.broadcast %208 : vector<16x1xf32> to vector<16x32xf32>
    %210 = arith.subf %202, %209 : vector<16x32xf32>
    %211 = arith.mulf %210, %210 : vector<16x32xf32>
    %cst_107 = arith.constant dense<0.000000e+00> : vector<16xf32>
    %212 = vector.multi_reduction <add>, %211, %cst_107 [1] : vector<16x32xf32> to vector<16xf32>
    %213 = vector.shape_cast %212 : vector<16xf32> to vector<16x1xf32>
    %cst_108 = arith.constant 3.200000e+01 : f32
    %214 = vector.broadcast %cst_108 : f32 to vector<16x1xf32>
    %215 = arith.divf %213, %214 : vector<16x1xf32>
    %216 = vector.broadcast %208 : vector<16x1xf32> to vector<16x32xf32>
    %217 = arith.subf %202, %216 : vector<16x32xf32>
    %cst_109 = arith.constant 9.99999996E-13 : f32
    %218 = vector.broadcast %cst_109 : f32 to vector<16x1xf32>
    %219 = arith.addf %215, %218 : vector<16x1xf32>
    %220 = math.rsqrt %219 : vector<16x1xf32>
    %221 = vector.broadcast %220 : vector<16x1xf32> to vector<16x32xf32>
    %222 = arith.mulf %217, %221 : vector<16x32xf32>
    %223 = vector.broadcast %203 : vector<1x32xf32> to vector<16x32xf32>
    %224 = arith.mulf %222, %223 : vector<16x32xf32>
    %225 = vector.broadcast %204 : vector<1x32xf32> to vector<16x32xf32>
    %226 = arith.addf %224, %225 : vector<16x32xf32>
    %c1_110 = arith.constant 1 : index
    %c0_111 = arith.constant 0 : index
    %c0_112 = arith.constant 0 : index
    %227 = vector.load %arg3[%c1_110, %c0_111, %c0_112] : memref<2x32x192xf32, #tpu.memory_space<vmem>>, vector<1x32x192xf32>
    %228 = vector.shape_cast %227 : vector<1x32x192xf32> to vector<32x192xf32>
    %229 = vector.extract_strided_slice %228 {offsets = [0, 0], sizes = [32, 96], strides = [1, 1]} : vector<32x192xf32> to vector<32x96xf32>
    %230 = vector.extract_strided_slice %228 {offsets = [0, 96], sizes = [32, 32], strides = [1, 1]} : vector<32x192xf32> to vector<32x32xf32>
    %231 = vector.extract_strided_slice %228 {offsets = [0, 128], sizes = [32, 64], strides = [1, 1]} : vector<32x192xf32> to vector<32x64xf32>
    %c64 = arith.constant 64 : index
    %c0_113 = arith.constant 0 : index
    %232 = vector.load %arg4[%c64, %c0_113] : memref<192x32xf32, #tpu.memory_space<vmem>>, vector<64x32xf32>
    %cst_114 = arith.constant dense<0.000000e+00> : vector<16x96xf32>
    %233 = tpu.matmul %226, %229, %cst_114 {dimension_numbers = #tpu.dot_dimension_numbers<[1], [0], [0], [1], [0, 0, 1, 1], [], []>} : vector<16x32xf32>, vector<32x96xf32>, vector<16x96xf32> -> vector<16x96xf32>
    %c12_115 = arith.constant 12 : index
    %c0_116 = arith.constant 0 : index
    %234 = vector.load %arg5[%c12_115, %c0_116] : memref<20x96xf32, #tpu.memory_space<vmem>>, vector<1x96xf32>
    %235 = vector.broadcast %234 : vector<1x96xf32> to vector<16x96xf32>
    %236 = arith.addf %233, %235 : vector<16x96xf32>
    %237 = vector.extract_strided_slice %236 {offsets = [0, 0], sizes = [16, 16], strides = [1, 1]} : vector<16x96xf32> to vector<16x16xf32>
    %238 = vector.shape_cast %237 : vector<16x16xf32> to vector<2x8x16xf32>
    %239 = vector.extract_strided_slice %236 {offsets = [0, 32], sizes = [16, 16], strides = [1, 1]} : vector<16x96xf32> to vector<16x16xf32>
    %240 = vector.shape_cast %239 : vector<16x16xf32> to vector<2x8x16xf32>
    %241 = vector.extract_strided_slice %236 {offsets = [0, 64], sizes = [16, 16], strides = [1, 1]} : vector<16x96xf32> to vector<16x16xf32>
    %242 = vector.shape_cast %241 : vector<16x16xf32> to vector<2x8x16xf32>
    "tpu.trace_start"() <{level = 10 : i32, message = "bqd,bkd->bqk"}> : () -> ()
    %cst_117 = arith.constant dense<0.000000e+00> : vector<2x8x8xf32>
    %243 = tpu.matmul %238, %240, %cst_117 {dimension_numbers = #tpu.dot_dimension_numbers<[2], [2], [1], [1], [0, 0, 0, 1, 1, 1], [0], [0]>} : vector<2x8x16xf32>, vector<2x8x16xf32>, vector<2x8x8xf32> -> vector<2x8x8xf32>
    "tpu.trace_stop"() : () -> ()
    %244 = arith.addf %243, %100 : vector<2x8x8xf32>
    %cst_118 = arith.constant dense<0xFF800000> : vector<2x8xf32>
    %245 = vector.multi_reduction <maximumf>, %244, %cst_118 [2] : vector<2x8x8xf32> to vector<2x8xf32>
    %246 = vector.shape_cast %245 : vector<2x8xf32> to vector<2x8x1xf32>
    %247 = vector.broadcast %246 : vector<2x8x1xf32> to vector<2x8x8xf32>
    %248 = arith.subf %244, %247 : vector<2x8x8xf32>
    %249 = math.exp %248 : vector<2x8x8xf32>
    %cst_119 = arith.constant dense<0.000000e+00> : vector<2x8xf32>
    %250 = vector.multi_reduction <add>, %249, %cst_119 [2] : vector<2x8x8xf32> to vector<2x8xf32>
    %251 = vector.shape_cast %250 : vector<2x8xf32> to vector<2x8x1xf32>
    %252 = tpu.reciprocal %251 {approx = true} : vector<2x8x1xf32> -> vector<2x8x1xf32>
    %253 = vector.broadcast %252 : vector<2x8x1xf32> to vector<2x8x8xf32>
    %254 = arith.mulf %249, %253 : vector<2x8x8xf32>
    "tpu.trace_start"() <{level = 10 : i32, message = "bqk,bkd->bqd"}> : () -> ()
    %cst_120 = arith.constant dense<0.000000e+00> : vector<2x8x16xf32>
    %255 = tpu.matmul %254, %242, %cst_120 {dimension_numbers = #tpu.dot_dimension_numbers<[2], [1], [1], [2], [0, 0, 0, 1, 1, 2], [0], [0]>} : vector<2x8x8xf32>, vector<2x8x16xf32>, vector<2x8x16xf32> -> vector<2x8x16xf32>
    "tpu.trace_stop"() : () -> ()
    %256 = vector.shape_cast %255 : vector<2x8x16xf32> to vector<16x16xf32>
    %257 = vector.extract_strided_slice %236 {offsets = [0, 16], sizes = [16, 16], strides = [1, 1]} : vector<16x96xf32> to vector<16x16xf32>
    %258 = vector.shape_cast %257 : vector<16x16xf32> to vector<2x8x16xf32>
    %259 = vector.extract_strided_slice %236 {offsets = [0, 48], sizes = [16, 16], strides = [1, 1]} : vector<16x96xf32> to vector<16x16xf32>
    %260 = vector.shape_cast %259 : vector<16x16xf32> to vector<2x8x16xf32>
    %261 = vector.extract_strided_slice %236 {offsets = [0, 80], sizes = [16, 16], strides = [1, 1]} : vector<16x96xf32> to vector<16x16xf32>
    %262 = vector.shape_cast %261 : vector<16x16xf32> to vector<2x8x16xf32>
    "tpu.trace_start"() <{level = 10 : i32, message = "bqd,bkd->bqk"}> : () -> ()
    %cst_121 = arith.constant dense<0.000000e+00> : vector<2x8x8xf32>
    %263 = tpu.matmul %258, %260, %cst_121 {dimension_numbers = #tpu.dot_dimension_numbers<[2], [2], [1], [1], [0, 0, 0, 1, 1, 1], [0], [0]>} : vector<2x8x16xf32>, vector<2x8x16xf32>, vector<2x8x8xf32> -> vector<2x8x8xf32>
    "tpu.trace_stop"() : () -> ()
    %264 = arith.addf %263, %100 : vector<2x8x8xf32>
    %cst_122 = arith.constant dense<0xFF800000> : vector<2x8xf32>
    %265 = vector.multi_reduction <maximumf>, %264, %cst_122 [2] : vector<2x8x8xf32> to vector<2x8xf32>
    %266 = vector.shape_cast %265 : vector<2x8xf32> to vector<2x8x1xf32>
    %267 = vector.broadcast %266 : vector<2x8x1xf32> to vector<2x8x8xf32>
    %268 = arith.subf %264, %267 : vector<2x8x8xf32>
    %269 = math.exp %268 : vector<2x8x8xf32>
    %cst_123 = arith.constant dense<0.000000e+00> : vector<2x8xf32>
    %270 = vector.multi_reduction <add>, %269, %cst_123 [2] : vector<2x8x8xf32> to vector<2x8xf32>
    %271 = vector.shape_cast %270 : vector<2x8xf32> to vector<2x8x1xf32>
    %272 = tpu.reciprocal %271 {approx = true} : vector<2x8x1xf32> -> vector<2x8x1xf32>
    %273 = vector.broadcast %272 : vector<2x8x1xf32> to vector<2x8x8xf32>
    %274 = arith.mulf %269, %273 : vector<2x8x8xf32>
    "tpu.trace_start"() <{level = 10 : i32, message = "bqk,bkd->bqd"}> : () -> ()
    %cst_124 = arith.constant dense<0.000000e+00> : vector<2x8x16xf32>
    %275 = tpu.matmul %274, %262, %cst_124 {dimension_numbers = #tpu.dot_dimension_numbers<[2], [1], [1], [2], [0, 0, 0, 1, 1, 2], [0], [0]>} : vector<2x8x8xf32>, vector<2x8x16xf32>, vector<2x8x16xf32> -> vector<2x8x16xf32>
    "tpu.trace_stop"() : () -> ()
    %276 = vector.shape_cast %275 : vector<2x8x16xf32> to vector<16x16xf32>
    %277 = tpu.concatenate %256, %276 in 1 : vector<16x16xf32>, vector<16x16xf32> -> vector<16x32xf32>
    %cst_125 = arith.constant dense<0.000000e+00> : vector<16x32xf32>
    %278 = tpu.matmul %277, %230, %cst_125 {dimension_numbers = #tpu.dot_dimension_numbers<[1], [0], [0], [1], [0, 0, 1, 1], [], []>} : vector<16x32xf32>, vector<32x32xf32>, vector<16x32xf32> -> vector<16x32xf32>
    %c13_126 = arith.constant 13 : index
    %c0_127 = arith.constant 0 : index
    %279 = vector.load %arg5[%c13_126, %c0_127] : memref<20x96xf32, #tpu.memory_space<vmem>>, vector<1x32xf32>
    %280 = vector.broadcast %279 : vector<1x32xf32> to vector<16x32xf32>
    %281 = arith.addf %278, %280 : vector<16x32xf32>
    %282 = arith.addf %226, %281 : vector<16x32xf32>
    %c14_128 = arith.constant 14 : index
    %c0_129 = arith.constant 0 : index
    %283 = vector.load %arg5[%c14_128, %c0_129] : memref<20x96xf32, #tpu.memory_space<vmem>>, vector<1x32xf32>
    %c15_130 = arith.constant 15 : index
    %c0_131 = arith.constant 0 : index
    %284 = vector.load %arg5[%c15_130, %c0_131] : memref<20x96xf32, #tpu.memory_space<vmem>>, vector<1x32xf32>
    %cst_132 = arith.constant dense<0.000000e+00> : vector<16xf32>
    %285 = vector.multi_reduction <add>, %282, %cst_132 [1] : vector<16x32xf32> to vector<16xf32>
    %286 = vector.shape_cast %285 : vector<16xf32> to vector<16x1xf32>
    %cst_133 = arith.constant 3.200000e+01 : f32
    %287 = vector.broadcast %cst_133 : f32 to vector<16x1xf32>
    %288 = arith.divf %286, %287 : vector<16x1xf32>
    %289 = vector.broadcast %288 : vector<16x1xf32> to vector<16x32xf32>
    %290 = arith.subf %282, %289 : vector<16x32xf32>
    %291 = arith.mulf %290, %290 : vector<16x32xf32>
    %cst_134 = arith.constant dense<0.000000e+00> : vector<16xf32>
    %292 = vector.multi_reduction <add>, %291, %cst_134 [1] : vector<16x32xf32> to vector<16xf32>
    %293 = vector.shape_cast %292 : vector<16xf32> to vector<16x1xf32>
    %cst_135 = arith.constant 3.200000e+01 : f32
    %294 = vector.broadcast %cst_135 : f32 to vector<16x1xf32>
    %295 = arith.divf %293, %294 : vector<16x1xf32>
    %296 = vector.broadcast %288 : vector<16x1xf32> to vector<16x32xf32>
    %297 = arith.subf %282, %296 : vector<16x32xf32>
    %cst_136 = arith.constant 9.99999996E-13 : f32
    %298 = vector.broadcast %cst_136 : f32 to vector<16x1xf32>
    %299 = arith.addf %295, %298 : vector<16x1xf32>
    %300 = math.rsqrt %299 : vector<16x1xf32>
    %301 = vector.broadcast %300 : vector<16x1xf32> to vector<16x32xf32>
    %302 = arith.mulf %297, %301 : vector<16x32xf32>
    %303 = vector.broadcast %283 : vector<1x32xf32> to vector<16x32xf32>
    %304 = arith.mulf %302, %303 : vector<16x32xf32>
    %305 = vector.broadcast %284 : vector<1x32xf32> to vector<16x32xf32>
    %306 = arith.addf %304, %305 : vector<16x32xf32>
    %cst_137 = arith.constant dense<0.000000e+00> : vector<16x64xf32>
    %307 = tpu.matmul %306, %231, %cst_137 {dimension_numbers = #tpu.dot_dimension_numbers<[1], [0], [0], [1], [0, 0, 1, 1], [], []>} : vector<16x32xf32>, vector<32x64xf32>, vector<16x64xf32> -> vector<16x64xf32>
    %c16 = arith.constant 16 : index
    %c0_138 = arith.constant 0 : index
    %308 = vector.load %arg5[%c16, %c0_138] : memref<20x96xf32, #tpu.memory_space<vmem>>, vector<1x64xf32>
    %309 = vector.broadcast %308 : vector<1x64xf32> to vector<16x64xf32>
    %310 = arith.addf %307, %309 : vector<16x64xf32>
    %cst_139 = arith.constant 5.000000e-01 : f32
    %311 = vector.broadcast %cst_139 : f32 to vector<16x64xf32>
    %312 = arith.mulf %311, %310 : vector<16x64xf32>
    %cst_140 = arith.constant 4.471500e-02 : f32
    %313 = vector.broadcast %cst_140 : f32 to vector<16x64xf32>
    %314 = arith.mulf %313, %310 : vector<16x64xf32>
    %315 = arith.mulf %314, %310 : vector<16x64xf32>
    %316 = arith.mulf %315, %310 : vector<16x64xf32>
    %317 = arith.addf %310, %316 : vector<16x64xf32>
    %cst_141 = arith.constant 0.797884583 : f32
    %318 = vector.broadcast %cst_141 : f32 to vector<16x64xf32>
    %319 = arith.mulf %318, %317 : vector<16x64xf32>
    %320 = math.tanh %319 : vector<16x64xf32>
    %cst_142 = arith.constant 1.000000e+00 : f32
    %321 = vector.broadcast %cst_142 : f32 to vector<16x64xf32>
    %322 = arith.addf %321, %320 : vector<16x64xf32>
    %323 = arith.mulf %312, %322 : vector<16x64xf32>
    %cst_143 = arith.constant dense<0.000000e+00> : vector<16x32xf32>
    %324 = tpu.matmul %323, %232, %cst_143 {dimension_numbers = #tpu.dot_dimension_numbers<[1], [0], [0], [1], [0, 0, 1, 1], [], []>} : vector<16x64xf32>, vector<64x32xf32>, vector<16x32xf32> -> vector<16x32xf32>
    %c17 = arith.constant 17 : index
    %c0_144 = arith.constant 0 : index
    %325 = vector.load %arg5[%c17, %c0_144] : memref<20x96xf32, #tpu.memory_space<vmem>>, vector<1x32xf32>
    %326 = vector.broadcast %325 : vector<1x32xf32> to vector<16x32xf32>
    %327 = arith.addf %324, %326 : vector<16x32xf32>
    %328 = arith.addf %306, %327 : vector<16x32xf32>
    %c18 = arith.constant 18 : index
    %c0_145 = arith.constant 0 : index
    %329 = vector.load %arg5[%c18, %c0_145] : memref<20x96xf32, #tpu.memory_space<vmem>>, vector<1x32xf32>
    %c19 = arith.constant 19 : index
    %c0_146 = arith.constant 0 : index
    %330 = vector.load %arg5[%c19, %c0_146] : memref<20x96xf32, #tpu.memory_space<vmem>>, vector<1x32xf32>
    %cst_147 = arith.constant dense<0.000000e+00> : vector<16xf32>
    %331 = vector.multi_reduction <add>, %328, %cst_147 [1] : vector<16x32xf32> to vector<16xf32>
    %332 = vector.shape_cast %331 : vector<16xf32> to vector<16x1xf32>
    %cst_148 = arith.constant 3.200000e+01 : f32
    %333 = vector.broadcast %cst_148 : f32 to vector<16x1xf32>
    %334 = arith.divf %332, %333 : vector<16x1xf32>
    %335 = vector.broadcast %334 : vector<16x1xf32> to vector<16x32xf32>
    %336 = arith.subf %328, %335 : vector<16x32xf32>
    %337 = arith.mulf %336, %336 : vector<16x32xf32>
    %cst_149 = arith.constant dense<0.000000e+00> : vector<16xf32>
    %338 = vector.multi_reduction <add>, %337, %cst_149 [1] : vector<16x32xf32> to vector<16xf32>
    %339 = vector.shape_cast %338 : vector<16xf32> to vector<16x1xf32>
    %cst_150 = arith.constant 3.200000e+01 : f32
    %340 = vector.broadcast %cst_150 : f32 to vector<16x1xf32>
    %341 = arith.divf %339, %340 : vector<16x1xf32>
    %342 = vector.broadcast %334 : vector<16x1xf32> to vector<16x32xf32>
    %343 = arith.subf %328, %342 : vector<16x32xf32>
    %cst_151 = arith.constant 9.99999996E-13 : f32
    %344 = vector.broadcast %cst_151 : f32 to vector<16x1xf32>
    %345 = arith.addf %341, %344 : vector<16x1xf32>
    %346 = math.rsqrt %345 : vector<16x1xf32>
    %347 = vector.broadcast %346 : vector<16x1xf32> to vector<16x32xf32>
    %348 = arith.mulf %343, %347 : vector<16x32xf32>
    %349 = vector.broadcast %329 : vector<1x32xf32> to vector<16x32xf32>
    %350 = arith.mulf %348, %349 : vector<16x32xf32>
    %351 = vector.broadcast %330 : vector<1x32xf32> to vector<16x32xf32>
    %352 = arith.addf %350, %351 : vector<16x32xf32>
    %353 = vector.extract_strided_slice %352 {offsets = [0, 0], sizes = [1, 32], strides = [1, 1]} : vector<16x32xf32> to vector<1x32xf32>
    %354 = vector.extract_strided_slice %352 {offsets = [8, 0], sizes = [1, 32], strides = [1, 1]} : vector<16x32xf32> to vector<1x32xf32>
    %355 = tpu.concatenate %353, %354 in 0 : vector<1x32xf32>, vector<1x32xf32> -> vector<2x32xf32>
    %c128 = arith.constant 128 : index
    %c0_152 = arith.constant 0 : index
    %356 = vector.load %arg4[%c128, %c0_152] : memref<192x32xf32, #tpu.memory_space<vmem>>, vector<32x32xf32>
    %c160 = arith.constant 160 : index
    %c0_153 = arith.constant 0 : index
    %357 = vector.load %arg4[%c160, %c0_153] : memref<192x32xf32, #tpu.memory_space<vmem>>, vector<32x32xf32>
    %cst_154 = arith.constant dense<0.000000e+00> : vector<2x32xf32>
    %358 = tpu.matmul %355, %356, %cst_154 {dimension_numbers = #tpu.dot_dimension_numbers<[1], [0], [0], [1], [0, 0, 1, 1], [], []>} : vector<2x32xf32>, vector<32x32xf32>, vector<2x32xf32> -> vector<2x32xf32>
    %c2_155 = arith.constant 2 : index
    %c0_156 = arith.constant 0 : index
    %359 = vector.load %arg5[%c2_155, %c0_156] : memref<20x96xf32, #tpu.memory_space<vmem>>, vector<1x32xf32>
    %360 = vector.broadcast %359 : vector<1x32xf32> to vector<2x32xf32>
    %361 = arith.addf %358, %360 : vector<2x32xf32>
    %362 = math.tanh %361 : vector<2x32xf32>
    %cst_157 = arith.constant dense<0.000000e+00> : vector<2x32xf32>
    %363 = tpu.matmul %362, %357, %cst_157 {dimension_numbers = #tpu.dot_dimension_numbers<[1], [0], [0], [1], [0, 0, 1, 1], [], []>} : vector<2x32xf32>, vector<32x32xf32>, vector<2x32xf32> -> vector<2x32xf32>
    %c3_158 = arith.constant 3 : index
    %c0_159 = arith.constant 0 : index
    %364 = vector.load %arg5[%c3_158, %c0_159] : memref<20x96xf32, #tpu.memory_space<vmem>>, vector<1x32xf32>
    %365 = vector.broadcast %364 : vector<1x32xf32> to vector<2x32xf32>
    %366 = arith.addf %363, %365 : vector<2x32xf32>
    %367 = vector.extract_strided_slice %366 {offsets = [0, 0], sizes = [2, 2], strides = [1, 1]} : vector<2x32xf32> to vector<2x2xf32>
    %c0_160 = arith.constant 0 : index
    %c0_161 = arith.constant 0 : index
    %368 = vector.load %arg6[%c0_160, %c0_161] : memref<2x2xf32, #tpu.memory_space<vmem>>, vector<2x2xf32>
    tpu.vector_store %arg6[%c0_160, %c0_161], %367 {strides = array<i32>} : memref<2x2xf32, #tpu.memory_space<vmem>>, vector<2x2xf32>,
    return
  }
}

</mosaic_0001>

<llo_original>
// kernel: _lambda_.1
$region0: #{_lambda_.1}
  #allocation0 [shape = 'u32[]', space=smem, size = 0x4, offset = 0x4, fixed_abs, tag = 'smem constant byte address 0x4 - core index']
  #allocation1 [shape = 'u32[144,128]{1,0:T(1,128)}', space=vmem, size = 0x12000, scoped, tag = 'internal scratch']
  #allocation2 [shape = 'f32[16,32]{1,0:T(8,128)}', space=vmem, size = 0x2000, scoped, tag = 'scratch operand']
  %s0 = inlined_call_operand.vmem [shape: s32[16], index: 0, kind: input, shape index: {}]
  %s1 = inlined_call_operand.vmem [shape: s32[2,8], index: 1, kind: input, shape index: {}]
  %s2 = inlined_call_operand.vmem [shape: f32[120,32], index: 2, kind: input, shape index: {}]
  %s3 = inlined_call_operand.vmem [shape: f32[2,32,192], index: 3, kind: input, shape index: {}]
  %s4 = inlined_call_operand.vmem [shape: f32[192,32], index: 4, kind: input, shape index: {}]
  %s5 = inlined_call_operand.vmem [shape: f32[20,96], index: 5, kind: input, shape index: {}]
  %s6 = inlined_call_operand.hbm [shape: f32[2,2], index: 6, kind: output, shape index: {}]
  %s7 = sld [smem:[#allocation0]]
  $region38: #{_lambda_.1} parent=0
    _
  %s9 = ssub.s32 1, %s7
  %s10 = scalar_select 0, %s9, %s7
  $region1: #{_lambda_.1} parent=0
    #allocation3 [shape = 'u8[512]{0}', space=smem, size = 0x200, scoped, tag = 'input window, operand 0, single buffered']
    #allocation4 [shape = 's32[1]{0}', space=sflag, size = 0x4, scoped, tag = 'scoped memory for _lambda_.1']
    #allocation5 [shape = 's32[1]{0}', space=sflag, size = 0x4, scoped, tag = 'scoped memory for _lambda_.1']
    #allocation6 [shape = 'u8[1024]{0}', space=vmem, size = 0x400, scoped, tag = 'output window, operand 0, single buffered']
    %11 = vsyncpa [#allocation5], 0
    %12 = vsyncpa [#allocation4], 0
    // Predicated region
    $region2: #{_lambda_.1} parent=1 // pred_check
      _
    $region3: #{_lambda_.1} parent=1 // pred_check_branch
      %14 = sbr.rel (0) target = $region5
    $region4: #{_lambda_.1} parent=1 // pred_region
      %s16 = ssub.s32 16, 16
      %17 = vsyncadd [#allocation5], %s16
      %s19 = sshll.u32 %s0, 4
      %s20 = int_to_ptr.vmem [resolvable:$true] %s19
      %22 = dma.vmem_to_smem %s20, 16, [#allocation3], [#allocation5]
    $region5: #{_lambda_.1} parent=1 // pred_fallthru
      _
    // Predicated region
    $region6: #{_lambda_.1} parent=1 // pred_check
      _
    $region7: #{_lambda_.1} parent=1 // pred_check_branch
      %24 = sbr.rel (0) target = $region9
    $region8: #{_lambda_.1} parent=1 // pred_region
      _
    $region9: #{_lambda_.1} parent=1 // pred_fallthru
      _
    // Predicated region
    $region10: #{_lambda_.1} parent=1 // pred_check
      _
    $region11: #{_lambda_.1} parent=1 // pred_check_branch
      %26 = sbr.rel (0) target = $region13
    $region12: #{_lambda_.1} parent=1 // pred_region
      _
    $region13: #{_lambda_.1} parent=1 // pred_fallthru
      _
    // Predicated region
    $region14: #{_lambda_.1} parent=1 // pred_check
      _
    $region15: #{_lambda_.1} parent=1 // pred_check_branch
      %28 = sbr.rel (0) target = $region17
    $region16: #{_lambda_.1} parent=1 // pred_region
      _
    $region17: #{_lambda_.1} parent=1 // pred_fallthru
      _
    // Predicated region
    $region18: #{_lambda_.1} parent=1 // pred_check
      _
    $region19: #{_lambda_.1} parent=1 // pred_check_branch
      %30 = sbr.rel (0) target = $region21
    $region20: #{_lambda_.1} parent=1 // pred_region
      _
    $region21: #{_lambda_.1} parent=1 // pred_fallthru
      _
    // Predicated region
    $region22: #{_lambda_.1} parent=1 // pred_check
      _
    $region23: #{_lambda_.1} parent=1 // pred_check_branch
      %32 = sbr.rel (0) target = $region25
    $region24: #{_lambda_.1} parent=1 // pred_region
      _
    $region25: #{_lambda_.1} parent=1 // pred_fallthru
      _
    // Predicated region
    $region26: #{_lambda_.1} parent=1 // pred_check
      _
    $region27: #{_lambda_.1} parent=1 // pred_check_branch
      %34 = sbr.rel (0) target = $region29
    $region28: #{_lambda_.1} parent=1 // pred_region
      %35 = dma.done [#allocation5], 16
    $region29: #{_lambda_.1} parent=1 // pred_fallthru
      _
    %36 = sfence
    %s37 = sld [smem:[#allocation3]]
    %s38 = scalar_lea.vmem %s2, %s37
    %v39 = vld [vmem:[%s38] sm:$0x1]
    %vm40 = vcmask 253952
    %41 = vst.msk [vmem:[#allocation2] sm:$0x1] %vm40, %v39
    %s42 = sld [smem:[#allocation3 + $0x1]]
    %s43 = scalar_lea.vmem %s2, %s42
    %v44 = vld [vmem:[%s43] sm:$0x1]
    %45 = vst.msk [vmem:[#allocation2 + $0x1] sm:$0x1] %vm40, %v44
    %s46 = sld [smem:[#allocation3 + $0x2]]
    %s47 = scalar_lea.vmem %s2, %s46
    %v48 = vld [vmem:[%s47] sm:$0x1]
    %49 = vst.msk [vmem:[#allocation2 + $0x2] sm:$0x1] %vm40, %v48
    %s50 = sld [smem:[#allocation3 + $0x3]]
    %s51 = scalar_lea.vmem %s2, %s50
    %v52 = vld [vmem:[%s51] sm:$0x1]
    %53 = vst.msk [vmem:[#allocation2 + $0x3] sm:$0x1] %vm40, %v52
    %s54 = sld [smem:[#allocation3 + $0x4]]
    %s55 = scalar_lea.vmem %s2, %s54
    %v56 = vld [vmem:[%s55] sm:$0x1]
    %57 = vst.msk [vmem:[#allocation2 + $0x4] sm:$0x1] %vm40, %v56
    %s58 = sld [smem:[#allocation3 + $0x5]]
    %s59 = scalar_lea.vmem %s2, %s58
    %v60 = vld [vmem:[%s59] sm:$0x1]
    %61 = vst.msk [vmem:[#allocation2 + $0x5] sm:$0x1] %vm40, %v60
    %s62 = sld [smem:[#allocation3 + $0x6]]
    %s63 = scalar_lea.vmem %s2, %s62
    %v64 = vld [vmem:[%s63] sm:$0x1]
    %65 = vst.msk [vmem:[#allocation2 + $0x6] sm:$0x1] %vm40, %v64
    %s66 = sld [smem:[#allocation3 + $0x7]]
    %s67 = scalar_lea.vmem %s2, %s66
    %v68 = vld [vmem:[%s67] sm:$0x1]
    %69 = vst.msk [vmem:[#allocation2 + $0x7] sm:$0x1] %vm40, %v68
    %s70 = sld [smem:[#allocation3 + $0x8]]
    %s71 = scalar_lea.vmem %s2, %s70
    %v72 = vld [vmem:[%s71] sm:$0x1]
    %73 = vst.msk [vmem:[#allocation2 + $0x8] sm:$0x1] %vm40, %v72
    %s74 = sld [smem:[#allocation3 + $0x9]]
    %s75 = scalar_lea.vmem %s2, %s74
    %v76 = vld [vmem:[%s75] sm:$0x1]
    %77 = vst.msk [vmem:[#allocation2 + $0x9] sm:$0x1] %vm40, %v76
    %s78 = sld [smem:[#allocation3 + $0xa]]
    %s79 = scalar_lea.vmem %s2, %s78
    %v80 = vld [vmem:[%s79] sm:$0x1]
    %81 = vst.msk [vmem:[#allocation2 + $0xa] sm:$0x1] %vm40, %v80
    %s82 = sld [smem:[#allocation3 + $0xb]]
    %s83 = scalar_lea.vmem %s2, %s82
    %v84 = vld [vmem:[%s83] sm:$0x1]
    %85 = vst.msk [vmem:[#allocation2 + $0xb] sm:$0x1] %vm40, %v84
    %s86 = sld [smem:[#allocation3 + $0xc]]
    %s87 = scalar_lea.vmem %s2, %s86
    %v88 = vld [vmem:[%s87] sm:$0x1]
    %89 = vst.msk [vmem:[#allocation2 + $0xc] sm:$0x1] %vm40, %v88
    %s90 = sld [smem:[#allocation3 + $0xd]]
    %s91 = scalar_lea.vmem %s2, %s90
    %v92 = vld [vmem:[%s91] sm:$0x1]
    %93 = vst.msk [vmem:[#allocation2 + $0xd] sm:$0x1] %vm40, %v92
    %s94 = sld [smem:[#allocation3 + $0xe]]
    %s95 = scalar_lea.vmem %s2, %s94
    %v96 = vld [vmem:[%s95] sm:$0x1]
    %97 = vst.msk [vmem:[#allocation2 + $0xe] sm:$0x1] %vm40, %v96
    %s98 = sld [smem:[#allocation3 + $0xf]]
    %s99 = scalar_lea.vmem %s2, %s98
    %v100 = vld [vmem:[%s99] sm:$0x1]
    %101 = vst.msk [vmem:[#allocation2 + $0xf] sm:$0x1] %vm40, %v100
    %v102 = vld [vmem:[%s2 + $0x68] sm:$0xff]
    %v103 = vld [vmem:[#allocation2] sm:$0xff]
    %v104 = vld [vmem:[#allocation2 + $0x8] sm:$0xff]
    %v105 = vadd.f32 %v103, %v102
    %v106 = vadd.f32 %v104, %v102
    %v107 = vld [vmem:[%s5] sm:$0x1]
    %v108 = vld [vmem:[%s5 + $0x1] sm:$0x1]
    %vm109 = vcmask 261120
    %v110 = vsel %vm109, %v105, 0.0
    %111 = vadd.xlane.f32.xlu0 %v110
    %v112 = vpop.xlane.xlu0 %111
    %v113 = vsel %vm109, %v106, 0.0
    %114 = vadd.xlane.f32.xlu0 %v113
    %v115 = vpop.xlane.xlu0 %114
    %v116 = vrcp.pop 32.0
    %v117 = vmul.f32 %v112, %v116
    %v118 = vmul.f32 %v115, %v116
    %v119 = vsub.f32 %v105, %v117
    %v120 = vsub.f32 %v106, %v118
    %v121 = vmul.f32 %v119, %v119
    %v122 = vmul.f32 %v120, %v120
    %v123 = vsel %vm109, %v121, 0.0
    %124 = vadd.xlane.f32.xlu0 %v123
    %v125 = vpop.xlane.xlu0 %124
    %v126 = vsel %vm109, %v122, 0.0
    %127 = vadd.xlane.f32.xlu0 %v126
    %v128 = vpop.xlane.xlu0 %127
    %v129 = vmul.f32 %v125, %v116
    %v130 = vmul.f32 %v128, %v116
    %v131 = vadd.f32 %v129, 1e-12
    %v132 = vadd.f32 %v130, 1e-12
    %v133 = vrsqrt.pop %v131
    %v134 = vrsqrt.pop %v132
    %v135 = vmul.f32 %v119, %v133
    %v136 = vmul.f32 %v120, %v134
    %v137 = vlaneseq
    %v138 = vshrl.u32 %v137, 7
    %v139 = vsub.s32 0, %v138
    %v140 = vrot.slane %v107, %v139
    %v141 = vmul.f32 %v135, %v140
    %v142 = vmul.f32 %v136, %v140
    %v143 = vlaneseq
    %v144 = vshrl.u32 %v143, 7
    %v145 = vsub.s32 0, %v144
    %v146 = vrot.slane %v108, %v145
    %v147 = vadd.f32 %v141, %v146
    %v148 = vadd.f32 %v142, %v146
    %v149 = vld [vmem:[%s1] sm:$0x3]
    %v150 = vcvt.s32.f32 %v149
    %v151 = vsub.f32 1.0, %v150
    %v152 = vmul.f32 %v151, -10000.0
    %v155 = vunpack.c.l.s4 1966171168
    %v156 = vunpack.c.0.s8 %v155
    %v157 = vlaneseq
    %v158 = vshrl.u32 %v157, 7
    %v159 = vsub.s32 %v156, %v158
    %v160 = vrot.slane %v152, %v159
    %v161 = vcombine.high %v160, %v160
    %v163 = vunpack.c.l.s4 1966171168
    %v164 = vunpack.c.0.s8 %v163
    %v165 = vlaneseq
    %v166 = vshrl.u32 %v165, 7
    %v167 = vsub.s32 %v164, %v166
    %v168 = vrot.slane %v160, %v167
    %v170 = vunpack.c.l.s4 1966171168
    %v171 = vunpack.c.0.s8 %v170
    %v172 = vlaneseq
    %v173 = vshrl.u32 %v172, 7
    %v174 = vsub.s32 %v171, %v173
    %v175 = vrot.slane %v161, %v174
    %v176 = vlaneseq
    %v177 = vshrl.u32 %v176, 7
    %v178 = vsub.s32 0, %v177
    %v179 = vrot.slane %v168, %v178
    %v180 = vlaneseq
    %v181 = vshrl.u32 %v180, 7
    %v182 = vsub.s32 0, %v181
    %v183 = vrot.slane %v175, %v182
    %v186 = vld [vmem:[%s3] sm:$0xff]
    %v187 = vld [vmem:[%s3 + $0x8] sm:$0xff]
    %v188 = vld [vmem:[%s3 + $0x10] sm:$0xff]
    %v189 = vld [vmem:[%s3 + $0x18] sm:$0xff]
    %v190 = vld [vmem:[%s3 + $0x20] sm:$0xff]
    %v191 = vld [vmem:[%s3 + $0x28] sm:$0xff]
    %v192 = vld [vmem:[%s3 + $0x30] sm:$0xff]
    %v193 = vld [vmem:[%s3 + $0x38] sm:$0xff]
    %v194 = vld [vmem:[%s4] sm:$0xff]
    %v195 = vld [vmem:[%s4 + $0x8] sm:$0xff]
    %v196 = vld [vmem:[%s4 + $0x10] sm:$0xff]
    %v197 = vld [vmem:[%s4 + $0x18] sm:$0xff]
    %v198 = vld [vmem:[%s4 + $0x20] sm:$0xff]
    %v199 = vld [vmem:[%s4 + $0x28] sm:$0xff]
    %v200 = vld [vmem:[%s4 + $0x30] sm:$0xff]
    %v201 = vld [vmem:[%s4 + $0x38] sm:$0xff]
    %v202 = vld [vmem:[%s5 + $0x4] sm:$0x1]
    %v203 = vlaneseq
    %v204 = vshrl.u32 %v203, 7
    %v205 = vsub.s32 0, %v204
    %v206 = vrot.slane %v202, %v205
    %v208 = vsel %vm109, %v147, 0
    %v211 = vsel %vm109, %v148, 0
    %213 = vmatprep.subr.mxu0 0.0
    %214 = vmatpush1.msra.mxu0 0.0
    %215 = vmatprep.subr.mxu0 0.0
    %216 = vmatpush1.msra.mxu0 0.0
    %217 = vmatprep.subr.mxu0 0.0
    %218 = vmatpush1.msra.mxu0 0.0
    %219 = vmatprep.subr.mxu0 0.0
    %220 = vmatpush1.msra.mxu0 0.0
    %221 = vmatprep.subr.mxu0 0.0
    %222 = vmatpush1.msra.mxu0 0.0
    %223 = vmatprep.subr.mxu0 0.0
    %224 = vmatpush1.msra.mxu0 0.0
    %225 = vmatprep.subr.mxu0 0.0
    %226 = vmatpush1.msra.mxu0 0.0
    %227 = vmatprep.subr.mxu0 0.0
    %228 = vmatpush1.msra.mxu0 0.0
    %229 = vmatprep.subr.mxu0 0.0
    %230 = vmatpush1.msra.mxu0 0.0
    %231 = vmatprep.subr.mxu0 0.0
    %232 = vmatpush1.msra.mxu0 0.0
    %233 = vmatprep.subr.mxu0 0.0
    %234 = vmatpush1.msra.mxu0 0.0
    %235 = vmatprep.subr.mxu0 0.0
    %236 = vmatpush1.msra.mxu0 0.0
    %237 = vmatprep.subr.mxu0 0.0
    %238 = vmatpush1.msra.mxu0 %v192
    %239 = vmatprep.subr.mxu0 0.0
    %240 = vmatpush1.msra.mxu0 %v190
    %241 = vmatprep.subr.mxu0 0.0
    %242 = vmatpush1.msra.mxu0 %v188
    %243 = vmatprep.subr.mxu0 0.0
    %244 = vmatpush1.msra.mxu0 %v186
    %245 = vmatprep.subr.mxu0 0.0
    %246 = vmatpush2.msra.mxu0 0.0
    %247 = vmatprep.subr.mxu0 0.0
    %248 = vmatpush2.msra.mxu0 0.0
    %249 = vmatprep.subr.mxu0 0.0
    %250 = vmatpush2.msra.mxu0 0.0
    %251 = vmatprep.subr.mxu0 0.0
    %252 = vmatpush2.msra.mxu0 0.0
    %253 = vmatprep.subr.mxu0 0.0
    %254 = vmatpush2.msra.mxu0 0.0
    %255 = vmatprep.subr.mxu0 0.0
    %256 = vmatpush2.msra.mxu0 0.0
    %257 = vmatprep.subr.mxu0 0.0
    %258 = vmatpush2.msra.mxu0 0.0
    %259 = vmatprep.subr.mxu0 0.0
    %260 = vmatpush2.msra.mxu0 0.0
    %261 = vmatprep.subr.mxu0 0.0
    %262 = vmatpush2.msra.mxu0 0.0
    %263 = vmatprep.subr.mxu0 0.0
    %264 = vmatpush2.msra.mxu0 0.0
    %265 = vmatprep.subr.mxu0 0.0
    %266 = vmatpush2.msra.mxu0 0.0
    %267 = vmatprep.subr.mxu0 0.0
    %268 = vmatpush2.msra.mxu0 0.0
    %269 = vmatprep.subr.mxu0 0.0
    %270 = vmatpush2.msra.mxu0 0.0
    %271 = vmatprep.subr.mxu0 0.0
    %272 = vmatpush2.msra.mxu0 0.0
    %273 = vmatprep.subr.mxu0 0.0
    %274 = vmatpush2.msra.mxu0 0.0
    %275 = vmatprep.subr.mxu0 0.0
    %276 = vmatpush2.msra.mxu0 0.0
    %277 = vmatprep.mubr.f32.mxu0 0.0
    %278 = vmatmul.mubr.f32.gmra.mxu0 %v208
    %v279 = vpop.f32.mrf.mxu0
    %v280 = vadd.f32 %v206, %v279
    %v281 = vpop.f32.mrf.mxu0
    %282 = vmatprep.mubr.f32.mxu0 0.0
    %283 = vmatmul.mubr.f32.gmra.mxu0 %v211
    %v284 = vpop.f32.mrf.mxu0
    %v285 = vadd.f32 %v206, %v284
    %v286 = vpop.f32.mrf.mxu0
    %287 = vdwg.mxu0
    %289 = vrot.lane.b32.xlu0 %v280, 96
    %v290 = vpop.permute.xlu0 %289
    %vm291 = vcmask 130048
    %v292 = vsel %vm291, %v280, 0
    %v294 = vsel %vm291, %v290, 0
    %296 = vmatprep.subr.mxu0 0.0
    %297 = vmatpush1.xpose.msra.mxu0 0.0
    %298 = vmatprep.subr.mxu0 0.0
    %299 = vmatpush1.xpose.msra.mxu0 0.0
    %300 = vmatprep.subr.mxu0 0.0
    %301 = vmatpush1.xpose.msra.mxu0 0.0
    %302 = vmatprep.subr.mxu0 0.0
    %303 = vmatpush1.xpose.msra.mxu0 0.0
    %304 = vmatprep.subr.mxu0 0.0
    %305 = vmatpush1.xpose.msra.mxu0 0.0
    %306 = vmatprep.subr.mxu0 0.0
    %307 = vmatpush1.xpose.msra.mxu0 0.0
    %308 = vmatprep.subr.mxu0 0.0
    %309 = vmatpush1.xpose.msra.mxu0 0.0
    %310 = vmatprep.subr.mxu0 0.0
    %311 = vmatpush1.xpose.msra.mxu0 0.0
    %312 = vmatprep.subr.mxu0 0.0
    %313 = vmatpush1.xpose.msra.mxu0 0.0
    %314 = vmatprep.subr.mxu0 0.0
    %315 = vmatpush1.xpose.msra.mxu0 0.0
    %316 = vmatprep.subr.mxu0 0.0
    %317 = vmatpush1.xpose.msra.mxu0 0.0
    %318 = vmatprep.subr.mxu0 0.0
    %319 = vmatpush1.xpose.msra.mxu0 0.0
    %320 = vmatprep.subr.mxu0 0.0
    %321 = vmatpush1.xpose.msra.mxu0 0.0
    %322 = vmatprep.subr.mxu0 0.0
    %323 = vmatpush1.xpose.msra.mxu0 0.0
    %324 = vmatprep.subr.mxu0 0.0
    %325 = vmatpush1.xpose.msra.mxu0 0.0
    %326 = vmatprep.subr.mxu0 0.0
    %327 = vmatpush1.xpose.msra.mxu0 %v294
    %328 = vmatprep.subr.mxu0 0.0
    %329 = vmatpush2.xpose.msra.mxu0 0.0
    %330 = vmatprep.subr.mxu0 0.0
    %331 = vmatpush2.xpose.msra.mxu0 0.0
    %332 = vmatprep.subr.mxu0 0.0
    %333 = vmatpush2.xpose.msra.mxu0 0.0
    %334 = vmatprep.subr.mxu0 0.0
    %335 = vmatpush2.xpose.msra.mxu0 0.0
    %336 = vmatprep.subr.mxu0 0.0
    %337 = vmatpush2.xpose.msra.mxu0 0.0
    %338 = vmatprep.subr.mxu0 0.0
    %339 = vmatpush2.xpose.msra.mxu0 0.0
    %340 = vmatprep.subr.mxu0 0.0
    %341 = vmatpush2.xpose.msra.mxu0 0.0
    %342 = vmatprep.subr.mxu0 0.0
    %343 = vmatpush2.xpose.msra.mxu0 0.0
    %344 = vmatprep.subr.mxu0 0.0
    %345 = vmatpush2.xpose.msra.mxu0 0.0
    %346 = vmatprep.subr.mxu0 0.0
    %347 = vmatpush2.xpose.msra.mxu0 0.0
    %348 = vmatprep.subr.mxu0 0.0
    %349 = vmatpush2.xpose.msra.mxu0 0.0
    %350 = vmatprep.subr.mxu0 0.0
    %351 = vmatpush2.xpose.msra.mxu0 0.0
    %352 = vmatprep.subr.mxu0 0.0
    %353 = vmatpush2.xpose.msra.mxu0 0.0
    %354 = vmatprep.subr.mxu0 0.0
    %355 = vmatpush2.xpose.msra.mxu0 0.0
    %356 = vmatprep.subr.mxu0 0.0
    %357 = vmatpush2.xpose.msra.mxu0 0.0
    %358 = vmatprep.subr.mxu0 0.0
    %359 = vmatpush2.xpose.msra.mxu0 0.0
    %360 = vmatprep.mubr.f32.mxu0 0.0
    %361 = vmatmul.mubr.f32.gmra.mxu0 %v292
    %v362 = vpop.f32.mrf.mxu0
    %v363 = vadd.f32 %v179, %v362
    %v364 = vpop.f32.mrf.mxu0
    %365 = vdwg.mxu0
    %367 = vrot.lane.b32.xlu0 %v285, 96
    %v368 = vpop.permute.xlu0 %367
    %v369 = vsel %vm291, %v285, 0
    %v371 = vsel %vm291, %v368, 0
    %373 = vmatprep.subr.mxu0 0.0
    %374 = vmatpush1.xpose.msra.mxu0 0.0
    %375 = vmatprep.subr.mxu0 0.0
    %376 = vmatpush1.xpose.msra.mxu0 0.0
    %377 = vmatprep.subr.mxu0 0.0
    %378 = vmatpush1.xpose.msra.mxu0 0.0
    %379 = vmatprep.subr.mxu0 0.0
    %380 = vmatpush1.xpose.msra.mxu0 0.0
    %381 = vmatprep.subr.mxu0 0.0
    %382 = vmatpush1.xpose.msra.mxu0 0.0
    %383 = vmatprep.subr.mxu0 0.0
    %384 = vmatpush1.xpose.msra.mxu0 0.0
    %385 = vmatprep.subr.mxu0 0.0
    %386 = vmatpush1.xpose.msra.mxu0 0.0
    %387 = vmatprep.subr.mxu0 0.0
    %388 = vmatpush1.xpose.msra.mxu0 0.0
    %389 = vmatprep.subr.mxu0 0.0
    %390 = vmatpush1.xpose.msra.mxu0 0.0
    %391 = vmatprep.subr.mxu0 0.0
    %392 = vmatpush1.xpose.msra.mxu0 0.0
    %393 = vmatprep.subr.mxu0 0.0
    %394 = vmatpush1.xpose.msra.mxu0 0.0
    %395 = vmatprep.subr.mxu0 0.0
    %396 = vmatpush1.xpose.msra.mxu0 0.0
    %397 = vmatprep.subr.mxu0 0.0
    %398 = vmatpush1.xpose.msra.mxu0 0.0
    %399 = vmatprep.subr.mxu0 0.0
    %400 = vmatpush1.xpose.msra.mxu0 0.0
    %401 = vmatprep.subr.mxu0 0.0
    %402 = vmatpush1.xpose.msra.mxu0 0.0
    %403 = vmatprep.subr.mxu0 0.0
    %404 = vmatpush1.xpose.msra.mxu0 %v371
    %405 = vmatprep.subr.mxu0 0.0
    %406 = vmatpush2.xpose.msra.mxu0 0.0
    %407 = vmatprep.subr.mxu0 0.0
    %408 = vmatpush2.xpose.msra.mxu0 0.0
    %409 = vmatprep.subr.mxu0 0.0
    %410 = vmatpush2.xpose.msra.mxu0 0.0
    %411 = vmatprep.subr.mxu0 0.0
    %412 = vmatpush2.xpose.msra.mxu0 0.0
    %413 = vmatprep.subr.mxu0 0.0
    %414 = vmatpush2.xpose.msra.mxu0 0.0
    %415 = vmatprep.subr.mxu0 0.0
    %416 = vmatpush2.xpose.msra.mxu0 0.0
    %417 = vmatprep.subr.mxu0 0.0
    %418 = vmatpush2.xpose.msra.mxu0 0.0
    %419 = vmatprep.subr.mxu0 0.0
    %420 = vmatpush2.xpose.msra.mxu0 0.0
    %421 = vmatprep.subr.mxu0 0.0
    %422 = vmatpush2.xpose.msra.mxu0 0.0
    %423 = vmatprep.subr.mxu0 0.0
    %424 = vmatpush2.xpose.msra.mxu0 0.0
    %425 = vmatprep.subr.mxu0 0.0
    %426 = vmatpush2.xpose.msra.mxu0 0.0
    %427 = vmatprep.subr.mxu0 0.0
    %428 = vmatpush2.xpose.msra.mxu0 0.0
    %429 = vmatprep.subr.mxu0 0.0
    %430 = vmatpush2.xpose.msra.mxu0 0.0
    %431 = vmatprep.subr.mxu0 0.0
    %432 = vmatpush2.xpose.msra.mxu0 0.0
    %433 = vmatprep.subr.mxu0 0.0
    %434 = vmatpush2.xpose.msra.mxu0 0.0
    %435 = vmatprep.subr.mxu0 0.0
    %436 = vmatpush2.xpose.msra.mxu0 0.0
    %437 = vmatprep.mubr.f32.mxu0 0.0
    %438 = vmatmul.mubr.f32.gmra.mxu0 %v369
    %v439 = vpop.f32.mrf.mxu0
    %v440 = vadd.f32 %v183, %v439
    %v441 = vpop.f32.mrf.mxu0
    %442 = vdwg.mxu0
    %vm443 = vcmask 64512
    %v444 = vsel %vm443, %v363, -inf
    %445 = vmax.xlane.f32.xlu0 %v444
    %v446 = vpop.xlane.xlu0 %445
    %v447 = vsel %vm443, %v440, -inf
    %448 = vmax.xlane.f32.xlu0 %v447
    %v449 = vpop.xlane.xlu0 %448
    %v450 = vsub.f32 %v363, %v446
    %v451 = vsub.f32 %v440, %v449
    %v452 = vmul.f32 %v450, 1.442695
    %v453 = vpow.pop %v452
    %v454 = vmul.f32 %v451, 1.442695
    %v455 = vpow.pop %v454
    %v456 = vsel %vm443, %v453, 0.0
    %457 = vadd.xlane.f32.xlu0 %v456
    %v458 = vpop.xlane.xlu0 %457
    %v459 = vsel %vm443, %v455, 0.0
    %460 = vadd.xlane.f32.xlu0 %v459
    %v461 = vpop.xlane.xlu0 %460
    %v462 = vrcp.pop %v458
    %v463 = vrcp.pop %v461
    %v464 = vmul.f32 %v453, %v462
    %v465 = vmul.f32 %v455, %v463
    %466 = vrot.lane.b32.xlu0 %v280, 64
    %v467 = vpop.permute.xlu0 %466
    %v470 = vsel %vm443, %v464, 0
    %472 = vmatprep.subr.mxu0 0.0
    %473 = vmatpush1.msra.mxu0 0.0
    %474 = vmatprep.subr.mxu0 0.0
    %475 = vmatpush1.msra.mxu0 0.0
    %476 = vmatprep.subr.mxu0 0.0
    %477 = vmatpush1.msra.mxu0 0.0
    %478 = vmatprep.subr.mxu0 0.0
    %479 = vmatpush1.msra.mxu0 0.0
    %480 = vmatprep.subr.mxu0 0.0
    %481 = vmatpush1.msra.mxu0 0.0
    %482 = vmatprep.subr.mxu0 0.0
    %483 = vmatpush1.msra.mxu0 0.0
    %484 = vmatprep.subr.mxu0 0.0
    %485 = vmatpush1.msra.mxu0 0.0
    %486 = vmatprep.subr.mxu0 0.0
    %487 = vmatpush1.msra.mxu0 0.0
    %488 = vmatprep.subr.mxu0 0.0
    %489 = vmatpush1.msra.mxu0 0.0
    %490 = vmatprep.subr.mxu0 0.0
    %491 = vmatpush1.msra.mxu0 0.0
    %492 = vmatprep.subr.mxu0 0.0
    %493 = vmatpush1.msra.mxu0 0.0
    %494 = vmatprep.subr.mxu0 0.0
    %495 = vmatpush1.msra.mxu0 0.0
    %496 = vmatprep.subr.mxu0 0.0
    %497 = vmatpush1.msra.mxu0 0.0
    %498 = vmatprep.subr.mxu0 0.0
    %499 = vmatpush1.msra.mxu0 0.0
    %500 = vmatprep.subr.mxu0 0.0
    %501 = vmatpush1.msra.mxu0 0.0
    %502 = vmatprep.subr.mxu0 0.0
    %503 = vmatpush1.msra.mxu0 %v467
    %504 = vmatprep.subr.mxu0 0.0
    %505 = vmatpush2.msra.mxu0 0.0
    %506 = vmatprep.subr.mxu0 0.0
    %507 = vmatpush2.msra.mxu0 0.0
    %508 = vmatprep.subr.mxu0 0.0
    %509 = vmatpush2.msra.mxu0 0.0
    %510 = vmatprep.subr.mxu0 0.0
    %511 = vmatpush2.msra.mxu0 0.0
    %512 = vmatprep.subr.mxu0 0.0
    %513 = vmatpush2.msra.mxu0 0.0
    %514 = vmatprep.subr.mxu0 0.0
    %515 = vmatpush2.msra.mxu0 0.0
    %516 = vmatprep.subr.mxu0 0.0
    %517 = vmatpush2.msra.mxu0 0.0
    %518 = vmatprep.subr.mxu0 0.0
    %519 = vmatpush2.msra.mxu0 0.0
    %520 = vmatprep.subr.mxu0 0.0
    %521 = vmatpush2.msra.mxu0 0.0
    %522 = vmatprep.subr.mxu0 0.0
    %523 = vmatpush2.msra.mxu0 0.0
    %524 = vmatprep.subr.mxu0 0.0
    %525 = vmatpush2.msra.mxu0 0.0
    %526 = vmatprep.subr.mxu0 0.0
    %527 = vmatpush2.msra.mxu0 0.0
    %528 = vmatprep.subr.mxu0 0.0
    %529 = vmatpush2.msra.mxu0 0.0
    %530 = vmatprep.subr.mxu0 0.0
    %531 = vmatpush2.msra.mxu0 0.0
    %532 = vmatprep.subr.mxu0 0.0
    %533 = vmatpush2.msra.mxu0 0.0
    %534 = vmatprep.subr.mxu0 0.0
    %535 = vmatpush2.msra.mxu0 0.0
    %536 = vmatprep.mubr.f32.mxu0 0.0
    %537 = vmatmul.mubr.f32.gmra.mxu0 %v470
    %v538 = vpop.f32.mrf.mxu0
    %v539 = vadd.f32 0.0, %v538
    %v540 = vpop.f32.mrf.mxu0
    %541 = vdwg.mxu0
    %542 = vrot.lane.b32.xlu0 %v285, 64
    %v543 = vpop.permute.xlu0 %542
    %v546 = vsel %vm443, %v465, 0
    %548 = vmatprep.subr.mxu0 0.0
    %549 = vmatpush1.msra.mxu0 0.0
    %550 = vmatprep.subr.mxu0 0.0
    %551 = vmatpush1.msra.mxu0 0.0
    %552 = vmatprep.subr.mxu0 0.0
    %553 = vmatpush1.msra.mxu0 0.0
    %554 = vmatprep.subr.mxu0 0.0
    %555 = vmatpush1.msra.mxu0 0.0
    %556 = vmatprep.subr.mxu0 0.0
    %557 = vmatpush1.msra.mxu0 0.0
    %558 = vmatprep.subr.mxu0 0.0
    %559 = vmatpush1.msra.mxu0 0.0
    %560 = vmatprep.subr.mxu0 0.0
    %561 = vmatpush1.msra.mxu0 0.0
    %562 = vmatprep.subr.mxu0 0.0
    %563 = vmatpush1.msra.mxu0 0.0
    %564 = vmatprep.subr.mxu0 0.0
    %565 = vmatpush1.msra.mxu0 0.0
    %566 = vmatprep.subr.mxu0 0.0
    %567 = vmatpush1.msra.mxu0 0.0
    %568 = vmatprep.subr.mxu0 0.0
    %569 = vmatpush1.msra.mxu0 0.0
    %570 = vmatprep.subr.mxu0 0.0
    %571 = vmatpush1.msra.mxu0 0.0
    %572 = vmatprep.subr.mxu0 0.0
    %573 = vmatpush1.msra.mxu0 0.0
    %574 = vmatprep.subr.mxu0 0.0
    %575 = vmatpush1.msra.mxu0 0.0
    %576 = vmatprep.subr.mxu0 0.0
    %577 = vmatpush1.msra.mxu0 0.0
    %578 = vmatprep.subr.mxu0 0.0
    %579 = vmatpush1.msra.mxu0 %v543
    %580 = vmatprep.subr.mxu0 0.0
    %581 = vmatpush2.msra.mxu0 0.0
    %582 = vmatprep.subr.mxu0 0.0
    %583 = vmatpush2.msra.mxu0 0.0
    %584 = vmatprep.subr.mxu0 0.0
    %585 = vmatpush2.msra.mxu0 0.0
    %586 = vmatprep.subr.mxu0 0.0
    %587 = vmatpush2.msra.mxu0 0.0
    %588 = vmatprep.subr.mxu0 0.0
    %589 = vmatpush2.msra.mxu0 0.0
    %590 = vmatprep.subr.mxu0 0.0
    %591 = vmatpush2.msra.mxu0 0.0
    %592 = vmatprep.subr.mxu0 0.0
    %593 = vmatpush2.msra.mxu0 0.0
    %594 = vmatprep.subr.mxu0 0.0
    %595 = vmatpush2.msra.mxu0 0.0
    %596 = vmatprep.subr.mxu0 0.0
    %597 = vmatpush2.msra.mxu0 0.0
    %598 = vmatprep.subr.mxu0 0.0
    %599 = vmatpush2.msra.mxu0 0.0
    %600 = vmatprep.subr.mxu0 0.0
    %601 = vmatpush2.msra.mxu0 0.0
    %602 = vmatprep.subr.mxu0 0.0
    %603 = vmatpush2.msra.mxu0 0.0
    %604 = vmatprep.subr.mxu0 0.0
    %605 = vmatpush2.msra.mxu0 0.0
    %606 = vmatprep.subr.mxu0 0.0
    %607 = vmatpush2.msra.mxu0 0.0
    %608 = vmatprep.subr.mxu0 0.0
    %609 = vmatpush2.msra.mxu0 0.0
    %610 = vmatprep.subr.mxu0 0.0
    %611 = vmatpush2.msra.mxu0 0.0
    %612 = vmatprep.mubr.f32.mxu0 0.0
    %613 = vmatmul.mubr.f32.gmra.mxu0 %v546
    %v614 = vpop.f32.mrf.mxu0
    %v615 = vadd.f32 0.0, %v614
    %v616 = vpop.f32.mrf.mxu0
    %617 = vdwg.mxu0
    %618 = vrot.lane.b32.xlu0 %v280, 112
    %v619 = vpop.permute.xlu0 %618
    %620 = vrot.lane.b32.xlu0 %v280, 80
    %v621 = vpop.permute.xlu0 %620
    %v622 = vsel %vm291, %v619, 0
    %v624 = vsel %vm291, %v621, 0
    %626 = vmatprep.subr.mxu0 0.0
    %627 = vmatpush1.xpose.msra.mxu0 0.0
    %628 = vmatprep.subr.mxu0 0.0
    %629 = vmatpush1.xpose.msra.mxu0 0.0
    %630 = vmatprep.subr.mxu0 0.0
    %631 = vmatpush1.xpose.msra.mxu0 0.0
    %632 = vmatprep.subr.mxu0 0.0
    %633 = vmatpush1.xpose.msra.mxu0 0.0
    %634 = vmatprep.subr.mxu0 0.0
    %635 = vmatpush1.xpose.msra.mxu0 0.0
    %636 = vmatprep.subr.mxu0 0.0
    %637 = vmatpush1.xpose.msra.mxu0 0.0
    %638 = vmatprep.subr.mxu0 0.0
    %639 = vmatpush1.xpose.msra.mxu0 0.0
    %640 = vmatprep.subr.mxu0 0.0
    %641 = vmatpush1.xpose.msra.mxu0 0.0
    %642 = vmatprep.subr.mxu0 0.0
    %643 = vmatpush1.xpose.msra.mxu0 0.0
    %644 = vmatprep.subr.mxu0 0.0
    %645 = vmatpush1.xpose.msra.mxu0 0.0
    %646 = vmatprep.subr.mxu0 0.0
    %647 = vmatpush1.xpose.msra.mxu0 0.0
    %648 = vmatprep.subr.mxu0 0.0
    %649 = vmatpush1.xpose.msra.mxu0 0.0
    %650 = vmatprep.subr.mxu0 0.0
    %651 = vmatpush1.xpose.msra.mxu0 0.0
    %652 = vmatprep.subr.mxu0 0.0
    %653 = vmatpush1.xpose.msra.mxu0 0.0
    %654 = vmatprep.subr.mxu0 0.0
    %655 = vmatpush1.xpose.msra.mxu0 0.0
    %656 = vmatprep.subr.mxu0 0.0
    %657 = vmatpush1.xpose.msra.mxu0 %v624
    %658 = vmatprep.subr.mxu0 0.0
    %659 = vmatpush2.xpose.msra.mxu0 0.0
    %660 = vmatprep.subr.mxu0 0.0
    %661 = vmatpush2.xpose.msra.mxu0 0.0
    %662 = vmatprep.subr.mxu0 0.0
    %663 = vmatpush2.xpose.msra.mxu0 0.0
    %664 = vmatprep.subr.mxu0 0.0
    %665 = vmatpush2.xpose.msra.mxu0 0.0
    %666 = vmatprep.subr.mxu0 0.0
    %667 = vmatpush2.xpose.msra.mxu0 0.0
    %668 = vmatprep.subr.mxu0 0.0
    %669 = vmatpush2.xpose.msra.mxu0 0.0
    %670 = vmatprep.subr.mxu0 0.0
    %671 = vmatpush2.xpose.msra.mxu0 0.0
    %672 = vmatprep.subr.mxu0 0.0
    %673 = vmatpush2.xpose.msra.mxu0 0.0
    %674 = vmatprep.subr.mxu0 0.0
    %675 = vmatpush2.xpose.msra.mxu0 0.0
    %676 = vmatprep.subr.mxu0 0.0
    %677 = vmatpush2.xpose.msra.mxu0 0.0
    %678 = vmatprep.subr.mxu0 0.0
    %679 = vmatpush2.xpose.msra.mxu0 0.0
    %680 = vmatprep.subr.mxu0 0.0
    %681 = vmatpush2.xpose.msra.mxu0 0.0
    %682 = vmatprep.subr.mxu0 0.0
    %683 = vmatpush2.xpose.msra.mxu0 0.0
    %684 = vmatprep.subr.mxu0 0.0
    %685 = vmatpush2.xpose.msra.mxu0 0.0
    %686 = vmatprep.subr.mxu0 0.0
    %687 = vmatpush2.xpose.msra.mxu0 0.0
    %688 = vmatprep.subr.mxu0 0.0
    %689 = vmatpush2.xpose.msra.mxu0 0.0
    %690 = vmatprep.mubr.f32.mxu0 0.0
    %691 = vmatmul.mubr.f32.gmra.mxu0 %v622
    %v692 = vpop.f32.mrf.mxu0
    %v693 = vadd.f32 %v179, %v692
    %v694 = vpop.f32.mrf.mxu0
    %695 = vdwg.mxu0
    %696 = vrot.lane.b32.xlu0 %v285, 112
    %v697 = vpop.permute.xlu0 %696
    %698 = vrot.lane.b32.xlu0 %v285, 80
    %v699 = vpop.permute.xlu0 %698
    %v700 = vsel %vm291, %v697, 0
    %v702 = vsel %vm291, %v699, 0
    %704 = vmatprep.subr.mxu0 0.0
    %705 = vmatpush1.xpose.msra.mxu0 0.0
    %706 = vmatprep.subr.mxu0 0.0
    %707 = vmatpush1.xpose.msra.mxu0 0.0
    %708 = vmatprep.subr.mxu0 0.0
    %709 = vmatpush1.xpose.msra.mxu0 0.0
    %710 = vmatprep.subr.mxu0 0.0
    %711 = vmatpush1.xpose.msra.mxu0 0.0
    %712 = vmatprep.subr.mxu0 0.0
    %713 = vmatpush1.xpose.msra.mxu0 0.0
    %714 = vmatprep.subr.mxu0 0.0
    %715 = vmatpush1.xpose.msra.mxu0 0.0
    %716 = vmatprep.subr.mxu0 0.0
    %717 = vmatpush1.xpose.msra.mxu0 0.0
    %718 = vmatprep.subr.mxu0 0.0
    %719 = vmatpush1.xpose.msra.mxu0 0.0
    %720 = vmatprep.subr.mxu0 0.0
    %721 = vmatpush1.xpose.msra.mxu0 0.0
    %722 = vmatprep.subr.mxu0 0.0
    %723 = vmatpush1.xpose.msra.mxu0 0.0
    %724 = vmatprep.subr.mxu0 0.0
    %725 = vmatpush1.xpose.msra.mxu0 0.0
    %726 = vmatprep.subr.mxu0 0.0
    %727 = vmatpush1.xpose.msra.mxu0 0.0
    %728 = vmatprep.subr.mxu0 0.0
    %729 = vmatpush1.xpose.msra.mxu0 0.0
    %730 = vmatprep.subr.mxu0 0.0
    %731 = vmatpush1.xpose.msra.mxu0 0.0
    %732 = vmatprep.subr.mxu0 0.0
    %733 = vmatpush1.xpose.msra.mxu0 0.0
    %734 = vmatprep.subr.mxu0 0.0
    %735 = vmatpush1.xpose.msra.mxu0 %v702
    %736 = vmatprep.subr.mxu0 0.0
    %737 = vmatpush2.xpose.msra.mxu0 0.0
    %738 = vmatprep.subr.mxu0 0.0
    %739 = vmatpush2.xpose.msra.mxu0 0.0
    %740 = vmatprep.subr.mxu0 0.0
    %741 = vmatpush2.xpose.msra.mxu0 0.0
    %742 = vmatprep.subr.mxu0 0.0
    %743 = vmatpush2.xpose.msra.mxu0 0.0
    %744 = vmatprep.subr.mxu0 0.0
    %745 = vmatpush2.xpose.msra.mxu0 0.0
    %746 = vmatprep.subr.mxu0 0.0
    %747 = vmatpush2.xpose.msra.mxu0 0.0
    %748 = vmatprep.subr.mxu0 0.0
    %749 = vmatpush2.xpose.msra.mxu0 0.0
    %750 = vmatprep.subr.mxu0 0.0
    %751 = vmatpush2.xpose.msra.mxu0 0.0
    %752 = vmatprep.subr.mxu0 0.0
    %753 = vmatpush2.xpose.msra.mxu0 0.0
    %754 = vmatprep.subr.mxu0 0.0
    %755 = vmatpush2.xpose.msra.mxu0 0.0
    %756 = vmatprep.subr.mxu0 0.0
    %757 = vmatpush2.xpose.msra.mxu0 0.0
    %758 = vmatprep.subr.mxu0 0.0
    %759 = vmatpush2.xpose.msra.mxu0 0.0
    %760 = vmatprep.subr.mxu0 0.0
    %761 = vmatpush2.xpose.msra.mxu0 0.0
    %762 = vmatprep.subr.mxu0 0.0
    %763 = vmatpush2.xpose.msra.mxu0 0.0
    %764 = vmatprep.subr.mxu0 0.0
    %765 = vmatpush2.xpose.msra.mxu0 0.0
    %766 = vmatprep.subr.mxu0 0.0
    %767 = vmatpush2.xpose.msra.mxu0 0.0
    %768 = vmatprep.mubr.f32.mxu0 0.0
    %769 = vmatmul.mubr.f32.gmra.mxu0 %v700
    %v770 = vpop.f32.mrf.mxu0
    %v771 = vadd.f32 %v183, %v770
    %v772 = vpop.f32.mrf.mxu0
    %773 = vdwg.mxu0
    %v774 = vsel %vm443, %v693, -inf
    %775 = vmax.xlane.f32.xlu0 %v774
    %v776 = vpop.xlane.xlu0 %775
    %v777 = vsel %vm443, %v771, -inf
    %778 = vmax.xlane.f32.xlu0 %v777
    %v779 = vpop.xlane.xlu0 %778
    %v780 = vsub.f32 %v693, %v776
    %v781 = vsub.f32 %v771, %v779
    %v782 = vmul.f32 %v780, 1.442695
    %v783 = vpow.pop %v782
    %v784 = vmul.f32 %v781, 1.442695
    %v785 = vpow.pop %v784
    %v786 = vsel %vm443, %v783, 0.0
    %787 = vadd.xlane.f32.xlu0 %v786
    %v788 = vpop.xlane.xlu0 %787
    %v789 = vsel %vm443, %v785, 0.0
    %790 = vadd.xlane.f32.xlu0 %v789
    %v791 = vpop.xlane.xlu0 %790
    %v792 = vrcp.pop %v788
    %v793 = vrcp.pop %v791
    %v794 = vmul.f32 %v783, %v792
    %v795 = vmul.f32 %v785, %v793
    %796 = vrot.lane.b32.xlu0 %v280, 48
    %v797 = vpop.permute.xlu0 %796
    %v800 = vsel %vm443, %v794, 0
    %802 = vmatprep.subr.mxu0 0.0
    %803 = vmatpush1.msra.mxu0 0.0
    %804 = vmatprep.subr.mxu0 0.0
    %805 = vmatpush1.msra.mxu0 0.0
    %806 = vmatprep.subr.mxu0 0.0
    %807 = vmatpush1.msra.mxu0 0.0
    %808 = vmatprep.subr.mxu0 0.0
    %809 = vmatpush1.msra.mxu0 0.0
    %810 = vmatprep.subr.mxu0 0.0
    %811 = vmatpush1.msra.mxu0 0.0
    %812 = vmatprep.subr.mxu0 0.0
    %813 = vmatpush1.msra.mxu0 0.0
    %814 = vmatprep.subr.mxu0 0.0
    %815 = vmatpush1.msra.mxu0 0.0
    %816 = vmatprep.subr.mxu0 0.0
    %817 = vmatpush1.msra.mxu0 0.0
    %818 = vmatprep.subr.mxu0 0.0
    %819 = vmatpush1.msra.mxu0 0.0
    %820 = vmatprep.subr.mxu0 0.0
    %821 = vmatpush1.msra.mxu0 0.0
    %822 = vmatprep.subr.mxu0 0.0
    %823 = vmatpush1.msra.mxu0 0.0
    %824 = vmatprep.subr.mxu0 0.0
    %825 = vmatpush1.msra.mxu0 0.0
    %826 = vmatprep.subr.mxu0 0.0
    %827 = vmatpush1.msra.mxu0 0.0
    %828 = vmatprep.subr.mxu0 0.0
    %829 = vmatpush1.msra.mxu0 0.0
    %830 = vmatprep.subr.mxu0 0.0
    %831 = vmatpush1.msra.mxu0 0.0
    %832 = vmatprep.subr.mxu0 0.0
    %833 = vmatpush1.msra.mxu0 %v797
    %834 = vmatprep.subr.mxu0 0.0
    %835 = vmatpush2.msra.mxu0 0.0
    %836 = vmatprep.subr.mxu0 0.0
    %837 = vmatpush2.msra.mxu0 0.0
    %838 = vmatprep.subr.mxu0 0.0
    %839 = vmatpush2.msra.mxu0 0.0
    %840 = vmatprep.subr.mxu0 0.0
    %841 = vmatpush2.msra.mxu0 0.0
    %842 = vmatprep.subr.mxu0 0.0
    %843 = vmatpush2.msra.mxu0 0.0
    %844 = vmatprep.subr.mxu0 0.0
    %845 = vmatpush2.msra.mxu0 0.0
    %846 = vmatprep.subr.mxu0 0.0
    %847 = vmatpush2.msra.mxu0 0.0
    %848 = vmatprep.subr.mxu0 0.0
    %849 = vmatpush2.msra.mxu0 0.0
    %850 = vmatprep.subr.mxu0 0.0
    %851 = vmatpush2.msra.mxu0 0.0
    %852 = vmatprep.subr.mxu0 0.0
    %853 = vmatpush2.msra.mxu0 0.0
    %854 = vmatprep.subr.mxu0 0.0
    %855 = vmatpush2.msra.mxu0 0.0
    %856 = vmatprep.subr.mxu0 0.0
    %857 = vmatpush2.msra.mxu0 0.0
    %858 = vmatprep.subr.mxu0 0.0
    %859 = vmatpush2.msra.mxu0 0.0
    %860 = vmatprep.subr.mxu0 0.0
    %861 = vmatpush2.msra.mxu0 0.0
    %862 = vmatprep.subr.mxu0 0.0
    %863 = vmatpush2.msra.mxu0 0.0
    %864 = vmatprep.subr.mxu0 0.0
    %865 = vmatpush2.msra.mxu0 0.0
    %866 = vmatprep.mubr.f32.mxu0 0.0
    %867 = vmatmul.mubr.f32.gmra.mxu0 %v800
    %v868 = vpop.f32.mrf.mxu0
    %v869 = vadd.f32 0.0, %v868
    %v870 = vpop.f32.mrf.mxu0
    %871 = vdwg.mxu0
    %872 = vrot.lane.b32.xlu0 %v285, 48
    %v873 = vpop.permute.xlu0 %872
    %v876 = vsel %vm443, %v795, 0
    %878 = vmatprep.subr.mxu0 0.0
    %879 = vmatpush1.msra.mxu0 0.0
    %880 = vmatprep.subr.mxu0 0.0
    %881 = vmatpush1.msra.mxu0 0.0
    %882 = vmatprep.subr.mxu0 0.0
    %883 = vmatpush1.msra.mxu0 0.0
    %884 = vmatprep.subr.mxu0 0.0
    %885 = vmatpush1.msra.mxu0 0.0
    %886 = vmatprep.subr.mxu0 0.0
    %887 = vmatpush1.msra.mxu0 0.0
    %888 = vmatprep.subr.mxu0 0.0
    %889 = vmatpush1.msra.mxu0 0.0
    %890 = vmatprep.subr.mxu0 0.0
    %891 = vmatpush1.msra.mxu0 0.0
    %892 = vmatprep.subr.mxu0 0.0
    %893 = vmatpush1.msra.mxu0 0.0
    %894 = vmatprep.subr.mxu0 0.0
    %895 = vmatpush1.msra.mxu0 0.0
    %896 = vmatprep.subr.mxu0 0.0
    %897 = vmatpush1.msra.mxu0 0.0
    %898 = vmatprep.subr.mxu0 0.0
    %899 = vmatpush1.msra.mxu0 0.0
    %900 = vmatprep.subr.mxu0 0.0
    %901 = vmatpush1.msra.mxu0 0.0
    %902 = vmatprep.subr.mxu0 0.0
    %903 = vmatpush1.msra.mxu0 0.0
    %904 = vmatprep.subr.mxu0 0.0
    %905 = vmatpush1.msra.mxu0 0.0
    %906 = vmatprep.subr.mxu0 0.0
    %907 = vmatpush1.msra.mxu0 0.0
    %908 = vmatprep.subr.mxu0 0.0
    %909 = vmatpush1.msra.mxu0 %v873
    %910 = vmatprep.subr.mxu0 0.0
    %911 = vmatpush2.msra.mxu0 0.0
    %912 = vmatprep.subr.mxu0 0.0
    %913 = vmatpush2.msra.mxu0 0.0
    %914 = vmatprep.subr.mxu0 0.0
    %915 = vmatpush2.msra.mxu0 0.0
    %916 = vmatprep.subr.mxu0 0.0
    %917 = vmatpush2.msra.mxu0 0.0
    %918 = vmatprep.subr.mxu0 0.0
    %919 = vmatpush2.msra.mxu0 0.0
    %920 = vmatprep.subr.mxu0 0.0
    %921 = vmatpush2.msra.mxu0 0.0
    %922 = vmatprep.subr.mxu0 0.0
    %923 = vmatpush2.msra.mxu0 0.0
    %924 = vmatprep.subr.mxu0 0.0
    %925 = vmatpush2.msra.mxu0 0.0
    %926 = vmatprep.subr.mxu0 0.0
    %927 = vmatpush2.msra.mxu0 0.0
    %928 = vmatprep.subr.mxu0 0.0
    %929 = vmatpush2.msra.mxu0 0.0
    %930 = vmatprep.subr.mxu0 0.0
    %931 = vmatpush2.msra.mxu0 0.0
    %932 = vmatprep.subr.mxu0 0.0
    %933 = vmatpush2.msra.mxu0 0.0
    %934 = vmatprep.subr.mxu0 0.0
    %935 = vmatpush2.msra.mxu0 0.0
    %936 = vmatprep.subr.mxu0 0.0
    %937 = vmatpush2.msra.mxu0 0.0
    %938 = vmatprep.subr.mxu0 0.0
    %939 = vmatpush2.msra.mxu0 0.0
    %940 = vmatprep.subr.mxu0 0.0
    %941 = vmatpush2.msra.mxu0 0.0
    %942 = vmatprep.mubr.f32.mxu0 0.0
    %943 = vmatmul.mubr.f32.gmra.mxu0 %v876
    %v944 = vpop.f32.mrf.mxu0
    %v945 = vadd.f32 0.0, %v944
    %v946 = vpop.f32.mrf.mxu0
    %947 = vdwg.mxu0
    %950 = vrot.lane.b32.xlu0 %v869, 16
    %v951 = vpop.permute.xlu0 %950
    %952 = vrot.lane.b32.xlu0 %v945, 16
    %v953 = vpop.permute.xlu0 %952
    %v956 = vsel %vm291, %v539, %v951
    %v957 = vsel %vm291, %v615, %v953
    %v958 = vld [vmem:[%s5 + $0x5] sm:$0x1]
    %v959 = vlaneseq
    %v960 = vshrl.u32 %v959, 7
    %v961 = vsub.s32 0, %v960
    %v962 = vrot.slane %v958, %v961
    %967 = vrot.lane.b32.xlu0 %v186, 32
    %v968 = vpop.permute.xlu0 %967
    %969 = vrot.lane.b32.xlu0 %v188, 32
    %v970 = vpop.permute.xlu0 %969
    %971 = vrot.lane.b32.xlu0 %v190, 32
    %v972 = vpop.permute.xlu0 %971
    %973 = vrot.lane.b32.xlu0 %v192, 32
    %v974 = vpop.permute.xlu0 %973
    %v980 = vsel %vm109, %v956, 0
    %v983 = vsel %vm109, %v957, 0
    %985 = vmatprep.subr.mxu0 0.0
    %986 = vmatpush1.msra.mxu0 0.0
    %987 = vmatprep.subr.mxu0 0.0
    %988 = vmatpush1.msra.mxu0 0.0
    %989 = vmatprep.subr.mxu0 0.0
    %990 = vmatpush1.msra.mxu0 0.0
    %991 = vmatprep.subr.mxu0 0.0
    %992 = vmatpush1.msra.mxu0 0.0
    %993 = vmatprep.subr.mxu0 0.0
    %994 = vmatpush1.msra.mxu0 0.0
    %995 = vmatprep.subr.mxu0 0.0
    %996 = vmatpush1.msra.mxu0 0.0
    %997 = vmatprep.subr.mxu0 0.0
    %998 = vmatpush1.msra.mxu0 0.0
    %999 = vmatprep.subr.mxu0 0.0
    %1000 = vmatpush1.msra.mxu0 0.0
    %1001 = vmatprep.subr.mxu0 0.0
    %1002 = vmatpush1.msra.mxu0 0.0
    %1003 = vmatprep.subr.mxu0 0.0
    %1004 = vmatpush1.msra.mxu0 0.0
    %1005 = vmatprep.subr.mxu0 0.0
    %1006 = vmatpush1.msra.mxu0 0.0
    %1007 = vmatprep.subr.mxu0 0.0
    %1008 = vmatpush1.msra.mxu0 0.0
    %1009 = vmatprep.subr.mxu0 0.0
    %1010 = vmatpush1.msra.mxu0 %v974
    %1011 = vmatprep.subr.mxu0 0.0
    %1012 = vmatpush1.msra.mxu0 %v972
    %1013 = vmatprep.subr.mxu0 0.0
    %1014 = vmatpush1.msra.mxu0 %v970
    %1015 = vmatprep.subr.mxu0 0.0
    %1016 = vmatpush1.msra.mxu0 %v968
    %1017 = vmatprep.subr.mxu0 0.0
    %1018 = vmatpush2.msra.mxu0 0.0
    %1019 = vmatprep.subr.mxu0 0.0
    %1020 = vmatpush2.msra.mxu0 0.0
    %1021 = vmatprep.subr.mxu0 0.0
    %1022 = vmatpush2.msra.mxu0 0.0
    %1023 = vmatprep.subr.mxu0 0.0
    %1024 = vmatpush2.msra.mxu0 0.0
    %1025 = vmatprep.subr.mxu0 0.0
    %1026 = vmatpush2.msra.mxu0 0.0
    %1027 = vmatprep.subr.mxu0 0.0
    %1028 = vmatpush2.msra.mxu0 0.0
    %1029 = vmatprep.subr.mxu0 0.0
    %1030 = vmatpush2.msra.mxu0 0.0
    %1031 = vmatprep.subr.mxu0 0.0
    %1032 = vmatpush2.msra.mxu0 0.0
    %1033 = vmatprep.subr.mxu0 0.0
    %1034 = vmatpush2.msra.mxu0 0.0
    %1035 = vmatprep.subr.mxu0 0.0
    %1036 = vmatpush2.msra.mxu0 0.0
    %1037 = vmatprep.subr.mxu0 0.0
    %1038 = vmatpush2.msra.mxu0 0.0
    %1039 = vmatprep.subr.mxu0 0.0
    %1040 = vmatpush2.msra.mxu0 0.0
    %1041 = vmatprep.subr.mxu0 0.0
    %1042 = vmatpush2.msra.mxu0 0.0
    %1043 = vmatprep.subr.mxu0 0.0
    %1044 = vmatpush2.msra.mxu0 0.0
    %1045 = vmatprep.subr.mxu0 0.0
    %1046 = vmatpush2.msra.mxu0 0.0
    %1047 = vmatprep.subr.mxu0 0.0
    %1048 = vmatpush2.msra.mxu0 0.0
    %1049 = vmatprep.mubr.f32.mxu0 0.0
    %1050 = vmatmul.mubr.f32.gmra.mxu0 %v980
    %v1051 = vpop.f32.mrf.mxu0
    %v1052 = vadd.f32 %v962, %v1051
    %v1053 = vpop.f32.mrf.mxu0
    %1054 = vmatprep.mubr.f32.mxu0 0.0
    %1055 = vmatmul.mubr.f32.gmra.mxu0 %v983
    %v1056 = vpop.f32.mrf.mxu0
    %v1057 = vadd.f32 %v962, %v1056
    %v1058 = vpop.f32.mrf.mxu0
    %1059 = vdwg.mxu0
    %v1060 = vadd.f32 %v147, %v1052
    %v1061 = vadd.f32 %v148, %v1057
    %v1062 = vld [vmem:[%s5 + $0x6] sm:$0x1]
    %v1063 = vld [vmem:[%s5 + $0x7] sm:$0x1]
    %v1064 = vsel %vm109, %v1060, 0.0
    %1065 = vadd.xlane.f32.xlu0 %v1064
    %v1066 = vpop.xlane.xlu0 %1065
    %v1067 = vsel %vm109, %v1061, 0.0
    %1068 = vadd.xlane.f32.xlu0 %v1067
    %v1069 = vpop.xlane.xlu0 %1068
    %v1070 = vmul.f32 %v1066, %v116
    %v1071 = vmul.f32 %v1069, %v116
    %v1072 = vsub.f32 %v1060, %v1070
    %v1073 = vsub.f32 %v1061, %v1071
    %v1074 = vmul.f32 %v1072, %v1072
    %v1075 = vmul.f32 %v1073, %v1073
    %v1076 = vsel %vm109, %v1074, 0.0
    %1077 = vadd.xlane.f32.xlu0 %v1076
    %v1078 = vpop.xlane.xlu0 %1077
    %v1079 = vsel %vm109, %v1075, 0.0
    %1080 = vadd.xlane.f32.xlu0 %v1079
    %v1081 = vpop.xlane.xlu0 %1080
    %v1082 = vmul.f32 %v1078, %v116
    %v1083 = vmul.f32 %v1081, %v116
    %v1084 = vadd.f32 %v1082, 1e-12
    %v1085 = vadd.f32 %v1083, 1e-12
    %v1086 = vrsqrt.pop %v1084
    %v1087 = vrsqrt.pop %v1085
    %v1088 = vmul.f32 %v1072, %v1086
    %v1089 = vmul.f32 %v1073, %v1087
    %v1090 = vlaneseq
    %v1091 = vshrl.u32 %v1090, 7
    %v1092 = vsub.s32 0, %v1091
    %v1093 = vrot.slane %v1062, %v1092
    %v1094 = vmul.f32 %v1088, %v1093
    %v1095 = vmul.f32 %v1089, %v1093
    %v1096 = vlaneseq
    %v1097 = vshrl.u32 %v1096, 7
    %v1098 = vsub.s32 0, %v1097
    %v1099 = vrot.slane %v1063, %v1098
    %v1100 = vadd.f32 %v1094, %v1099
    %v1101 = vadd.f32 %v1095, %v1099
    %v1102 = vld [vmem:[%s5 + $0x8] sm:$0x1]
    %v1103 = vlaneseq
    %v1104 = vshrl.u32 %v1103, 7
    %v1105 = vsub.s32 0, %v1104
    %v1106 = vrot.slane %v1102, %v1105
    %v1108 = vsel %vm109, %v1100, 0
    %v1111 = vsel %vm109, %v1101, 0
    %1113 = vmatprep.subr.mxu0 0.0
    %1114 = vmatpush1.msra.mxu0 0.0
    %1115 = vmatprep.subr.mxu0 0.0
    %1116 = vmatpush1.msra.mxu0 0.0
    %1117 = vmatprep.subr.mxu0 0.0
    %1118 = vmatpush1.msra.mxu0 0.0
    %1119 = vmatprep.subr.mxu0 0.0
    %1120 = vmatpush1.msra.mxu0 0.0
    %1121 = vmatprep.subr.mxu0 0.0
    %1122 = vmatpush1.msra.mxu0 0.0
    %1123 = vmatprep.subr.mxu0 0.0
    %1124 = vmatpush1.msra.mxu0 0.0
    %1125 = vmatprep.subr.mxu0 0.0
    %1126 = vmatpush1.msra.mxu0 0.0
    %1127 = vmatprep.subr.mxu0 0.0
    %1128 = vmatpush1.msra.mxu0 0.0
    %1129 = vmatprep.subr.mxu0 0.0
    %1130 = vmatpush1.msra.mxu0 0.0
    %1131 = vmatprep.subr.mxu0 0.0
    %1132 = vmatpush1.msra.mxu0 0.0
    %1133 = vmatprep.subr.mxu0 0.0
    %1134 = vmatpush1.msra.mxu0 0.0
    %1135 = vmatprep.subr.mxu0 0.0
    %1136 = vmatpush1.msra.mxu0 0.0
    %1137 = vmatprep.subr.mxu0 0.0
    %1138 = vmatpush1.msra.mxu0 %v193
    %1139 = vmatprep.subr.mxu0 0.0
    %1140 = vmatpush1.msra.mxu0 %v191
    %1141 = vmatprep.subr.mxu0 0.0
    %1142 = vmatpush1.msra.mxu0 %v189
    %1143 = vmatprep.subr.mxu0 0.0
    %1144 = vmatpush1.msra.mxu0 %v187
    %1145 = vmatprep.subr.mxu0 0.0
    %1146 = vmatpush2.msra.mxu0 0.0
    %1147 = vmatprep.subr.mxu0 0.0
    %1148 = vmatpush2.msra.mxu0 0.0
    %1149 = vmatprep.subr.mxu0 0.0
    %1150 = vmatpush2.msra.mxu0 0.0
    %1151 = vmatprep.subr.mxu0 0.0
    %1152 = vmatpush2.msra.mxu0 0.0
    %1153 = vmatprep.subr.mxu0 0.0
    %1154 = vmatpush2.msra.mxu0 0.0
    %1155 = vmatprep.subr.mxu0 0.0
    %1156 = vmatpush2.msra.mxu0 0.0
    %1157 = vmatprep.subr.mxu0 0.0
    %1158 = vmatpush2.msra.mxu0 0.0
    %1159 = vmatprep.subr.mxu0 0.0
    %1160 = vmatpush2.msra.mxu0 0.0
    %1161 = vmatprep.subr.mxu0 0.0
    %1162 = vmatpush2.msra.mxu0 0.0
    %1163 = vmatprep.subr.mxu0 0.0
    %1164 = vmatpush2.msra.mxu0 0.0
    %1165 = vmatprep.subr.mxu0 0.0
    %1166 = vmatpush2.msra.mxu0 0.0
    %1167 = vmatprep.subr.mxu0 0.0
    %1168 = vmatpush2.msra.mxu0 0.0
    %1169 = vmatprep.subr.mxu0 0.0
    %1170 = vmatpush2.msra.mxu0 0.0
    %1171 = vmatprep.subr.mxu0 0.0
    %1172 = vmatpush2.msra.mxu0 0.0
    %1173 = vmatprep.subr.mxu0 0.0
    %1174 = vmatpush2.msra.mxu0 0.0
    %1175 = vmatprep.subr.mxu0 0.0
    %1176 = vmatpush2.msra.mxu0 0.0
    %1177 = vmatprep.mubr.f32.mxu0 0.0
    %1178 = vmatmul.mubr.f32.gmra.mxu0 %v1108
    %v1179 = vpop.f32.mrf.mxu0
    %v1180 = vadd.f32 %v1106, %v1179
    %v1181 = vpop.f32.mrf.mxu0
    %1182 = vmatprep.mubr.f32.mxu0 0.0
    %1183 = vmatmul.mubr.f32.gmra.mxu0 %v1111
    %v1184 = vpop.f32.mrf.mxu0
    %v1185 = vadd.f32 %v1106, %v1184
    %v1186 = vpop.f32.mrf.mxu0
    %1187 = vdwg.mxu0
    %v1188 = vmul.f32 %v1180, 0.5
    %v1189 = vmul.f32 %v1185, 0.5
    %v1190 = vmul.f32 %v1180, 0.044715
    %v1191 = vmul.f32 %v1185, 0.044715
    %v1192 = vmul.f32 %v1190, %v1180
    %v1193 = vmul.f32 %v1191, %v1185
    %v1194 = vmul.f32 %v1192, %v1180
    %v1195 = vmul.f32 %v1193, %v1185
    %v1196 = vadd.f32 %v1180, %v1194
    %v1197 = vadd.f32 %v1185, %v1195
    %v1198 = vmul.f32 %v1196, 0.7978846
    %v1199 = vmul.f32 %v1197, 0.7978846
    %v1200 = vtanh.pop %v1198
    %v1201 = vtanh.pop %v1199
    %v1202 = vadd.f32 %v1200, 1.0
    %v1203 = vadd.f32 %v1201, 1.0
    %v1204 = vmul.f32 %v1188, %v1202
    %v1205 = vmul.f32 %v1189, %v1203
    %v1206 = vld [vmem:[%s5 + $0x9] sm:$0x1]
    %v1207 = vlaneseq
    %v1208 = vshrl.u32 %v1207, 7
    %v1209 = vsub.s32 0, %v1208
    %v1210 = vrot.slane %v1206, %v1209
    %vm1211 = vcmask 523264
    %v1213 = vsel %vm1211, %v1204, 0
    %v1216 = vsel %vm1211, %v1205, 0
    %1218 = vmatprep.subr.mxu0 0.0
    %1219 = vmatpush1.msra.mxu0 0.0
    %1220 = vmatprep.subr.mxu0 0.0
    %1221 = vmatpush1.msra.mxu0 0.0
    %1222 = vmatprep.subr.mxu0 0.0
    %1223 = vmatpush1.msra.mxu0 0.0
    %1224 = vmatprep.subr.mxu0 0.0
    %1225 = vmatpush1.msra.mxu0 0.0
    %1226 = vmatprep.subr.mxu0 0.0
    %1227 = vmatpush1.msra.mxu0 0.0
    %1228 = vmatprep.subr.mxu0 0.0
    %1229 = vmatpush1.msra.mxu0 0.0
    %1230 = vmatprep.subr.mxu0 0.0
    %1231 = vmatpush1.msra.mxu0 0.0
    %1232 = vmatprep.subr.mxu0 0.0
    %1233 = vmatpush1.msra.mxu0 0.0
    %1234 = vmatprep.subr.mxu0 0.0
    %1235 = vmatpush1.msra.mxu0 %v201
    %1236 = vmatprep.subr.mxu0 0.0
    %1237 = vmatpush1.msra.mxu0 %v200
    %1238 = vmatprep.subr.mxu0 0.0
    %1239 = vmatpush1.msra.mxu0 %v199
    %1240 = vmatprep.subr.mxu0 0.0
    %1241 = vmatpush1.msra.mxu0 %v198
    %1242 = vmatprep.subr.mxu0 0.0
    %1243 = vmatpush1.msra.mxu0 %v197
    %1244 = vmatprep.subr.mxu0 0.0
    %1245 = vmatpush1.msra.mxu0 %v196
    %1246 = vmatprep.subr.mxu0 0.0
    %1247 = vmatpush1.msra.mxu0 %v195
    %1248 = vmatprep.subr.mxu0 0.0
    %1249 = vmatpush1.msra.mxu0 %v194
    %1250 = vmatprep.subr.mxu0 0.0
    %1251 = vmatpush2.msra.mxu0 0.0
    %1252 = vmatprep.subr.mxu0 0.0
    %1253 = vmatpush2.msra.mxu0 0.0
    %1254 = vmatprep.subr.mxu0 0.0
    %1255 = vmatpush2.msra.mxu0 0.0
    %1256 = vmatprep.subr.mxu0 0.0
    %1257 = vmatpush2.msra.mxu0 0.0
    %1258 = vmatprep.subr.mxu0 0.0
    %1259 = vmatpush2.msra.mxu0 0.0
    %1260 = vmatprep.subr.mxu0 0.0
    %1261 = vmatpush2.msra.mxu0 0.0
    %1262 = vmatprep.subr.mxu0 0.0
    %1263 = vmatpush2.msra.mxu0 0.0
    %1264 = vmatprep.subr.mxu0 0.0
    %1265 = vmatpush2.msra.mxu0 0.0
    %1266 = vmatprep.subr.mxu0 0.0
    %1267 = vmatpush2.msra.mxu0 0.0
    %1268 = vmatprep.subr.mxu0 0.0
    %1269 = vmatpush2.msra.mxu0 0.0
    %1270 = vmatprep.subr.mxu0 0.0
    %1271 = vmatpush2.msra.mxu0 0.0
    %1272 = vmatprep.subr.mxu0 0.0
    %1273 = vmatpush2.msra.mxu0 0.0
    %1274 = vmatprep.subr.mxu0 0.0
    %1275 = vmatpush2.msra.mxu0 0.0
    %1276 = vmatprep.subr.mxu0 0.0
    %1277 = vmatpush2.msra.mxu0 0.0
    %1278 = vmatprep.subr.mxu0 0.0
    %1279 = vmatpush2.msra.mxu0 0.0
    %1280 = vmatprep.subr.mxu0 0.0
    %1281 = vmatpush2.msra.mxu0 0.0
    %1282 = vmatprep.mubr.f32.mxu0 0.0
    %1283 = vmatmul.mubr.f32.gmra.mxu0 %v1213
    %v1284 = vpop.f32.mrf.mxu0
    %v1285 = vadd.f32 %v1210, %v1284
    %v1286 = vpop.f32.mrf.mxu0
    %1287 = vmatprep.mubr.f32.mxu0 0.0
    %1288 = vmatmul.mubr.f32.gmra.mxu0 %v1216
    %v1289 = vpop.f32.mrf.mxu0
    %v1290 = vadd.f32 %v1210, %v1289
    %v1291 = vpop.f32.mrf.mxu0
    %1292 = vdwg.mxu0
    %v1293 = vadd.f32 %v1100, %v1285
    %v1294 = vadd.f32 %v1101, %v1290
    %v1295 = vld [vmem:[%s5 + $0xa] sm:$0x1]
    %v1296 = vld [vmem:[%s5 + $0xb] sm:$0x1]
    %v1297 = vsel %vm109, %v1293, 0.0
    %1298 = vadd.xlane.f32.xlu0 %v1297
    %v1299 = vpop.xlane.xlu0 %1298
    %v1300 = vsel %vm109, %v1294, 0.0
    %1301 = vadd.xlane.f32.xlu0 %v1300
    %v1302 = vpop.xlane.xlu0 %1301
    %v1303 = vmul.f32 %v1299, %v116
    %v1304 = vmul.f32 %v1302, %v116
    %v1305 = vsub.f32 %v1293, %v1303
    %v1306 = vsub.f32 %v1294, %v1304
    %v1307 = vmul.f32 %v1305, %v1305
    %v1308 = vmul.f32 %v1306, %v1306
    %v1309 = vsel %vm109, %v1307, 0.0
    %1310 = vadd.xlane.f32.xlu0 %v1309
    %v1311 = vpop.xlane.xlu0 %1310
    %v1312 = vsel %vm109, %v1308, 0.0
    %1313 = vadd.xlane.f32.xlu0 %v1312
    %v1314 = vpop.xlane.xlu0 %1313
    %v1315 = vmul.f32 %v1311, %v116
    %v1316 = vmul.f32 %v1314, %v116
    %v1317 = vadd.f32 %v1315, 1e-12
    %v1318 = vadd.f32 %v1316, 1e-12
    %v1319 = vrsqrt.pop %v1317
    %v1320 = vrsqrt.pop %v1318
    %v1321 = vmul.f32 %v1305, %v1319
    %v1322 = vmul.f32 %v1306, %v1320
    %v1323 = vlaneseq
    %v1324 = vshrl.u32 %v1323, 7
    %v1325 = vsub.s32 0, %v1324
    %v1326 = vrot.slane %v1295, %v1325
    %v1327 = vmul.f32 %v1321, %v1326
    %v1328 = vmul.f32 %v1322, %v1326
    %v1329 = vlaneseq
    %v1330 = vshrl.u32 %v1329, 7
    %v1331 = vsub.s32 0, %v1330
    %v1332 = vrot.slane %v1296, %v1331
    %v1333 = vadd.f32 %v1327, %v1332
    %v1334 = vadd.f32 %v1328, %v1332
    %s1335 = scalar_lea.vmem %s3, 64
    %v1336 = vld [vmem:[%s1335] sm:$0xff]
    %v1337 = vld [vmem:[%s1335 + $0x8] sm:$0xff]
    %v1338 = vld [vmem:[%s1335 + $0x10] sm:$0xff]
    %v1339 = vld [vmem:[%s1335 + $0x18] sm:$0xff]
    %v1340 = vld [vmem:[%s1335 + $0x20] sm:$0xff]
    %v1341 = vld [vmem:[%s1335 + $0x28] sm:$0xff]
    %v1342 = vld [vmem:[%s1335 + $0x30] sm:$0xff]
    %v1343 = vld [vmem:[%s1335 + $0x38] sm:$0xff]
    %v1344 = vld [vmem:[%s4 + $0x40] sm:$0xff]
    %v1345 = vld [vmem:[%s4 + $0x48] sm:$0xff]
    %v1346 = vld [vmem:[%s4 + $0x50] sm:$0xff]
    %v1347 = vld [vmem:[%s4 + $0x58] sm:$0xff]
    %v1348 = vld [vmem:[%s4 + $0x60] sm:$0xff]
    %v1349 = vld [vmem:[%s4 + $0x68] sm:$0xff]
    %v1350 = vld [vmem:[%s4 + $0x70] sm:$0xff]
    %v1351 = vld [vmem:[%s4 + $0x78] sm:$0xff]
    %v1352 = vld [vmem:[%s5 + $0xc] sm:$0x1]
    %v1353 = vlaneseq
    %v1354 = vshrl.u32 %v1353, 7
    %v1355 = vsub.s32 0, %v1354
    %v1356 = vrot.slane %v1352, %v1355
    %v1358 = vsel %vm109, %v1333, 0
    %v1361 = vsel %vm109, %v1334, 0
    %1363 = vmatprep.subr.mxu0 0.0
    %1364 = vmatpush1.msra.mxu0 0.0
    %1365 = vmatprep.subr.mxu0 0.0
    %1366 = vmatpush1.msra.mxu0 0.0
    %1367 = vmatprep.subr.mxu0 0.0
    %1368 = vmatpush1.msra.mxu0 0.0
    %1369 = vmatprep.subr.mxu0 0.0
    %1370 = vmatpush1.msra.mxu0 0.0
    %1371 = vmatprep.subr.mxu0 0.0
    %1372 = vmatpush1.msra.mxu0 0.0
    %1373 = vmatprep.subr.mxu0 0.0
    %1374 = vmatpush1.msra.mxu0 0.0
    %1375 = vmatprep.subr.mxu0 0.0
    %1376 = vmatpush1.msra.mxu0 0.0
    %1377 = vmatprep.subr.mxu0 0.0
    %1378 = vmatpush1.msra.mxu0 0.0
    %1379 = vmatprep.subr.mxu0 0.0
    %1380 = vmatpush1.msra.mxu0 0.0
    %1381 = vmatprep.subr.mxu0 0.0
    %1382 = vmatpush1.msra.mxu0 0.0
    %1383 = vmatprep.subr.mxu0 0.0
    %1384 = vmatpush1.msra.mxu0 0.0
    %1385 = vmatprep.subr.mxu0 0.0
    %1386 = vmatpush1.msra.mxu0 0.0
    %1387 = vmatprep.subr.mxu0 0.0
    %1388 = vmatpush1.msra.mxu0 %v1342
    %1389 = vmatprep.subr.mxu0 0.0
    %1390 = vmatpush1.msra.mxu0 %v1340
    %1391 = vmatprep.subr.mxu0 0.0
    %1392 = vmatpush1.msra.mxu0 %v1338
    %1393 = vmatprep.subr.mxu0 0.0
    %1394 = vmatpush1.msra.mxu0 %v1336
    %1395 = vmatprep.subr.mxu0 0.0
    %1396 = vmatpush2.msra.mxu0 0.0
    %1397 = vmatprep.subr.mxu0 0.0
    %1398 = vmatpush2.msra.mxu0 0.0
    %1399 = vmatprep.subr.mxu0 0.0
    %1400 = vmatpush2.msra.mxu0 0.0
    %1401 = vmatprep.subr.mxu0 0.0
    %1402 = vmatpush2.msra.mxu0 0.0
    %1403 = vmatprep.subr.mxu0 0.0
    %1404 = vmatpush2.msra.mxu0 0.0
    %1405 = vmatprep.subr.mxu0 0.0
    %1406 = vmatpush2.msra.mxu0 0.0
    %1407 = vmatprep.subr.mxu0 0.0
    %1408 = vmatpush2.msra.mxu0 0.0
    %1409 = vmatprep.subr.mxu0 0.0
    %1410 = vmatpush2.msra.mxu0 0.0
    %1411 = vmatprep.subr.mxu0 0.0
    %1412 = vmatpush2.msra.mxu0 0.0
    %1413 = vmatprep.subr.mxu0 0.0
    %1414 = vmatpush2.msra.mxu0 0.0
    %1415 = vmatprep.subr.mxu0 0.0
    %1416 = vmatpush2.msra.mxu0 0.0
    %1417 = vmatprep.subr.mxu0 0.0
    %1418 = vmatpush2.msra.mxu0 0.0
    %1419 = vmatprep.subr.mxu0 0.0
    %1420 = vmatpush2.msra.mxu0 0.0
    %1421 = vmatprep.subr.mxu0 0.0
    %1422 = vmatpush2.msra.mxu0 0.0
    %1423 = vmatprep.subr.mxu0 0.0
    %1424 = vmatpush2.msra.mxu0 0.0
    %1425 = vmatprep.subr.mxu0 0.0
    %1426 = vmatpush2.msra.mxu0 0.0
    %1427 = vmatprep.mubr.f32.mxu0 0.0
    %1428 = vmatmul.mubr.f32.gmra.mxu0 %v1358
    %v1429 = vpop.f32.mrf.mxu0
    %v1430 = vadd.f32 %v1356, %v1429
    %v1431 = vpop.f32.mrf.mxu0
    %1432 = vmatprep.mubr.f32.mxu0 0.0
    %1433 = vmatmul.mubr.f32.gmra.mxu0 %v1361
    %v1434 = vpop.f32.mrf.mxu0
    %v1435 = vadd.f32 %v1356, %v1434
    %v1436 = vpop.f32.mrf.mxu0
    %1437 = vdwg.mxu0
    %1439 = vrot.lane.b32.xlu0 %v1430, 96
    %v1440 = vpop.permute.xlu0 %1439
    %v1441 = vsel %vm291, %v1430, 0
    %v1443 = vsel %vm291, %v1440, 0
    %1445 = vmatprep.subr.mxu0 0.0
    %1446 = vmatpush1.xpose.msra.mxu0 0.0
    %1447 = vmatprep.subr.mxu0 0.0
    %1448 = vmatpush1.xpose.msra.mxu0 0.0
    %1449 = vmatprep.subr.mxu0 0.0
    %1450 = vmatpush1.xpose.msra.mxu0 0.0
    %1451 = vmatprep.subr.mxu0 0.0
    %1452 = vmatpush1.xpose.msra.mxu0 0.0
    %1453 = vmatprep.subr.mxu0 0.0
    %1454 = vmatpush1.xpose.msra.mxu0 0.0
    %1455 = vmatprep.subr.mxu0 0.0
    %1456 = vmatpush1.xpose.msra.mxu0 0.0
    %1457 = vmatprep.subr.mxu0 0.0
    %1458 = vmatpush1.xpose.msra.mxu0 0.0
    %1459 = vmatprep.subr.mxu0 0.0
    %1460 = vmatpush1.xpose.msra.mxu0 0.0
    %1461 = vmatprep.subr.mxu0 0.0
    %1462 = vmatpush1.xpose.msra.mxu0 0.0
    %1463 = vmatprep.subr.mxu0 0.0
    %1464 = vmatpush1.xpose.msra.mxu0 0.0
    %1465 = vmatprep.subr.mxu0 0.0
    %1466 = vmatpush1.xpose.msra.mxu0 0.0
    %1467 = vmatprep.subr.mxu0 0.0
    %1468 = vmatpush1.xpose.msra.mxu0 0.0
    %1469 = vmatprep.subr.mxu0 0.0
    %1470 = vmatpush1.xpose.msra.mxu0 0.0
    %1471 = vmatprep.subr.mxu0 0.0
    %1472 = vmatpush1.xpose.msra.mxu0 0.0
    %1473 = vmatprep.subr.mxu0 0.0
    %1474 = vmatpush1.xpose.msra.mxu0 0.0
    %1475 = vmatprep.subr.mxu0 0.0
    %1476 = vmatpush1.xpose.msra.mxu0 %v1443
    %1477 = vmatprep.subr.mxu0 0.0
    %1478 = vmatpush2.xpose.msra.mxu0 0.0
    %1479 = vmatprep.subr.mxu0 0.0
    %1480 = vmatpush2.xpose.msra.mxu0 0.0
    %1481 = vmatprep.subr.mxu0 0.0
    %1482 = vmatpush2.xpose.msra.mxu0 0.0
    %1483 = vmatprep.subr.mxu0 0.0
    %1484 = vmatpush2.xpose.msra.mxu0 0.0
    %1485 = vmatprep.subr.mxu0 0.0
    %1486 = vmatpush2.xpose.msra.mxu0 0.0
    %1487 = vmatprep.subr.mxu0 0.0
    %1488 = vmatpush2.xpose.msra.mxu0 0.0
    %1489 = vmatprep.subr.mxu0 0.0
    %1490 = vmatpush2.xpose.msra.mxu0 0.0
    %1491 = vmatprep.subr.mxu0 0.0
    %1492 = vmatpush2.xpose.msra.mxu0 0.0
    %1493 = vmatprep.subr.mxu0 0.0
    %1494 = vmatpush2.xpose.msra.mxu0 0.0
    %1495 = vmatprep.subr.mxu0 0.0
    %1496 = vmatpush2.xpose.msra.mxu0 0.0
    %1497 = vmatprep.subr.mxu0 0.0
    %1498 = vmatpush2.xpose.msra.mxu0 0.0
    %1499 = vmatprep.subr.mxu0 0.0
    %1500 = vmatpush2.xpose.msra.mxu0 0.0
    %1501 = vmatprep.subr.mxu0 0.0
    %1502 = vmatpush2.xpose.msra.mxu0 0.0
    %1503 = vmatprep.subr.mxu0 0.0
    %1504 = vmatpush2.xpose.msra.mxu0 0.0
    %1505 = vmatprep.subr.mxu0 0.0
    %1506 = vmatpush2.xpose.msra.mxu0 0.0
    %1507 = vmatprep.subr.mxu0 0.0
    %1508 = vmatpush2.xpose.msra.mxu0 0.0
    %1509 = vmatprep.mubr.f32.mxu0 0.0
    %1510 = vmatmul.mubr.f32.gmra.mxu0 %v1441
    %v1511 = vpop.f32.mrf.mxu0
    %v1512 = vadd.f32 %v179, %v1511
    %v1513 = vpop.f32.mrf.mxu0
    %1514 = vdwg.mxu0
    %1516 = vrot.lane.b32.xlu0 %v1435, 96
    %v1517 = vpop.permute.xlu0 %1516
    %v1518 = vsel %vm291, %v1435, 0
    %v1520 = vsel %vm291, %v1517, 0
    %1522 = vmatprep.subr.mxu0 0.0
    %1523 = vmatpush1.xpose.msra.mxu0 0.0
    %1524 = vmatprep.subr.mxu0 0.0
    %1525 = vmatpush1.xpose.msra.mxu0 0.0
    %1526 = vmatprep.subr.mxu0 0.0
    %1527 = vmatpush1.xpose.msra.mxu0 0.0
    %1528 = vmatprep.subr.mxu0 0.0
    %1529 = vmatpush1.xpose.msra.mxu0 0.0
    %1530 = vmatprep.subr.mxu0 0.0
    %1531 = vmatpush1.xpose.msra.mxu0 0.0
    %1532 = vmatprep.subr.mxu0 0.0
    %1533 = vmatpush1.xpose.msra.mxu0 0.0
    %1534 = vmatprep.subr.mxu0 0.0
    %1535 = vmatpush1.xpose.msra.mxu0 0.0
    %1536 = vmatprep.subr.mxu0 0.0
    %1537 = vmatpush1.xpose.msra.mxu0 0.0
    %1538 = vmatprep.subr.mxu0 0.0
    %1539 = vmatpush1.xpose.msra.mxu0 0.0
    %1540 = vmatprep.subr.mxu0 0.0
    %1541 = vmatpush1.xpose.msra.mxu0 0.0
    %1542 = vmatprep.subr.mxu0 0.0
    %1543 = vmatpush1.xpose.msra.mxu0 0.0
    %1544 = vmatprep.subr.mxu0 0.0
    %1545 = vmatpush1.xpose.msra.mxu0 0.0
    %1546 = vmatprep.subr.mxu0 0.0
    %1547 = vmatpush1.xpose.msra.mxu0 0.0
    %1548 = vmatprep.subr.mxu0 0.0
    %1549 = vmatpush1.xpose.msra.mxu0 0.0
    %1550 = vmatprep.subr.mxu0 0.0
    %1551 = vmatpush1.xpose.msra.mxu0 0.0
    %1552 = vmatprep.subr.mxu0 0.0
    %1553 = vmatpush1.xpose.msra.mxu0 %v1520
    %1554 = vmatprep.subr.mxu0 0.0
    %1555 = vmatpush2.xpose.msra.mxu0 0.0
    %1556 = vmatprep.subr.mxu0 0.0
    %1557 = vmatpush2.xpose.msra.mxu0 0.0
    %1558 = vmatprep.subr.mxu0 0.0
    %1559 = vmatpush2.xpose.msra.mxu0 0.0
    %1560 = vmatprep.subr.mxu0 0.0
    %1561 = vmatpush2.xpose.msra.mxu0 0.0
    %1562 = vmatprep.subr.mxu0 0.0
    %1563 = vmatpush2.xpose.msra.mxu0 0.0
    %1564 = vmatprep.subr.mxu0 0.0
    %1565 = vmatpush2.xpose.msra.mxu0 0.0
    %1566 = vmatprep.subr.mxu0 0.0
    %1567 = vmatpush2.xpose.msra.mxu0 0.0
    %1568 = vmatprep.subr.mxu0 0.0
    %1569 = vmatpush2.xpose.msra.mxu0 0.0
    %1570 = vmatprep.subr.mxu0 0.0
    %1571 = vmatpush2.xpose.msra.mxu0 0.0
    %1572 = vmatprep.subr.mxu0 0.0
    %1573 = vmatpush2.xpose.msra.mxu0 0.0
    %1574 = vmatprep.subr.mxu0 0.0
    %1575 = vmatpush2.xpose.msra.mxu0 0.0
    %1576 = vmatprep.subr.mxu0 0.0
    %1577 = vmatpush2.xpose.msra.mxu0 0.0
    %1578 = vmatprep.subr.mxu0 0.0
    %1579 = vmatpush2.xpose.msra.mxu0 0.0
    %1580 = vmatprep.subr.mxu0 0.0
    %1581 = vmatpush2.xpose.msra.mxu0 0.0
    %1582 = vmatprep.subr.mxu0 0.0
    %1583 = vmatpush2.xpose.msra.mxu0 0.0
    %1584 = vmatprep.subr.mxu0 0.0
    %1585 = vmatpush2.xpose.msra.mxu0 0.0
    %1586 = vmatprep.mubr.f32.mxu0 0.0
    %1587 = vmatmul.mubr.f32.gmra.mxu0 %v1518
    %v1588 = vpop.f32.mrf.mxu0
    %v1589 = vadd.f32 %v183, %v1588
    %v1590 = vpop.f32.mrf.mxu0
    %1591 = vdwg.mxu0
    %v1592 = vsel %vm443, %v1512, -inf
    %1593 = vmax.xlane.f32.xlu0 %v1592
    %v1594 = vpop.xlane.xlu0 %1593
    %v1595 = vsel %vm443, %v1589, -inf
    %1596 = vmax.xlane.f32.xlu0 %v1595
    %v1597 = vpop.xlane.xlu0 %1596
    %v1598 = vsub.f32 %v1512, %v1594
    %v1599 = vsub.f32 %v1589, %v1597
    %v1600 = vmul.f32 %v1598, 1.442695
    %v1601 = vpow.pop %v1600
    %v1602 = vmul.f32 %v1599, 1.442695
    %v1603 = vpow.pop %v1602
    %v1604 = vsel %vm443, %v1601, 0.0
    %1605 = vadd.xlane.f32.xlu0 %v1604
    %v1606 = vpop.xlane.xlu0 %1605
    %v1607 = vsel %vm443, %v1603, 0.0
    %1608 = vadd.xlane.f32.xlu0 %v1607
    %v1609 = vpop.xlane.xlu0 %1608
    %v1610 = vrcp.pop %v1606
    %v1611 = vrcp.pop %v1609
    %v1612 = vmul.f32 %v1601, %v1610
    %v1613 = vmul.f32 %v1603, %v1611
    %1614 = vrot.lane.b32.xlu0 %v1430, 64
    %v1615 = vpop.permute.xlu0 %1614
    %v1618 = vsel %vm443, %v1612, 0
    %1620 = vmatprep.subr.mxu0 0.0
    %1621 = vmatpush1.msra.mxu0 0.0
    %1622 = vmatprep.subr.mxu0 0.0
    %1623 = vmatpush1.msra.mxu0 0.0
    %1624 = vmatprep.subr.mxu0 0.0
    %1625 = vmatpush1.msra.mxu0 0.0
    %1626 = vmatprep.subr.mxu0 0.0
    %1627 = vmatpush1.msra.mxu0 0.0
    %1628 = vmatprep.subr.mxu0 0.0
    %1629 = vmatpush1.msra.mxu0 0.0
    %1630 = vmatprep.subr.mxu0 0.0
    %1631 = vmatpush1.msra.mxu0 0.0
    %1632 = vmatprep.subr.mxu0 0.0
    %1633 = vmatpush1.msra.mxu0 0.0
    %1634 = vmatprep.subr.mxu0 0.0
    %1635 = vmatpush1.msra.mxu0 0.0
    %1636 = vmatprep.subr.mxu0 0.0
    %1637 = vmatpush1.msra.mxu0 0.0
    %1638 = vmatprep.subr.mxu0 0.0
    %1639 = vmatpush1.msra.mxu0 0.0
    %1640 = vmatprep.subr.mxu0 0.0
    %1641 = vmatpush1.msra.mxu0 0.0
    %1642 = vmatprep.subr.mxu0 0.0
    %1643 = vmatpush1.msra.mxu0 0.0
    %1644 = vmatprep.subr.mxu0 0.0
    %1645 = vmatpush1.msra.mxu0 0.0
    %1646 = vmatprep.subr.mxu0 0.0
    %1647 = vmatpush1.msra.mxu0 0.0
    %1648 = vmatprep.subr.mxu0 0.0
    %1649 = vmatpush1.msra.mxu0 0.0
    %1650 = vmatprep.subr.mxu0 0.0
    %1651 = vmatpush1.msra.mxu0 %v1615
    %1652 = vmatprep.subr.mxu0 0.0
    %1653 = vmatpush2.msra.mxu0 0.0
    %1654 = vmatprep.subr.mxu0 0.0
    %1655 = vmatpush2.msra.mxu0 0.0
    %1656 = vmatprep.subr.mxu0 0.0
    %1657 = vmatpush2.msra.mxu0 0.0
    %1658 = vmatprep.subr.mxu0 0.0
    %1659 = vmatpush2.msra.mxu0 0.0
    %1660 = vmatprep.subr.mxu0 0.0
    %1661 = vmatpush2.msra.mxu0 0.0
    %1662 = vmatprep.subr.mxu0 0.0
    %1663 = vmatpush2.msra.mxu0 0.0
    %1664 = vmatprep.subr.mxu0 0.0
    %1665 = vmatpush2.msra.mxu0 0.0
    %1666 = vmatprep.subr.mxu0 0.0
    %1667 = vmatpush2.msra.mxu0 0.0
    %1668 = vmatprep.subr.mxu0 0.0
    %1669 = vmatpush2.msra.mxu0 0.0
    %1670 = vmatprep.subr.mxu0 0.0
    %1671 = vmatpush2.msra.mxu0 0.0
    %1672 = vmatprep.subr.mxu0 0.0
    %1673 = vmatpush2.msra.mxu0 0.0
    %1674 = vmatprep.subr.mxu0 0.0
    %1675 = vmatpush2.msra.mxu0 0.0
    %1676 = vmatprep.subr.mxu0 0.0
    %1677 = vmatpush2.msra.mxu0 0.0
    %1678 = vmatprep.subr.mxu0 0.0
    %1679 = vmatpush2.msra.mxu0 0.0
    %1680 = vmatprep.subr.mxu0 0.0
    %1681 = vmatpush2.msra.mxu0 0.0
    %1682 = vmatprep.subr.mxu0 0.0
    %1683 = vmatpush2.msra.mxu0 0.0
    %1684 = vmatprep.mubr.f32.mxu0 0.0
    %1685 = vmatmul.mubr.f32.gmra.mxu0 %v1618
    %v1686 = vpop.f32.mrf.mxu0
    %v1687 = vadd.f32 0.0, %v1686
    %v1688 = vpop.f32.mrf.mxu0
    %1689 = vdwg.mxu0
    %1690 = vrot.lane.b32.xlu0 %v1435, 64
    %v1691 = vpop.permute.xlu0 %1690
    %v1694 = vsel %vm443, %v1613, 0
    %1696 = vmatprep.subr.mxu0 0.0
    %1697 = vmatpush1.msra.mxu0 0.0
    %1698 = vmatprep.subr.mxu0 0.0
    %1699 = vmatpush1.msra.mxu0 0.0
    %1700 = vmatprep.subr.mxu0 0.0
    %1701 = vmatpush1.msra.mxu0 0.0
    %1702 = vmatprep.subr.mxu0 0.0
    %1703 = vmatpush1.msra.mxu0 0.0
    %1704 = vmatprep.subr.mxu0 0.0
    %1705 = vmatpush1.msra.mxu0 0.0
    %1706 = vmatprep.subr.mxu0 0.0
    %1707 = vmatpush1.msra.mxu0 0.0
    %1708 = vmatprep.subr.mxu0 0.0
    %1709 = vmatpush1.msra.mxu0 0.0
    %1710 = vmatprep.subr.mxu0 0.0
    %1711 = vmatpush1.msra.mxu0 0.0
    %1712 = vmatprep.subr.mxu0 0.0
    %1713 = vmatpush1.msra.mxu0 0.0
    %1714 = vmatprep.subr.mxu0 0.0
    %1715 = vmatpush1.msra.mxu0 0.0
    %1716 = vmatprep.subr.mxu0 0.0
    %1717 = vmatpush1.msra.mxu0 0.0
    %1718 = vmatprep.subr.mxu0 0.0
    %1719 = vmatpush1.msra.mxu0 0.0
    %1720 = vmatprep.subr.mxu0 0.0
    %1721 = vmatpush1.msra.mxu0 0.0
    %1722 = vmatprep.subr.mxu0 0.0
    %1723 = vmatpush1.msra.mxu0 0.0
    %1724 = vmatprep.subr.mxu0 0.0
    %1725 = vmatpush1.msra.mxu0 0.0
    %1726 = vmatprep.subr.mxu0 0.0
    %1727 = vmatpush1.msra.mxu0 %v1691
    %1728 = vmatprep.subr.mxu0 0.0
    %1729 = vmatpush2.msra.mxu0 0.0
    %1730 = vmatprep.subr.mxu0 0.0
    %1731 = vmatpush2.msra.mxu0 0.0
    %1732 = vmatprep.subr.mxu0 0.0
    %1733 = vmatpush2.msra.mxu0 0.0
    %1734 = vmatprep.subr.mxu0 0.0
    %1735 = vmatpush2.msra.mxu0 0.0
    %1736 = vmatprep.subr.mxu0 0.0
    %1737 = vmatpush2.msra.mxu0 0.0
    %1738 = vmatprep.subr.mxu0 0.0
    %1739 = vmatpush2.msra.mxu0 0.0
    %1740 = vmatprep.subr.mxu0 0.0
    %1741 = vmatpush2.msra.mxu0 0.0
    %1742 = vmatprep.subr.mxu0 0.0
    %1743 = vmatpush2.msra.mxu0 0.0
    %1744 = vmatprep.subr.mxu0 0.0
    %1745 = vmatpush2.msra.mxu0 0.0
    %1746 = vmatprep.subr.mxu0 0.0
    %1747 = vmatpush2.msra.mxu0 0.0
    %1748 = vmatprep.subr.mxu0 0.0
    %1749 = vmatpush2.msra.mxu0 0.0
    %1750 = vmatprep.subr.mxu0 0.0
    %1751 = vmatpush2.msra.mxu0 0.0
    %1752 = vmatprep.subr.mxu0 0.0
    %1753 = vmatpush2.msra.mxu0 0.0
    %1754 = vmatprep.subr.mxu0 0.0
    %1755 = vmatpush2.msra.mxu0 0.0
    %1756 = vmatprep.subr.mxu0 0.0
    %1757 = vmatpush2.msra.mxu0 0.0
    %1758 = vmatprep.subr.mxu0 0.0
    %1759 = vmatpush2.msra.mxu0 0.0
    %1760 = vmatprep.mubr.f32.mxu0 0.0
    %1761 = vmatmul.mubr.f32.gmra.mxu0 %v1694
    %v1762 = vpop.f32.mrf.mxu0
    %v1763 = vadd.f32 0.0, %v1762
    %v1764 = vpop.f32.mrf.mxu0
    %1765 = vdwg.mxu0
    %1766 = vrot.lane.b32.xlu0 %v1430, 112
    %v1767 = vpop.permute.xlu0 %1766
    %1768 = vrot.lane.b32.xlu0 %v1430, 80
    %v1769 = vpop.permute.xlu0 %1768
    %v1770 = vsel %vm291, %v1767, 0
    %v1772 = vsel %vm291, %v1769, 0
    %1774 = vmatprep.subr.mxu0 0.0
    %1775 = vmatpush1.xpose.msra.mxu0 0.0
    %1776 = vmatprep.subr.mxu0 0.0
    %1777 = vmatpush1.xpose.msra.mxu0 0.0
    %1778 = vmatprep.subr.mxu0 0.0
    %1779 = vmatpush1.xpose.msra.mxu0 0.0
    %1780 = vmatprep.subr.mxu0 0.0
    %1781 = vmatpush1.xpose.msra.mxu0 0.0
    %1782 = vmatprep.subr.mxu0 0.0
    %1783 = vmatpush1.xpose.msra.mxu0 0.0
    %1784 = vmatprep.subr.mxu0 0.0
    %1785 = vmatpush1.xpose.msra.mxu0 0.0
    %1786 = vmatprep.subr.mxu0 0.0
    %1787 = vmatpush1.xpose.msra.mxu0 0.0
    %1788 = vmatprep.subr.mxu0 0.0
    %1789 = vmatpush1.xpose.msra.mxu0 0.0
    %1790 = vmatprep.subr.mxu0 0.0
    %1791 = vmatpush1.xpose.msra.mxu0 0.0
    %1792 = vmatprep.subr.mxu0 0.0
    %1793 = vmatpush1.xpose.msra.mxu0 0.0
    %1794 = vmatprep.subr.mxu0 0.0
    %1795 = vmatpush1.xpose.msra.mxu0 0.0
    %1796 = vmatprep.subr.mxu0 0.0
    %1797 = vmatpush1.xpose.msra.mxu0 0.0
    %1798 = vmatprep.subr.mxu0 0.0
    %1799 = vmatpush1.xpose.msra.mxu0 0.0
    %1800 = vmatprep.subr.mxu0 0.0
    %1801 = vmatpush1.xpose.msra.mxu0 0.0
    %1802 = vmatprep.subr.mxu0 0.0
    %1803 = vmatpush1.xpose.msra.mxu0 0.0
    %1804 = vmatprep.subr.mxu0 0.0
    %1805 = vmatpush1.xpose.msra.mxu0 %v1772
    %1806 = vmatprep.subr.mxu0 0.0
    %1807 = vmatpush2.xpose.msra.mxu0 0.0
    %1808 = vmatprep.subr.mxu0 0.0
    %1809 = vmatpush2.xpose.msra.mxu0 0.0
    %1810 = vmatprep.subr.mxu0 0.0
    %1811 = vmatpush2.xpose.msra.mxu0 0.0
    %1812 = vmatprep.subr.mxu0 0.0
    %1813 = vmatpush2.xpose.msra.mxu0 0.0
    %1814 = vmatprep.subr.mxu0 0.0
    %1815 = vmatpush2.xpose.msra.mxu0 0.0
    %1816 = vmatprep.subr.mxu0 0.0
    %1817 = vmatpush2.xpose.msra.mxu0 0.0
    %1818 = vmatprep.subr.mxu0 0.0
    %1819 = vmatpush2.xpose.msra.mxu0 0.0
    %1820 = vmatprep.subr.mxu0 0.0
    %1821 = vmatpush2.xpose.msra.mxu0 0.0
    %1822 = vmatprep.subr.mxu0 0.0
    %1823 = vmatpush2.xpose.msra.mxu0 0.0
    %1824 = vmatprep.subr.mxu0 0.0
    %1825 = vmatpush2.xpose.msra.mxu0 0.0
    %1826 = vmatprep.subr.mxu0 0.0
    %1827 = vmatpush2.xpose.msra.mxu0 0.0
    %1828 = vmatprep.subr.mxu0 0.0
    %1829 = vmatpush2.xpose.msra.mxu0 0.0
    %1830 = vmatprep.subr.mxu0 0.0
    %1831 = vmatpush2.xpose.msra.mxu0 0.0
    %1832 = vmatprep.subr.mxu0 0.0
    %1833 = vmatpush2.xpose.msra.mxu0 0.0
    %1834 = vmatprep.subr.mxu0 0.0
    %1835 = vmatpush2.xpose.msra.mxu0 0.0
    %1836 = vmatprep.subr.mxu0 0.0
    %1837 = vmatpush2.xpose.msra.mxu0 0.0
    %1838 = vmatprep.mubr.f32.mxu0 0.0
    %1839 = vmatmul.mubr.f32.gmra.mxu0 %v1770
    %v1840 = vpop.f32.mrf.mxu0
    %v1841 = vadd.f32 %v179, %v1840
    %v1842 = vpop.f32.mrf.mxu0
    %1843 = vdwg.mxu0
    %1844 = vrot.lane.b32.xlu0 %v1435, 112
    %v1845 = vpop.permute.xlu0 %1844
    %1846 = vrot.lane.b32.xlu0 %v1435, 80
    %v1847 = vpop.permute.xlu0 %1846
    %v1848 = vsel %vm291, %v1845, 0
    %v1850 = vsel %vm291, %v1847, 0
    %1852 = vmatprep.subr.mxu0 0.0
    %1853 = vmatpush1.xpose.msra.mxu0 0.0
    %1854 = vmatprep.subr.mxu0 0.0
    %1855 = vmatpush1.xpose.msra.mxu0 0.0
    %1856 = vmatprep.subr.mxu0 0.0
    %1857 = vmatpush1.xpose.msra.mxu0 0.0
    %1858 = vmatprep.subr.mxu0 0.0
    %1859 = vmatpush1.xpose.msra.mxu0 0.0
    %1860 = vmatprep.subr.mxu0 0.0
    %1861 = vmatpush1.xpose.msra.mxu0 0.0
    %1862 = vmatprep.subr.mxu0 0.0
    %1863 = vmatpush1.xpose.msra.mxu0 0.0
    %1864 = vmatprep.subr.mxu0 0.0
    %1865 = vmatpush1.xpose.msra.mxu0 0.0
    %1866 = vmatprep.subr.mxu0 0.0
    %1867 = vmatpush1.xpose.msra.mxu0 0.0
    %1868 = vmatprep.subr.mxu0 0.0
    %1869 = vmatpush1.xpose.msra.mxu0 0.0
    %1870 = vmatprep.subr.mxu0 0.0
    %1871 = vmatpush1.xpose.msra.mxu0 0.0
    %1872 = vmatprep.subr.mxu0 0.0
    %1873 = vmatpush1.xpose.msra.mxu0 0.0
    %1874 = vmatprep.subr.mxu0 0.0
    %1875 = vmatpush1.xpose.msra.mxu0 0.0
    %1876 = vmatprep.subr.mxu0 0.0
    %1877 = vmatpush1.xpose.msra.mxu0 0.0
    %1878 = vmatprep.subr.mxu0 0.0
    %1879 = vmatpush1.xpose.msra.mxu0 0.0
    %1880 = vmatprep.subr.mxu0 0.0
    %1881 = vmatpush1.xpose.msra.mxu0 0.0
    %1882 = vmatprep.subr.mxu0 0.0
    %1883 = vmatpush1.xpose.msra.mxu0 %v1850
    %1884 = vmatprep.subr.mxu0 0.0
    %1885 = vmatpush2.xpose.msra.mxu0 0.0
    %1886 = vmatprep.subr.mxu0 0.0
    %1887 = vmatpush2.xpose.msra.mxu0 0.0
    %1888 = vmatprep.subr.mxu0 0.0
    %1889 = vmatpush2.xpose.msra.mxu0 0.0
    %1890 = vmatprep.subr.mxu0 0.0
    %1891 = vmatpush2.xpose.msra.mxu0 0.0
    %1892 = vmatprep.subr.mxu0 0.0
    %1893 = vmatpush2.xpose.msra.mxu0 0.0
    %1894 = vmatprep.subr.mxu0 0.0
    %1895 = vmatpush2.xpose.msra.mxu0 0.0
    %1896 = vmatprep.subr.mxu0 0.0
    %1897 = vmatpush2.xpose.msra.mxu0 0.0
    %1898 = vmatprep.subr.mxu0 0.0
    %1899 = vmatpush2.xpose.msra.mxu0 0.0
    %1900 = vmatprep.subr.mxu0 0.0
    %1901 = vmatpush2.xpose.msra.mxu0 0.0
    %1902 = vmatprep.subr.mxu0 0.0
    %1903 = vmatpush2.xpose.msra.mxu0 0.0
    %1904 = vmatprep.subr.mxu0 0.0
    %1905 = vmatpush2.xpose.msra.mxu0 0.0
    %1906 = vmatprep.subr.mxu0 0.0
    %1907 = vmatpush2.xpose.msra.mxu0 0.0
    %1908 = vmatprep.subr.mxu0 0.0
    %1909 = vmatpush2.xpose.msra.mxu0 0.0
    %1910 = vmatprep.subr.mxu0 0.0
    %1911 = vmatpush2.xpose.msra.mxu0 0.0
    %1912 = vmatprep.subr.mxu0 0.0
    %1913 = vmatpush2.xpose.msra.mxu0 0.0
    %1914 = vmatprep.subr.mxu0 0.0
    %1915 = vmatpush2.xpose.msra.mxu0 0.0
    %1916 = vmatprep.mubr.f32.mxu0 0.0
    %1917 = vmatmul.mubr.f32.gmra.mxu0 %v1848
    %v1918 = vpop.f32.mrf.mxu0
    %v1919 = vadd.f32 %v183, %v1918
    %v1920 = vpop.f32.mrf.mxu0
    %1921 = vdwg.mxu0
    %v1922 = vsel %vm443, %v1841, -inf
    %1923 = vmax.xlane.f32.xlu0 %v1922
    %v1924 = vpop.xlane.xlu0 %1923
    %v1925 = vsel %vm443, %v1919, -inf
    %1926 = vmax.xlane.f32.xlu0 %v1925
    %v1927 = vpop.xlane.xlu0 %1926
    %v1928 = vsub.f32 %v1841, %v1924
    %v1929 = vsub.f32 %v1919, %v1927
    %v1930 = vmul.f32 %v1928, 1.442695
    %v1931 = vpow.pop %v1930
    %v1932 = vmul.f32 %v1929, 1.442695
    %v1933 = vpow.pop %v1932
    %v1934 = vsel %vm443, %v1931, 0.0
    %1935 = vadd.xlane.f32.xlu0 %v1934
    %v1936 = vpop.xlane.xlu0 %1935
    %v1937 = vsel %vm443, %v1933, 0.0
    %1938 = vadd.xlane.f32.xlu0 %v1937
    %v1939 = vpop.xlane.xlu0 %1938
    %v1940 = vrcp.pop %v1936
    %v1941 = vrcp.pop %v1939
    %v1942 = vmul.f32 %v1931, %v1940
    %v1943 = vmul.f32 %v1933, %v1941
    %1944 = vrot.lane.b32.xlu0 %v1430, 48
    %v1945 = vpop.permute.xlu0 %1944
    %v1948 = vsel %vm443, %v1942, 0
    %1950 = vmatprep.subr.mxu0 0.0
    %1951 = vmatpush1.msra.mxu0 0.0
    %1952 = vmatprep.subr.mxu0 0.0
    %1953 = vmatpush1.msra.mxu0 0.0
    %1954 = vmatprep.subr.mxu0 0.0
    %1955 = vmatpush1.msra.mxu0 0.0
    %1956 = vmatprep.subr.mxu0 0.0
    %1957 = vmatpush1.msra.mxu0 0.0
    %1958 = vmatprep.subr.mxu0 0.0
    %1959 = vmatpush1.msra.mxu0 0.0
    %1960 = vmatprep.subr.mxu0 0.0
    %1961 = vmatpush1.msra.mxu0 0.0
    %1962 = vmatprep.subr.mxu0 0.0
    %1963 = vmatpush1.msra.mxu0 0.0
    %1964 = vmatprep.subr.mxu0 0.0
    %1965 = vmatpush1.msra.mxu0 0.0
    %1966 = vmatprep.subr.mxu0 0.0
    %1967 = vmatpush1.msra.mxu0 0.0
    %1968 = vmatprep.subr.mxu0 0.0
    %1969 = vmatpush1.msra.mxu0 0.0
    %1970 = vmatprep.subr.mxu0 0.0
    %1971 = vmatpush1.msra.mxu0 0.0
    %1972 = vmatprep.subr.mxu0 0.0
    %1973 = vmatpush1.msra.mxu0 0.0
    %1974 = vmatprep.subr.mxu0 0.0
    %1975 = vmatpush1.msra.mxu0 0.0
    %1976 = vmatprep.subr.mxu0 0.0
    %1977 = vmatpush1.msra.mxu0 0.0
    %1978 = vmatprep.subr.mxu0 0.0
    %1979 = vmatpush1.msra.mxu0 0.0
    %1980 = vmatprep.subr.mxu0 0.0
    %1981 = vmatpush1.msra.mxu0 %v1945
    %1982 = vmatprep.subr.mxu0 0.0
    %1983 = vmatpush2.msra.mxu0 0.0
    %1984 = vmatprep.subr.mxu0 0.0
    %1985 = vmatpush2.msra.mxu0 0.0
    %1986 = vmatprep.subr.mxu0 0.0
    %1987 = vmatpush2.msra.mxu0 0.0
    %1988 = vmatprep.subr.mxu0 0.0
    %1989 = vmatpush2.msra.mxu0 0.0
    %1990 = vmatprep.subr.mxu0 0.0
    %1991 = vmatpush2.msra.mxu0 0.0
    %1992 = vmatprep.subr.mxu0 0.0
    %1993 = vmatpush2.msra.mxu0 0.0
    %1994 = vmatprep.subr.mxu0 0.0
    %1995 = vmatpush2.msra.mxu0 0.0
    %1996 = vmatprep.subr.mxu0 0.0
    %1997 = vmatpush2.msra.mxu0 0.0
    %1998 = vmatprep.subr.mxu0 0.0
    %1999 = vmatpush2.msra.mxu0 0.0
    %2000 = vmatprep.subr.mxu0 0.0
    %2001 = vmatpush2.msra.mxu0 0.0
    %2002 = vmatprep.subr.mxu0 0.0
    %2003 = vmatpush2.msra.mxu0 0.0
    %2004 = vmatprep.subr.mxu0 0.0
    %2005 = vmatpush2.msra.mxu0 0.0
    %2006 = vmatprep.subr.mxu0 0.0
    %2007 = vmatpush2.msra.mxu0 0.0
    %2008 = vmatprep.subr.mxu0 0.0
    %2009 = vmatpush2.msra.mxu0 0.0
    %2010 = vmatprep.subr.mxu0 0.0
    %2011 = vmatpush2.msra.mxu0 0.0
    %2012 = vmatprep.subr.mxu0 0.0
    %2013 = vmatpush2.msra.mxu0 0.0
    %2014 = vmatprep.mubr.f32.mxu0 0.0
    %2015 = vmatmul.mubr.f32.gmra.mxu0 %v1948
    %v2016 = vpop.f32.mrf.mxu0
    %v2017 = vadd.f32 0.0, %v2016
    %v2018 = vpop.f32.mrf.mxu0
    %2019 = vdwg.mxu0
    %2020 = vrot.lane.b32.xlu0 %v1435, 48
    %v2021 = vpop.permute.xlu0 %2020
    %v2024 = vsel %vm443, %v1943, 0
    %2026 = vmatprep.subr.mxu0 0.0
    %2027 = vmatpush1.msra.mxu0 0.0
    %2028 = vmatprep.subr.mxu0 0.0
    %2029 = vmatpush1.msra.mxu0 0.0
    %2030 = vmatprep.subr.mxu0 0.0
    %2031 = vmatpush1.msra.mxu0 0.0
    %2032 = vmatprep.subr.mxu0 0.0
    %2033 = vmatpush1.msra.mxu0 0.0
    %2034 = vmatprep.subr.mxu0 0.0
    %2035 = vmatpush1.msra.mxu0 0.0
    %2036 = vmatprep.subr.mxu0 0.0
    %2037 = vmatpush1.msra.mxu0 0.0
    %2038 = vmatprep.subr.mxu0 0.0
    %2039 = vmatpush1.msra.mxu0 0.0
    %2040 = vmatprep.subr.mxu0 0.0
    %2041 = vmatpush1.msra.mxu0 0.0
    %2042 = vmatprep.subr.mxu0 0.0
    %2043 = vmatpush1.msra.mxu0 0.0
    %2044 = vmatprep.subr.mxu0 0.0
    %2045 = vmatpush1.msra.mxu0 0.0
    %2046 = vmatprep.subr.mxu0 0.0
    %2047 = vmatpush1.msra.mxu0 0.0
    %2048 = vmatprep.subr.mxu0 0.0
    %2049 = vmatpush1.msra.mxu0 0.0
    %2050 = vmatprep.subr.mxu0 0.0
    %2051 = vmatpush1.msra.mxu0 0.0
    %2052 = vmatprep.subr.mxu0 0.0
    %2053 = vmatpush1.msra.mxu0 0.0
    %2054 = vmatprep.subr.mxu0 0.0
    %2055 = vmatpush1.msra.mxu0 0.0
    %2056 = vmatprep.subr.mxu0 0.0
    %2057 = vmatpush1.msra.mxu0 %v2021
    %2058 = vmatprep.subr.mxu0 0.0
    %2059 = vmatpush2.msra.mxu0 0.0
    %2060 = vmatprep.subr.mxu0 0.0
    %2061 = vmatpush2.msra.mxu0 0.0
    %2062 = vmatprep.subr.mxu0 0.0
    %2063 = vmatpush2.msra.mxu0 0.0
    %2064 = vmatprep.subr.mxu0 0.0
    %2065 = vmatpush2.msra.mxu0 0.0
    %2066 = vmatprep.subr.mxu0 0.0
    %2067 = vmatpush2.msra.mxu0 0.0
    %2068 = vmatprep.subr.mxu0 0.0
    %2069 = vmatpush2.msra.mxu0 0.0
    %2070 = vmatprep.subr.mxu0 0.0
    %2071 = vmatpush2.msra.mxu0 0.0
    %2072 = vmatprep.subr.mxu0 0.0
    %2073 = vmatpush2.msra.mxu0 0.0
    %2074 = vmatprep.subr.mxu0 0.0
    %2075 = vmatpush2.msra.mxu0 0.0
    %2076 = vmatprep.subr.mxu0 0.0
    %2077 = vmatpush2.msra.mxu0 0.0
    %2078 = vmatprep.subr.mxu0 0.0
    %2079 = vmatpush2.msra.mxu0 0.0
    %2080 = vmatprep.subr.mxu0 0.0
    %2081 = vmatpush2.msra.mxu0 0.0
    %2082 = vmatprep.subr.mxu0 0.0
    %2083 = vmatpush2.msra.mxu0 0.0
    %2084 = vmatprep.subr.mxu0 0.0
    %2085 = vmatpush2.msra.mxu0 0.0
    %2086 = vmatprep.subr.mxu0 0.0
    %2087 = vmatpush2.msra.mxu0 0.0
    %2088 = vmatprep.subr.mxu0 0.0
    %2089 = vmatpush2.msra.mxu0 0.0
    %2090 = vmatprep.mubr.f32.mxu0 0.0
    %2091 = vmatmul.mubr.f32.gmra.mxu0 %v2024
    %v2092 = vpop.f32.mrf.mxu0
    %v2093 = vadd.f32 0.0, %v2092
    %v2094 = vpop.f32.mrf.mxu0
    %2095 = vdwg.mxu0
    %2098 = vrot.lane.b32.xlu0 %v2017, 16
    %v2099 = vpop.permute.xlu0 %2098
    %2100 = vrot.lane.b32.xlu0 %v2093, 16
    %v2101 = vpop.permute.xlu0 %2100
    %v2104 = vsel %vm291, %v1687, %v2099
    %v2105 = vsel %vm291, %v1763, %v2101
    %v2106 = vld [vmem:[%s5 + $0xd] sm:$0x1]
    %v2107 = vlaneseq
    %v2108 = vshrl.u32 %v2107, 7
    %v2109 = vsub.s32 0, %v2108
    %v2110 = vrot.slane %v2106, %v2109
    %2115 = vrot.lane.b32.xlu0 %v1336, 32
    %v2116 = vpop.permute.xlu0 %2115
    %2117 = vrot.lane.b32.xlu0 %v1338, 32
    %v2118 = vpop.permute.xlu0 %2117
    %2119 = vrot.lane.b32.xlu0 %v1340, 32
    %v2120 = vpop.permute.xlu0 %2119
    %2121 = vrot.lane.b32.xlu0 %v1342, 32
    %v2122 = vpop.permute.xlu0 %2121
    %v2128 = vsel %vm109, %v2104, 0
    %v2131 = vsel %vm109, %v2105, 0
    %2133 = vmatprep.subr.mxu0 0.0
    %2134 = vmatpush1.msra.mxu0 0.0
    %2135 = vmatprep.subr.mxu0 0.0
    %2136 = vmatpush1.msra.mxu0 0.0
    %2137 = vmatprep.subr.mxu0 0.0
    %2138 = vmatpush1.msra.mxu0 0.0
    %2139 = vmatprep.subr.mxu0 0.0
    %2140 = vmatpush1.msra.mxu0 0.0
    %2141 = vmatprep.subr.mxu0 0.0
    %2142 = vmatpush1.msra.mxu0 0.0
    %2143 = vmatprep.subr.mxu0 0.0
    %2144 = vmatpush1.msra.mxu0 0.0
    %2145 = vmatprep.subr.mxu0 0.0
    %2146 = vmatpush1.msra.mxu0 0.0
    %2147 = vmatprep.subr.mxu0 0.0
    %2148 = vmatpush1.msra.mxu0 0.0
    %2149 = vmatprep.subr.mxu0 0.0
    %2150 = vmatpush1.msra.mxu0 0.0
    %2151 = vmatprep.subr.mxu0 0.0
    %2152 = vmatpush1.msra.mxu0 0.0
    %2153 = vmatprep.subr.mxu0 0.0
    %2154 = vmatpush1.msra.mxu0 0.0
    %2155 = vmatprep.subr.mxu0 0.0
    %2156 = vmatpush1.msra.mxu0 0.0
    %2157 = vmatprep.subr.mxu0 0.0
    %2158 = vmatpush1.msra.mxu0 %v2122
    %2159 = vmatprep.subr.mxu0 0.0
    %2160 = vmatpush1.msra.mxu0 %v2120
    %2161 = vmatprep.subr.mxu0 0.0
    %2162 = vmatpush1.msra.mxu0 %v2118
    %2163 = vmatprep.subr.mxu0 0.0
    %2164 = vmatpush1.msra.mxu0 %v2116
    %2165 = vmatprep.subr.mxu0 0.0
    %2166 = vmatpush2.msra.mxu0 0.0
    %2167 = vmatprep.subr.mxu0 0.0
    %2168 = vmatpush2.msra.mxu0 0.0
    %2169 = vmatprep.subr.mxu0 0.0
    %2170 = vmatpush2.msra.mxu0 0.0
    %2171 = vmatprep.subr.mxu0 0.0
    %2172 = vmatpush2.msra.mxu0 0.0
    %2173 = vmatprep.subr.mxu0 0.0
    %2174 = vmatpush2.msra.mxu0 0.0
    %2175 = vmatprep.subr.mxu0 0.0
    %2176 = vmatpush2.msra.mxu0 0.0
    %2177 = vmatprep.subr.mxu0 0.0
    %2178 = vmatpush2.msra.mxu0 0.0
    %2179 = vmatprep.subr.mxu0 0.0
    %2180 = vmatpush2.msra.mxu0 0.0
    %2181 = vmatprep.subr.mxu0 0.0
    %2182 = vmatpush2.msra.mxu0 0.0
    %2183 = vmatprep.subr.mxu0 0.0
    %2184 = vmatpush2.msra.mxu0 0.0
    %2185 = vmatprep.subr.mxu0 0.0
    %2186 = vmatpush2.msra.mxu0 0.0
    %2187 = vmatprep.subr.mxu0 0.0
    %2188 = vmatpush2.msra.mxu0 0.0
    %2189 = vmatprep.subr.mxu0 0.0
    %2190 = vmatpush2.msra.mxu0 0.0
    %2191 = vmatprep.subr.mxu0 0.0
    %2192 = vmatpush2.msra.mxu0 0.0
    %2193 = vmatprep.subr.mxu0 0.0
    %2194 = vmatpush2.msra.mxu0 0.0
    %2195 = vmatprep.subr.mxu0 0.0
    %2196 = vmatpush2.msra.mxu0 0.0
    %2197 = vmatprep.mubr.f32.mxu0 0.0
    %2198 = vmatmul.mubr.f32.gmra.mxu0 %v2128
    %v2199 = vpop.f32.mrf.mxu0
    %v2200 = vadd.f32 %v2110, %v2199
    %v2201 = vpop.f32.mrf.mxu0
    %2202 = vmatprep.mubr.f32.mxu0 0.0
    %2203 = vmatmul.mubr.f32.gmra.mxu0 %v2131
    %v2204 = vpop.f32.mrf.mxu0
    %v2205 = vadd.f32 %v2110, %v2204
    %v2206 = vpop.f32.mrf.mxu0
    %2207 = vdwg.mxu0
    %v2208 = vadd.f32 %v1333, %v2200
    %v2209 = vadd.f32 %v1334, %v2205
    %v2210 = vld [vmem:[%s5 + $0xe] sm:$0x1]
    %v2211 = vld [vmem:[%s5 + $0xf] sm:$0x1]
    %v2212 = vsel %vm109, %v2208, 0.0
    %2213 = vadd.xlane.f32.xlu0 %v2212
    %v2214 = vpop.xlane.xlu0 %2213
    %v2215 = vsel %vm109, %v2209, 0.0
    %2216 = vadd.xlane.f32.xlu0 %v2215
    %v2217 = vpop.xlane.xlu0 %2216
    %v2218 = vmul.f32 %v2214, %v116
    %v2219 = vmul.f32 %v2217, %v116
    %v2220 = vsub.f32 %v2208, %v2218
    %v2221 = vsub.f32 %v2209, %v2219
    %v2222 = vmul.f32 %v2220, %v2220
    %v2223 = vmul.f32 %v2221, %v2221
    %v2224 = vsel %vm109, %v2222, 0.0
    %2225 = vadd.xlane.f32.xlu0 %v2224
    %v2226 = vpop.xlane.xlu0 %2225
    %v2227 = vsel %vm109, %v2223, 0.0
    %2228 = vadd.xlane.f32.xlu0 %v2227
    %v2229 = vpop.xlane.xlu0 %2228
    %v2230 = vmul.f32 %v2226, %v116
    %v2231 = vmul.f32 %v2229, %v116
    %v2232 = vadd.f32 %v2230, 1e-12
    %v2233 = vadd.f32 %v2231, 1e-12
    %v2234 = vrsqrt.pop %v2232
    %v2235 = vrsqrt.pop %v2233
    %v2236 = vmul.f32 %v2220, %v2234
    %v2237 = vmul.f32 %v2221, %v2235
    %v2238 = vlaneseq
    %v2239 = vshrl.u32 %v2238, 7
    %v2240 = vsub.s32 0, %v2239
    %v2241 = vrot.slane %v2210, %v2240
    %v2242 = vmul.f32 %v2236, %v2241
    %v2243 = vmul.f32 %v2237, %v2241
    %v2244 = vlaneseq
    %v2245 = vshrl.u32 %v2244, 7
    %v2246 = vsub.s32 0, %v2245
    %v2247 = vrot.slane %v2211, %v2246
    %v2248 = vadd.f32 %v2242, %v2247
    %v2249 = vadd.f32 %v2243, %v2247
    %v2250 = vld [vmem:[%s5 + $0x10] sm:$0x1]
    %v2251 = vlaneseq
    %v2252 = vshrl.u32 %v2251, 7
    %v2253 = vsub.s32 0, %v2252
    %v2254 = vrot.slane %v2250, %v2253
    %v2256 = vsel %vm109, %v2248, 0
    %v2259 = vsel %vm109, %v2249, 0
    %2261 = vmatprep.subr.mxu0 0.0
    %2262 = vmatpush1.msra.mxu0 0.0
    %2263 = vmatprep.subr.mxu0 0.0
    %2264 = vmatpush1.msra.mxu0 0.0
    %2265 = vmatprep.subr.mxu0 0.0
    %2266 = vmatpush1.msra.mxu0 0.0
    %2267 = vmatprep.subr.mxu0 0.0
    %2268 = vmatpush1.msra.mxu0 0.0
    %2269 = vmatprep.subr.mxu0 0.0
    %2270 = vmatpush1.msra.mxu0 0.0
    %2271 = vmatprep.subr.mxu0 0.0
    %2272 = vmatpush1.msra.mxu0 0.0
    %2273 = vmatprep.subr.mxu0 0.0
    %2274 = vmatpush1.msra.mxu0 0.0
    %2275 = vmatprep.subr.mxu0 0.0
    %2276 = vmatpush1.msra.mxu0 0.0
    %2277 = vmatprep.subr.mxu0 0.0
    %2278 = vmatpush1.msra.mxu0 0.0
    %2279 = vmatprep.subr.mxu0 0.0
    %2280 = vmatpush1.msra.mxu0 0.0
    %2281 = vmatprep.subr.mxu0 0.0
    %2282 = vmatpush1.msra.mxu0 0.0
    %2283 = vmatprep.subr.mxu0 0.0
    %2284 = vmatpush1.msra.mxu0 0.0
    %2285 = vmatprep.subr.mxu0 0.0
    %2286 = vmatpush1.msra.mxu0 %v1343
    %2287 = vmatprep.subr.mxu0 0.0
    %2288 = vmatpush1.msra.mxu0 %v1341
    %2289 = vmatprep.subr.mxu0 0.0
    %2290 = vmatpush1.msra.mxu0 %v1339
    %2291 = vmatprep.subr.mxu0 0.0
    %2292 = vmatpush1.msra.mxu0 %v1337
    %2293 = vmatprep.subr.mxu0 0.0
    %2294 = vmatpush2.msra.mxu0 0.0
    %2295 = vmatprep.subr.mxu0 0.0
    %2296 = vmatpush2.msra.mxu0 0.0
    %2297 = vmatprep.subr.mxu0 0.0
    %2298 = vmatpush2.msra.mxu0 0.0
    %2299 = vmatprep.subr.mxu0 0.0
    %2300 = vmatpush2.msra.mxu0 0.0
    %2301 = vmatprep.subr.mxu0 0.0
    %2302 = vmatpush2.msra.mxu0 0.0
    %2303 = vmatprep.subr.mxu0 0.0
    %2304 = vmatpush2.msra.mxu0 0.0
    %2305 = vmatprep.subr.mxu0 0.0
    %2306 = vmatpush2.msra.mxu0 0.0
    %2307 = vmatprep.subr.mxu0 0.0
    %2308 = vmatpush2.msra.mxu0 0.0
    %2309 = vmatprep.subr.mxu0 0.0
    %2310 = vmatpush2.msra.mxu0 0.0
    %2311 = vmatprep.subr.mxu0 0.0
    %2312 = vmatpush2.msra.mxu0 0.0
    %2313 = vmatprep.subr.mxu0 0.0
    %2314 = vmatpush2.msra.mxu0 0.0
    %2315 = vmatprep.subr.mxu0 0.0
    %2316 = vmatpush2.msra.mxu0 0.0
    %2317 = vmatprep.subr.mxu0 0.0
    %2318 = vmatpush2.msra.mxu0 0.0
    %2319 = vmatprep.subr.mxu0 0.0
    %2320 = vmatpush2.msra.mxu0 0.0
    %2321 = vmatprep.subr.mxu0 0.0
    %2322 = vmatpush2.msra.mxu0 0.0
    %2323 = vmatprep.subr.mxu0 0.0
    %2324 = vmatpush2.msra.mxu0 0.0
    %2325 = vmatprep.mubr.f32.mxu0 0.0
    %2326 = vmatmul.mubr.f32.gmra.mxu0 %v2256
    %v2327 = vpop.f32.mrf.mxu0
    %v2328 = vadd.f32 %v2254, %v2327
    %v2329 = vpop.f32.mrf.mxu0
    %2330 = vmatprep.mubr.f32.mxu0 0.0
    %2331 = vmatmul.mubr.f32.gmra.mxu0 %v2259
    %v2332 = vpop.f32.mrf.mxu0
    %v2333 = vadd.f32 %v2254, %v2332
    %v2334 = vpop.f32.mrf.mxu0
    %2335 = vdwg.mxu0
    %v2336 = vmul.f32 %v2328, 0.5
    %v2337 = vmul.f32 %v2333, 0.5
    %v2338 = vmul.f32 %v2328, 0.044715
    %v2339 = vmul.f32 %v2333, 0.044715
    %v2340 = vmul.f32 %v2338, %v2328
    %v2341 = vmul.f32 %v2339, %v2333
    %v2342 = vmul.f32 %v2340, %v2328
    %v2343 = vmul.f32 %v2341, %v2333
    %v2344 = vadd.f32 %v2328, %v2342
    %v2345 = vadd.f32 %v2333, %v2343
    %v2346 = vmul.f32 %v2344, 0.7978846
    %v2347 = vmul.f32 %v2345, 0.7978846
    %v2348 = vtanh.pop %v2346
    %v2349 = vtanh.pop %v2347
    %v2350 = vadd.f32 %v2348, 1.0
    %v2351 = vadd.f32 %v2349, 1.0
    %v2352 = vmul.f32 %v2336, %v2350
    %v2353 = vmul.f32 %v2337, %v2351
    %v2354 = vld [vmem:[%s5 + $0x11] sm:$0x1]
    %v2355 = vlaneseq
    %v2356 = vshrl.u32 %v2355, 7
    %v2357 = vsub.s32 0, %v2356
    %v2358 = vrot.slane %v2354, %v2357
    %v2360 = vsel %vm1211, %v2352, 0
    %v2363 = vsel %vm1211, %v2353, 0
    %2365 = vmatprep.subr.mxu0 0.0
    %2366 = vmatpush1.msra.mxu0 0.0
    %2367 = vmatprep.subr.mxu0 0.0
    %2368 = vmatpush1.msra.mxu0 0.0
    %2369 = vmatprep.subr.mxu0 0.0
    %2370 = vmatpush1.msra.mxu0 0.0
    %2371 = vmatprep.subr.mxu0 0.0
    %2372 = vmatpush1.msra.mxu0 0.0
    %2373 = vmatprep.subr.mxu0 0.0
    %2374 = vmatpush1.msra.mxu0 0.0
    %2375 = vmatprep.subr.mxu0 0.0
    %2376 = vmatpush1.msra.mxu0 0.0
    %2377 = vmatprep.subr.mxu0 0.0
    %2378 = vmatpush1.msra.mxu0 0.0
    %2379 = vmatprep.subr.mxu0 0.0
    %2380 = vmatpush1.msra.mxu0 0.0
    %2381 = vmatprep.subr.mxu0 0.0
    %2382 = vmatpush1.msra.mxu0 %v1351
    %2383 = vmatprep.subr.mxu0 0.0
    %2384 = vmatpush1.msra.mxu0 %v1350
    %2385 = vmatprep.subr.mxu0 0.0
    %2386 = vmatpush1.msra.mxu0 %v1349
    %2387 = vmatprep.subr.mxu0 0.0
    %2388 = vmatpush1.msra.mxu0 %v1348
    %2389 = vmatprep.subr.mxu0 0.0
    %2390 = vmatpush1.msra.mxu0 %v1347
    %2391 = vmatprep.subr.mxu0 0.0
    %2392 = vmatpush1.msra.mxu0 %v1346
    %2393 = vmatprep.subr.mxu0 0.0
    %2394 = vmatpush1.msra.mxu0 %v1345
    %2395 = vmatprep.subr.mxu0 0.0
    %2396 = vmatpush1.msra.mxu0 %v1344
    %2397 = vmatprep.subr.mxu0 0.0
    %2398 = vmatpush2.msra.mxu0 0.0
    %2399 = vmatprep.subr.mxu0 0.0
    %2400 = vmatpush2.msra.mxu0 0.0
    %2401 = vmatprep.subr.mxu0 0.0
    %2402 = vmatpush2.msra.mxu0 0.0
    %2403 = vmatprep.subr.mxu0 0.0
    %2404 = vmatpush2.msra.mxu0 0.0
    %2405 = vmatprep.subr.mxu0 0.0
    %2406 = vmatpush2.msra.mxu0 0.0
    %2407 = vmatprep.subr.mxu0 0.0
    %2408 = vmatpush2.msra.mxu0 0.0
    %2409 = vmatprep.subr.mxu0 0.0
    %2410 = vmatpush2.msra.mxu0 0.0
    %2411 = vmatprep.subr.mxu0 0.0
    %2412 = vmatpush2.msra.mxu0 0.0
    %2413 = vmatprep.subr.mxu0 0.0
    %2414 = vmatpush2.msra.mxu0 0.0
    %2415 = vmatprep.subr.mxu0 0.0
    %2416 = vmatpush2.msra.mxu0 0.0
    %2417 = vmatprep.subr.mxu0 0.0
    %2418 = vmatpush2.msra.mxu0 0.0
    %2419 = vmatprep.subr.mxu0 0.0
    %2420 = vmatpush2.msra.mxu0 0.0
    %2421 = vmatprep.subr.mxu0 0.0
    %2422 = vmatpush2.msra.mxu0 0.0
    %2423 = vmatprep.subr.mxu0 0.0
    %2424 = vmatpush2.msra.mxu0 0.0
    %2425 = vmatprep.subr.mxu0 0.0
    %2426 = vmatpush2.msra.mxu0 0.0
    %2427 = vmatprep.subr.mxu0 0.0
    %2428 = vmatpush2.msra.mxu0 0.0
    %2429 = vmatprep.mubr.f32.mxu0 0.0
    %2430 = vmatmul.mubr.f32.gmra.mxu0 %v2360
    %v2431 = vpop.f32.mrf.mxu0
    %v2432 = vadd.f32 %v2358, %v2431
    %v2433 = vpop.f32.mrf.mxu0
    %2434 = vmatprep.mubr.f32.mxu0 0.0
    %2435 = vmatmul.mubr.f32.gmra.mxu0 %v2363
    %v2436 = vpop.f32.mrf.mxu0
    %v2437 = vadd.f32 %v2358, %v2436
    %v2438 = vpop.f32.mrf.mxu0
    %2439 = vdwg.mxu0
    %v2440 = vadd.f32 %v2248, %v2432
    %v2441 = vadd.f32 %v2249, %v2437
    %v2442 = vld [vmem:[%s5 + $0x12] sm:$0x1]
    %v2443 = vld [vmem:[%s5 + $0x13] sm:$0x1]
    %v2444 = vsel %vm109, %v2440, 0.0
    %2445 = vadd.xlane.f32.xlu0 %v2444
    %v2446 = vpop.xlane.xlu0 %2445
    %v2447 = vsel %vm109, %v2441, 0.0
    %2448 = vadd.xlane.f32.xlu0 %v2447
    %v2449 = vpop.xlane.xlu0 %2448
    %v2450 = vmul.f32 %v2446, %v116
    %v2451 = vmul.f32 %v2449, %v116
    %v2452 = vsub.f32 %v2440, %v2450
    %v2453 = vsub.f32 %v2441, %v2451
    %v2454 = vmul.f32 %v2452, %v2452
    %v2455 = vmul.f32 %v2453, %v2453
    %v2456 = vsel %vm109, %v2454, 0.0
    %2457 = vadd.xlane.f32.xlu0 %v2456
    %v2458 = vpop.xlane.xlu0 %2457
    %v2459 = vsel %vm109, %v2455, 0.0
    %2460 = vadd.xlane.f32.xlu0 %v2459
    %v2461 = vpop.xlane.xlu0 %2460
    %v2462 = vmul.f32 %v2458, %v116
    %v2463 = vmul.f32 %v2461, %v116
    %v2464 = vadd.f32 %v2462, 1e-12
    %v2465 = vadd.f32 %v2463, 1e-12
    %v2466 = vrsqrt.pop %v2464
    %v2467 = vrsqrt.pop %v2465
    %v2468 = vmul.f32 %v2452, %v2466
    %v2469 = vmul.f32 %v2453, %v2467
    %v2470 = vlaneseq
    %v2471 = vshrl.u32 %v2470, 7
    %v2472 = vsub.s32 0, %v2471
    %v2473 = vrot.slane %v2442, %v2472
    %v2474 = vmul.f32 %v2468, %v2473
    %v2475 = vmul.f32 %v2469, %v2473
    %v2476 = vlaneseq
    %v2477 = vshrl.u32 %v2476, 7
    %v2478 = vsub.s32 0, %v2477
    %v2479 = vrot.slane %v2443, %v2478
    %v2480 = vadd.f32 %v2474, %v2479
    %v2481 = vadd.f32 %v2475, %v2479
    %v2483 = vrot.slane %v2481, 7
    %vm2485 = vcmask 1040384
    %v2486 = vsel %vm2485, %v2480, %v2483
    %v2487 = vld [vmem:[%s4 + $0x80] sm:$0xff]
    %v2488 = vld [vmem:[%s4 + $0x88] sm:$0xff]
    %v2489 = vld [vmem:[%s4 + $0x90] sm:$0xff]
    %v2490 = vld [vmem:[%s4 + $0x98] sm:$0xff]
    %v2491 = vld [vmem:[%s4 + $0xa0] sm:$0xff]
    %v2492 = vld [vmem:[%s4 + $0xa8] sm:$0xff]
    %v2493 = vld [vmem:[%s4 + $0xb0] sm:$0xff]
    %v2494 = vld [vmem:[%s4 + $0xb8] sm:$0xff]
    %v2495 = vld [vmem:[%s5 + $0x2] sm:$0x1]
    %v2496 = vlaneseq
    %v2497 = vshrl.u32 %v2496, 7
    %v2498 = vsub.s32 0, %v2497
    %v2499 = vrot.slane %v2495, %v2498
    %v2501 = vsel %vm109, %v2486, 0
    %2503 = vmatprep.subr.mxu0 0.0
    %2504 = vmatpush1.msra.mxu0 0.0
    %2505 = vmatprep.subr.mxu0 0.0
    %2506 = vmatpush1.msra.mxu0 0.0
    %2507 = vmatprep.subr.mxu0 0.0
    %2508 = vmatpush1.msra.mxu0 0.0
    %2509 = vmatprep.subr.mxu0 0.0
    %2510 = vmatpush1.msra.mxu0 0.0
    %2511 = vmatprep.subr.mxu0 0.0
    %2512 = vmatpush1.msra.mxu0 0.0
    %2513 = vmatprep.subr.mxu0 0.0
    %2514 = vmatpush1.msra.mxu0 0.0
    %2515 = vmatprep.subr.mxu0 0.0
    %2516 = vmatpush1.msra.mxu0 0.0
    %2517 = vmatprep.subr.mxu0 0.0
    %2518 = vmatpush1.msra.mxu0 0.0
    %2519 = vmatprep.subr.mxu0 0.0
    %2520 = vmatpush1.msra.mxu0 0.0
    %2521 = vmatprep.subr.mxu0 0.0
    %2522 = vmatpush1.msra.mxu0 0.0
    %2523 = vmatprep.subr.mxu0 0.0
    %2524 = vmatpush1.msra.mxu0 0.0
    %2525 = vmatprep.subr.mxu0 0.0
    %2526 = vmatpush1.msra.mxu0 0.0
    %2527 = vmatprep.subr.mxu0 0.0
    %2528 = vmatpush1.msra.mxu0 %v2490
    %2529 = vmatprep.subr.mxu0 0.0
    %2530 = vmatpush1.msra.mxu0 %v2489
    %2531 = vmatprep.subr.mxu0 0.0
    %2532 = vmatpush1.msra.mxu0 %v2488
    %2533 = vmatprep.subr.mxu0 0.0
    %2534 = vmatpush1.msra.mxu0 %v2487
    %2535 = vmatprep.subr.mxu0 0.0
    %2536 = vmatpush2.msra.mxu0 0.0
    %2537 = vmatprep.subr.mxu0 0.0
    %2538 = vmatpush2.msra.mxu0 0.0
    %2539 = vmatprep.subr.mxu0 0.0
    %2540 = vmatpush2.msra.mxu0 0.0
    %2541 = vmatprep.subr.mxu0 0.0
    %2542 = vmatpush2.msra.mxu0 0.0
    %2543 = vmatprep.subr.mxu0 0.0
    %2544 = vmatpush2.msra.mxu0 0.0
    %2545 = vmatprep.subr.mxu0 0.0
    %2546 = vmatpush2.msra.mxu0 0.0
    %2547 = vmatprep.subr.mxu0 0.0
    %2548 = vmatpush2.msra.mxu0 0.0
    %2549 = vmatprep.subr.mxu0 0.0
    %2550 = vmatpush2.msra.mxu0 0.0
    %2551 = vmatprep.subr.mxu0 0.0
    %2552 = vmatpush2.msra.mxu0 0.0
    %2553 = vmatprep.subr.mxu0 0.0
    %2554 = vmatpush2.msra.mxu0 0.0
    %2555 = vmatprep.subr.mxu0 0.0
    %2556 = vmatpush2.msra.mxu0 0.0
    %2557 = vmatprep.subr.mxu0 0.0
    %2558 = vmatpush2.msra.mxu0 0.0
    %2559 = vmatprep.subr.mxu0 0.0
    %2560 = vmatpush2.msra.mxu0 0.0
    %2561 = vmatprep.subr.mxu0 0.0
    %2562 = vmatpush2.msra.mxu0 0.0
    %2563 = vmatprep.subr.mxu0 0.0
    %2564 = vmatpush2.msra.mxu0 0.0
    %2565 = vmatprep.subr.mxu0 0.0
    %2566 = vmatpush2.msra.mxu0 0.0
    %2567 = vmatprep.mubr.f32.mxu0 0.0
    %2568 = vmatmul.mubr.f32.gmra.mxu0 %v2501
    %v2569 = vpop.f32.mrf.mxu0
    %v2570 = vadd.f32 %v2499, %v2569
    %v2571 = vpop.f32.mrf.mxu0
    %2572 = vdwg.mxu0
    %v2573 = vtanh.pop %v2570
    %v2574 = vld [vmem:[%s5 + $0x3] sm:$0x1]
    %v2575 = vlaneseq
    %v2576 = vshrl.u32 %v2575, 7
    %v2577 = vsub.s32 0, %v2576
    %v2578 = vrot.slane %v2574, %v2577
    %v2580 = vsel %vm109, %v2573, 0
    %2582 = vmatprep.subr.mxu0 0.0
    %2583 = vmatpush1.msra.mxu0 0.0
    %2584 = vmatprep.subr.mxu0 0.0
    %2585 = vmatpush1.msra.mxu0 0.0
    %2586 = vmatprep.subr.mxu0 0.0
    %2587 = vmatpush1.msra.mxu0 0.0
    %2588 = vmatprep.subr.mxu0 0.0
    %2589 = vmatpush1.msra.mxu0 0.0
    %2590 = vmatprep.subr.mxu0 0.0
    %2591 = vmatpush1.msra.mxu0 0.0
    %2592 = vmatprep.subr.mxu0 0.0
    %2593 = vmatpush1.msra.mxu0 0.0
    %2594 = vmatprep.subr.mxu0 0.0
    %2595 = vmatpush1.msra.mxu0 0.0
    %2596 = vmatprep.subr.mxu0 0.0
    %2597 = vmatpush1.msra.mxu0 0.0
    %2598 = vmatprep.subr.mxu0 0.0
    %2599 = vmatpush1.msra.mxu0 0.0
    %2600 = vmatprep.subr.mxu0 0.0
    %2601 = vmatpush1.msra.mxu0 0.0
    %2602 = vmatprep.subr.mxu0 0.0
    %2603 = vmatpush1.msra.mxu0 0.0
    %2604 = vmatprep.subr.mxu0 0.0
    %2605 = vmatpush1.msra.mxu0 0.0
    %2606 = vmatprep.subr.mxu0 0.0
    %2607 = vmatpush1.msra.mxu0 %v2494
    %2608 = vmatprep.subr.mxu0 0.0
    %2609 = vmatpush1.msra.mxu0 %v2493
    %2610 = vmatprep.subr.mxu0 0.0
    %2611 = vmatpush1.msra.mxu0 %v2492
    %2612 = vmatprep.subr.mxu0 0.0
    %2613 = vmatpush1.msra.mxu0 %v2491
    %2614 = vmatprep.subr.mxu0 0.0
    %2615 = vmatpush2.msra.mxu0 0.0
    %2616 = vmatprep.subr.mxu0 0.0
    %2617 = vmatpush2.msra.mxu0 0.0
    %2618 = vmatprep.subr.mxu0 0.0
    %2619 = vmatpush2.msra.mxu0 0.0
    %2620 = vmatprep.subr.mxu0 0.0
    %2621 = vmatpush2.msra.mxu0 0.0
    %2622 = vmatprep.subr.mxu0 0.0
    %2623 = vmatpush2.msra.mxu0 0.0
    %2624 = vmatprep.subr.mxu0 0.0
    %2625 = vmatpush2.msra.mxu0 0.0
    %2626 = vmatprep.subr.mxu0 0.0
    %2627 = vmatpush2.msra.mxu0 0.0
    %2628 = vmatprep.subr.mxu0 0.0
    %2629 = vmatpush2.msra.mxu0 0.0
    %2630 = vmatprep.subr.mxu0 0.0
    %2631 = vmatpush2.msra.mxu0 0.0
    %2632 = vmatprep.subr.mxu0 0.0
    %2633 = vmatpush2.msra.mxu0 0.0
    %2634 = vmatprep.subr.mxu0 0.0
    %2635 = vmatpush2.msra.mxu0 0.0
    %2636 = vmatprep.subr.mxu0 0.0
    %2637 = vmatpush2.msra.mxu0 0.0
    %2638 = vmatprep.subr.mxu0 0.0
    %2639 = vmatpush2.msra.mxu0 0.0
    %2640 = vmatprep.subr.mxu0 0.0
    %2641 = vmatpush2.msra.mxu0 0.0
    %2642 = vmatprep.subr.mxu0 0.0
    %2643 = vmatpush2.msra.mxu0 0.0
    %2644 = vmatprep.subr.mxu0 0.0
    %2645 = vmatpush2.msra.mxu0 0.0
    %2646 = vmatprep.mubr.f32.mxu0 0.0
    %2647 = vmatmul.mubr.f32.gmra.mxu0 %v2580
    %v2648 = vpop.f32.mrf.mxu0
    %v2649 = vadd.f32 %v2578, %v2648
    %v2650 = vpop.f32.mrf.mxu0
    %2651 = vdwg.mxu0
    %vm2652 = vcmask 9216
    %2653 = vst.msk [vmem:[#allocation6] sm:$0x3] %vm2652, %v2649
    // Predicated region
    $region30: #{_lambda_.1} parent=1 // pred_check
      _
    $region31: #{_lambda_.1} parent=1 // pred_check_branch
      %2655 = sbr.rel (0) target = $region33
    $region32: #{_lambda_.1} parent=1 // pred_region
      %s2657 = ssub.s32 32, 32
      %2658 = vsyncadd [#allocation4], %s2657
      %s2660 = sshll.u32 [#allocation6], 4
      %s2661 = int_to_ptr.vmem [resolvable:$true] %s2660
      %2663 = dma.vmem_to_hbm [thread:$0]  %s2661, 32, %s6, [#allocation4]
    $region33: #{_lambda_.1} parent=1 // pred_fallthru
      _
    // Predicated region
    $region34: #{_lambda_.1} parent=1 // pred_check
      _
    $region35: #{_lambda_.1} parent=1 // pred_check_branch
      %2665 = sbr.rel (0) target = $region37
    $region36: #{_lambda_.1} parent=1 // pred_region
      %2666 = dma.done [#allocation4], 32
    $region37: #{_lambda_.1} parent=1 // pred_fallthru
      _
    %2667 = vsyncpa [#allocation4], 1
    %2668 = vsyncpa [#allocation5], 1

</llo_original>
